<compile_context>
chip_gen: v7x
topology: tpu7x:2x2x1
jax: 0.10.0
libtpu: 0.0.40
codegen_flags: <defaults>
</compile_context>

<pallas_src>
import functools

import jax
import jax.numpy as jnp
from jax import lax
from jax.experimental import pallas as pl
from jax.experimental.pallas import tpu as pltpu

DATA_SIZE = (3, 28, 28)
DATA_DIM = 3 * 28 * 28          # 2352
HIDDEN_DIM = 400
ETA = 1e-6                      # Constants.eta in the reference codebase


def _round_up(n, m):
    return ((n + m - 1) // m) * m


def enc_kernel(x_ref, w1_ref, b1_ref, wh_ref, bh_ref, out_ref, *, latent_dim):
    # Hidden layer: bf16 MXU matmul with f32 accumulation, f32 bias + ReLU.
    e = jnp.dot(x_ref[...], w1_ref[...], preferred_element_type=jnp.float32)
    e = jnp.maximum(e + b1_ref[...], 0.0)                    # (TM, H_pad) f32

    # Fused heads: one matmul producing [mu | lv | pad] in one lane-dense tile.
    h = jnp.dot(e.astype(jnp.bfloat16), wh_ref[...],
                preferred_element_type=jnp.float32) + bh_ref[...]  # (TM, OUT_W)

    L = latent_dim
    col = lax.broadcasted_iota(jnp.int32, h.shape, dimension=1)
    lv_mask = jnp.logical_and(col >= L, col < 2 * L)

    # softmax(lv, -1) * latent_dim + eta, numerically stable, masked to the
    # real lv lanes (exp(-inf) == 0 kills padded / mu lanes in the reduction).
    lv = jnp.where(lv_mask, h, -jnp.inf)
    m = jnp.max(lv, axis=-1, keepdims=True)
    p = jnp.exp(lv - m)
    s = jnp.sum(p, axis=-1, keepdims=True)
    sm = p * pl.reciprocal(s, approx=True)
    scaled = sm * jnp.float32(L) + jnp.float32(ETA)

    # Single unmasked lane-dense store: cols [0,L) = mu, [L,2L) = scaled softmax.
    out_ref[...] = jnp.where(col < L, h, scaled)


def enc_forward(x, params):
    """x: (B, 3, 28, 28) float32.  Returns (mu, scaled_softmax_lv), both f32."""
    w1, b1, w21, b21, w22, b22 = params
    B = x.shape[0]
    L = w21.shape[1]

    K_pad = _round_up(DATA_DIM, 128)        # 2432
    H_pad = _round_up(HIDDEN_DIM, 128)      # 512
    OUT_W = _round_up(2 * L, 128)           # lane-dense packed output width

    # Batch tile: 256 rows for large batches (keeps the 256x256 MXU full),
    # otherwise round the batch up to a multiple of 16 (bf16 sublane tile).
    TM = 256 if B >= 256 else max(16, _round_up(B, 16))
    B_pad = _round_up(B, TM)

    # bf16 activations/weights (zero-padded to aligned shapes), f32 biases.
    x_flat = x.reshape(B, DATA_DIM)                           # torch .view(..., -1)
    x_bf = jnp.pad(x_flat.astype(jnp.bfloat16),
                   ((0, B_pad - B), (0, K_pad - DATA_DIM)))

    w1_p = jnp.pad(w1, ((0, K_pad - DATA_DIM),
                        (0, H_pad - HIDDEN_DIM))).astype(jnp.bfloat16)
    b1_p = jnp.pad(b1, (0, H_pad - HIDDEN_DIM)).reshape(1, H_pad).astype(jnp.float32)

    wh = jnp.concatenate([w21, w22], axis=1)                  # (400, 2L)
    wh_p = jnp.pad(wh, ((0, H_pad - HIDDEN_DIM),
                        (0, OUT_W - 2 * L))).astype(jnp.bfloat16)
    bh = jnp.concatenate([b21, b22])
    bh_p = jnp.pad(bh, (0, OUT_W - 2 * L)).reshape(1, OUT_W).astype(jnp.float32)

    grid = (B_pad // TM,)
    grid_spec = pltpu.PrefetchScalarGridSpec(
        num_scalar_prefetch=0,
        grid=grid,
        in_specs=[
            pl.BlockSpec((TM, K_pad), lambda i: (i, 0)),          # x tile
            pl.BlockSpec((K_pad, H_pad), lambda i: (0, 0)),       # W1 (resident)
            pl.BlockSpec((1, H_pad), lambda i: (0, 0)),           # b1
            pl.BlockSpec((H_pad, OUT_W), lambda i: (0, 0)),       # [W21|W22]
            pl.BlockSpec((1, OUT_W), lambda i: (0, 0)),           # [b21|b22]
        ],
        out_specs=pl.BlockSpec((TM, OUT_W), lambda i: (i, 0)),
    )

    packed = pl.pallas_call(
        functools.partial(enc_kernel, latent_dim=L),
        out_shape=jax.ShapeDtypeStruct((B_pad, OUT_W), jnp.float32),
        grid_spec=grid_spec,
        compiler_params=pltpu.CompilerParams(
            dimension_semantics=("parallel",),     # independent batch tiles
            vmem_limit_bytes=32 << 20,             # headroom on v7x's 64 MiB VMEM
        ),
    )(x_bf, w1_p, b1_p, wh_p, bh_p)

    mu = packed[:B, :L]
    lv_scaled = packed[:B, L:2 * L]
    return mu, lv_scaled


def init_params(key, latent_dim):
    """Deterministic init mimicking nn.Linear default: U(-1/sqrt(fan_in), +)."""
    ks = jax.random.split(key, 6)

    def lin(kw, kb, fan_in, fan_out):
        bound = 1.0 / jnp.sqrt(jnp.float32(fan_in))
        w = jax.random.uniform(kw, (fan_in, fan_out), jnp.float32, -bound, bound)
        b = jax.random.uniform(kb, (fan_out,), jnp.float32, -bound, bound)
        return w, b

    w1, b1 = lin(ks[0], ks[1], DATA_DIM, HIDDEN_DIM)
    w21, b21 = lin(ks[2], ks[3], HIDDEN_DIM, latent_dim)
    w22, b22 = lin(ks[4], ks[5], HIDDEN_DIM, latent_dim)
    return (w1, b1, w21, b21, w22, b22)


def reference_forward_f32(x, params):
    """Plain-JAX f32 reference (exact torch semantics)."""
    w1, b1, w21, b21, w22, b22 = params
    B = x.shape[0]
    xf = x.reshape(B, DATA_DIM)
    e = jax.nn.relu(xf @ w1 + b1)
    mu = e @ w21 + b21
    lv = e @ w22 + b22
    return mu, jax.nn.softmax(lv, axis=-1) * lv.shape[-1] + ETA


def reference_forward_bf16(x, params):
    """Precision-matched reference (bf16 matmuls, f32 accumulation)."""
    w1, b1, w21, b21, w22, b22 = params
    B = x.shape[0]
    xf = x.reshape(B, DATA_DIM).astype(jnp.bfloat16)
    e = jnp.dot(xf, w1.astype(jnp.bfloat16),
                preferred_element_type=jnp.float32) + b1
    e = jnp.maximum(e, 0.0).astype(jnp.bfloat16)
    wh = jnp.concatenate([w21, w22], axis=1).astype(jnp.bfloat16)
    bh = jnp.concatenate([b21, b22])
    h = jnp.dot(e, wh, preferred_element_type=jnp.float32) + bh
    L = w21.shape[1]
    mu, lv = h[:, :L], h[:, L:]
    return mu, jax.nn.softmax(lv, axis=-1) * L + ETA


if __name__ == "__main__":
    key = jax.random.PRNGKey(0)
    k_x, k_p = jax.random.split(key)

    B = 2
    LATENT_DIM = 20

    x = jax.random.normal(k_x, (B,) + DATA_SIZE, dtype=jnp.float32)
    params = init_params(k_p, LATENT_DIM)

    mu, lv_scaled = enc_forward(x, params)
    jax.block_until_ready((mu, lv_scaled))

    # Tight check against a precision-matched (bf16 matmul / f32 acc) reference.
    mu_b, lv_b = reference_forward_bf16(x, params)
    assert jnp.allclose(mu, mu_b, atol=1e-2, rtol=1e-2)
    assert jnp.allclose(lv_scaled, lv_b, atol=1e-2, rtol=1e-2)

    # Loose check against the exact f32 torch semantics (bf16 weight cast only
    # changes low-order bits).
    mu_ref, lv_ref = reference_forward_f32(x, params)
    assert jnp.allclose(mu, mu_ref, atol=1e-1, rtol=1e-1)
    assert jnp.allclose(lv_scaled, lv_ref, atol=1e-1, rtol=1e-1)

    print("KERNEL_OK")
</pallas_src>

<mosaic_0001>
module attributes {stable_mosaic.version = 11 : i64} {
  func.func @enc_kernel(%arg0: i32, %arg1: memref<16x2432xbf16, #tpu.memory_space<vmem>>, %arg2: memref<2432x512xbf16, #tpu.memory_space<vmem>>, %arg3: memref<1x512xf32, #tpu.memory_space<vmem>>, %arg4: memref<512x128xbf16, #tpu.memory_space<vmem>>, %arg5: memref<1x128xf32, #tpu.memory_space<vmem>>, %arg6: memref<16x128xf32, #tpu.memory_space<vmem>>) attributes {dimension_semantics = [#tpu.dimension_semantics<parallel>], iteration_bounds = array<i64: 1>, scalar_prefetch = 0 : i64, scratch_operands = 0 : i64, tpu.core_type = #tpu.core_type<tc>, window_params = [{transform_indices = @transform_0, window_bounds = array<i64: 16, 2432>}, {pipeline_mode = #tpu.pipeline_mode<synchronous>, transform_indices = @transform_1, window_bounds = array<i64: 2432, 512>}, {pipeline_mode = #tpu.pipeline_mode<synchronous>, transform_indices = @transform_2, window_bounds = array<i64: 1, 512>}, {pipeline_mode = #tpu.pipeline_mode<synchronous>, transform_indices = @transform_3, window_bounds = array<i64: 512, 128>}, {pipeline_mode = #tpu.pipeline_mode<synchronous>, transform_indices = @transform_4, window_bounds = array<i64: 1, 128>}, {transform_indices = @transform_5, window_bounds = array<i64: 16, 128>}]} {
    %c0 = arith.constant 0 : index
    %c0_0 = arith.constant 0 : index
    %0 = vector.load %arg1[%c0, %c0_0] : memref<16x2432xbf16, #tpu.memory_space<vmem>>, vector<16x2432xbf16>
    %c0_1 = arith.constant 0 : index
    %c0_2 = arith.constant 0 : index
    %1 = vector.load %arg2[%c0_1, %c0_2] : memref<2432x512xbf16, #tpu.memory_space<vmem>>, vector<2432x512xbf16>
    %cst = arith.constant dense<0.000000e+00> : vector<16x512xf32>
    %2 = tpu.matmul %0, %1, %cst {dimension_numbers = #tpu.dot_dimension_numbers<[1], [0], [0], [1], [0, 0, 1, 1], [], []>} : vector<16x2432xbf16>, vector<2432x512xbf16>, vector<16x512xf32> -> vector<16x512xf32>
    %c0_3 = arith.constant 0 : index
    %c0_4 = arith.constant 0 : index
    %3 = vector.load %arg3[%c0_3, %c0_4] : memref<1x512xf32, #tpu.memory_space<vmem>>, vector<1x512xf32>
    %4 = vector.broadcast %3 : vector<1x512xf32> to vector<16x512xf32>
    %5 = arith.addf %2, %4 : vector<16x512xf32>
    %cst_5 = arith.constant 0.000000e+00 : f32
    %6 = vector.broadcast %cst_5 : f32 to vector<16x512xf32>
    %7 = arith.maximumf %5, %6 : vector<16x512xf32>
    %8 = arith.truncf %7 : vector<16x512xf32> to vector<16x512xbf16>
    %c0_6 = arith.constant 0 : index
    %c0_7 = arith.constant 0 : index
    %9 = vector.load %arg4[%c0_6, %c0_7] : memref<512x128xbf16, #tpu.memory_space<vmem>>, vector<512x128xbf16>
    %cst_8 = arith.constant dense<0.000000e+00> : vector<16x128xf32>
    %10 = tpu.matmul %8, %9, %cst_8 {dimension_numbers = #tpu.dot_dimension_numbers<[1], [0], [0], [1], [0, 0, 1, 1], [], []>} : vector<16x512xbf16>, vector<512x128xbf16>, vector<16x128xf32> -> vector<16x128xf32>
    %c0_9 = arith.constant 0 : index
    %c0_10 = arith.constant 0 : index
    %11 = vector.load %arg5[%c0_9, %c0_10] : memref<1x128xf32, #tpu.memory_space<vmem>>, vector<1x128xf32>
    %12 = vector.broadcast %11 : vector<1x128xf32> to vector<16x128xf32>
    %13 = arith.addf %10, %12 : vector<16x128xf32>
    %14 = tpu.iota {dimensions = array<i32: 1>} : vector<16x128xi32>
    %c20_i32 = arith.constant 20 : i32
    %15 = vector.broadcast %c20_i32 : i32 to vector<16x128xi32>
    %16 = arith.cmpi sge, %14, %15 : vector<16x128xi32>
    %c40_i32 = arith.constant 40 : i32
    %17 = vector.broadcast %c40_i32 : i32 to vector<16x128xi32>
    %18 = arith.cmpi slt, %14, %17 : vector<16x128xi32>
    %19 = arith.andi %16, %18 : vector<16x128xi1>
    %cst_11 = arith.constant 0xFF800000 : f32
    %20 = vector.broadcast %cst_11 : f32 to vector<16x128xf32>
    %21 = arith.select %19, %13, %20 : vector<16x128xi1>, vector<16x128xf32>
    %cst_12 = arith.constant dense<0xFF800000> : vector<16xf32>
    %22 = vector.multi_reduction <maximumf>, %21, %cst_12 [1] : vector<16x128xf32> to vector<16xf32>
    %23 = vector.shape_cast %22 : vector<16xf32> to vector<16x1xf32>
    %24 = vector.broadcast %23 : vector<16x1xf32> to vector<16x128xf32>
    %25 = arith.subf %21, %24 : vector<16x128xf32>
    %26 = math.exp %25 : vector<16x128xf32>
    %cst_13 = arith.constant dense<0.000000e+00> : vector<16xf32>
    %27 = vector.multi_reduction <add>, %26, %cst_13 [1] : vector<16x128xf32> to vector<16xf32>
    %28 = vector.shape_cast %27 : vector<16xf32> to vector<16x1xf32>
    %29 = tpu.reciprocal %28 {approx = true} : vector<16x1xf32> -> vector<16x1xf32>
    %30 = vector.broadcast %29 : vector<16x1xf32> to vector<16x128xf32>
    %31 = arith.mulf %26, %30 : vector<16x128xf32>
    %cst_14 = arith.constant 2.000000e+01 : f32
    %32 = vector.broadcast %cst_14 : f32 to vector<16x128xf32>
    %33 = arith.mulf %31, %32 : vector<16x128xf32>
    %cst_15 = arith.constant 9.99999997E-7 : f32
    %34 = vector.broadcast %cst_15 : f32 to vector<16x128xf32>
    %35 = arith.addf %33, %34 : vector<16x128xf32>
    %c20_i32_16 = arith.constant 20 : i32
    %36 = vector.broadcast %c20_i32_16 : i32 to vector<16x128xi32>
    %37 = arith.cmpi slt, %14, %36 : vector<16x128xi32>
    %38 = arith.select %37, %13, %35 : vector<16x128xi1>, vector<16x128xf32>
    %c0_17 = arith.constant 0 : index
    %c0_18 = arith.constant 0 : index
    %39 = vector.load %arg6[%c0_17, %c0_18] : memref<16x128xf32, #tpu.memory_space<vmem>>, vector<16x128xf32>
    tpu.vector_store %arg6[%c0_17, %c0_18], %38 {strides = array<i32>} : memref<16x128xf32, #tpu.memory_space<vmem>>, vector<16x128xf32>,
    return
  }
  func.func @transform_0(%arg0: i32) -> (i32, i32) {
    %c0_i32 = arith.constant 0 : i32
    %c0_i32_0 = arith.constant 0 : i32
    return %arg0, %c0_i32 : i32, i32
  }
  func.func @transform_1(%arg0: i32) -> (i32, i32) {
    %c0_i32 = arith.constant 0 : i32
    %c0_i32_0 = arith.constant 0 : i32
    %c0_i32_1 = arith.constant 0 : i32
    return %c0_i32, %c0_i32_0 : i32, i32
  }
  func.func @transform_2(%arg0: i32) -> (i32, i32) {
    %c0_i32 = arith.constant 0 : i32
    %c0_i32_0 = arith.constant 0 : i32
    %c0_i32_1 = arith.constant 0 : i32
    return %c0_i32, %c0_i32_0 : i32, i32
  }
  func.func @transform_3(%arg0: i32) -> (i32, i32) {
    %c0_i32 = arith.constant 0 : i32
    %c0_i32_0 = arith.constant 0 : i32
    %c0_i32_1 = arith.constant 0 : i32
    return %c0_i32, %c0_i32_0 : i32, i32
  }
  func.func @transform_4(%arg0: i32) -> (i32, i32) {
    %c0_i32 = arith.constant 0 : i32
    %c0_i32_0 = arith.constant 0 : i32
    %c0_i32_1 = arith.constant 0 : i32
    return %c0_i32, %c0_i32_0 : i32, i32
  }
  func.func @transform_5(%arg0: i32) -> (i32, i32) {
    %c0_i32 = arith.constant 0 : i32
    %c0_i32_0 = arith.constant 0 : i32
    return %arg0, %c0_i32 : i32, i32
  }
}

</mosaic_0001>

<llo_original>
// kernel: tpu_custom_call.1
$region0: #{tpu_custom_call.1}
  #allocation0 [shape = 'u32[]', space=smem, size = 0x4, offset = 0x4, fixed_abs, tag = 'smem constant byte address 0x4 - core index']
  #allocation1 [shape = 'u32[144,128]{1,0:T(1,128)}', space=vmem, size = 0x12000, scoped, tag = 'internal scratch']
  %s0 = inlined_call_operand.hbm [shape: bf16[16,2432], index: 0, kind: input, shape index: {}]
  %s1 = inlined_call_operand.hbm [shape: bf16[2432,512], index: 1, kind: input, shape index: {}]
  %s2 = inlined_call_operand.hbm [shape: f32[1,512], index: 2, kind: input, shape index: {}]
  %s3 = inlined_call_operand.hbm [shape: bf16[512,128], index: 3, kind: input, shape index: {}]
  %s4 = inlined_call_operand.hbm [shape: f32[1,128], index: 4, kind: input, shape index: {}]
  %s5 = inlined_call_operand.hbm [shape: f32[16,128], index: 5, kind: output, shape index: {}]
  %s6 = sld [smem:[#allocation0]]
  $region50: #{tpu_custom_call.1} parent=0
    _
  %s8 = ssub.s32 1, %s6
  %s9 = scalar_select 0, %s8, %s6
  $region1: #{tpu_custom_call.1} parent=0
    #allocation2 [shape = 'u8[77824]{0}', space=vmem, size = 0x13000, scoped, tag = 'input window, operand 0, single buffered']
    #allocation3 [shape = 's32[1]{0}', space=sflag, size = 0x4, scoped, tag = 'scoped memory for tpu_custom_call.1']
    #allocation4 [shape = 's32[1]{0}', space=sflag, size = 0x4, scoped, tag = 'scoped memory for tpu_custom_call.1']
    #allocation5 [shape = 'u8[2490368]{0}', space=vmem, size = 0x260000, scoped, tag = 'input window, operand 1, single buffered']
    #allocation6 [shape = 's32[1]{0}', space=sflag, size = 0x4, scoped, tag = 'scoped memory for tpu_custom_call.1']
    #allocation7 [shape = 'u8[2048]{0}', space=vmem, size = 0x800, scoped, tag = 'input window, operand 2, single buffered']
    #allocation8 [shape = 'u8[131072]{0}', space=vmem, size = 0x20000, scoped, tag = 'input window, operand 3, single buffered']
    #allocation9 [shape = 's32[1]{0}', space=sflag, size = 0x4, scoped, tag = 'scoped memory for tpu_custom_call.1']
    #allocation10 [shape = 'u8[512]{0}', space=vmem, size = 0x400, scoped, tag = 'input window, operand 4, single buffered']
    #allocation11 [shape = 'u8[8192]{0}', space=vmem, size = 0x2000, scoped, tag = 'output window, operand 0, single buffered']
    %10 = vsyncpa [#allocation3], 0
    %11 = vsyncpa [#allocation6], 0
    %12 = vsyncpa [#allocation9], 0
    %13 = vsyncpa [#allocation4], 0
    // Predicated region
    $region2: #{tpu_custom_call.1} parent=1 // pred_check
      _
    $region3: #{tpu_custom_call.1} parent=1 // pred_check_branch
      %15 = sbr.rel (0) target = $region5
    $region4: #{tpu_custom_call.1} parent=1 // pred_region
      %s17 = ssub.s32 2432, 2432
      %18 = vsyncadd [#allocation3], %s17
      %s19 = sshll.u32 [#allocation2], 4
      %s20 = int_to_ptr.vmem [resolvable:$true] %s19
      %25 = dma.hbm_to_vmem [thread:$0]  %s0, 2432, %s20, [#allocation3], 1216, 1216, 76
    $region5: #{tpu_custom_call.1} parent=1 // pred_fallthru
      _
    // Predicated region
    $region6: #{tpu_custom_call.1} parent=1 // pred_check
      _
    $region7: #{tpu_custom_call.1} parent=1 // pred_check_branch
      %27 = sbr.rel (0) target = $region9
    $region8: #{tpu_custom_call.1} parent=1 // pred_region
      %s29 = ssub.s32 77824, 77824
      %30 = vsyncadd [#allocation6], %s29
      %s31 = sshll.u32 [#allocation5], 4
      %s32 = int_to_ptr.vmem [resolvable:$true] %s31
      %37 = dma.hbm_to_vmem [thread:$0]  %s1, 77824, %s32, [#allocation6], 256, 256, 16
    $region9: #{tpu_custom_call.1} parent=1 // pred_fallthru
      _
    // Predicated region
    $region10: #{tpu_custom_call.1} parent=1 // pred_check
      _
    $region11: #{tpu_custom_call.1} parent=1 // pred_check_branch
      %39 = sbr.rel (0) target = $region13
    $region12: #{tpu_custom_call.1} parent=1 // pred_region
      %s41 = ssub.s32 64, 64
      %42 = vsyncadd [#allocation6], %s41
      %s44 = sshll.u32 [#allocation7], 4
      %s45 = int_to_ptr.vmem [resolvable:$true] %s44
      %47 = dma.hbm_to_vmem [thread:$0]  %s2, 64, %s45, [#allocation6]
    $region13: #{tpu_custom_call.1} parent=1 // pred_fallthru
      _
    // Predicated region
    $region14: #{tpu_custom_call.1} parent=1 // pred_check
      _
    $region15: #{tpu_custom_call.1} parent=1 // pred_check_branch
      %49 = sbr.rel (0) target = $region17
    $region16: #{tpu_custom_call.1} parent=1 // pred_region
      %s51 = ssub.s32 4096, 4096
      %52 = vsyncadd [#allocation9], %s51
      %s53 = sshll.u32 [#allocation8], 4
      %s54 = int_to_ptr.vmem [resolvable:$true] %s53
      %59 = dma.hbm_to_vmem [thread:$0]  %s3, 4096, %s54, [#allocation9], 64, 64, 4
    $region17: #{tpu_custom_call.1} parent=1 // pred_fallthru
      _
    // Predicated region
    $region18: #{tpu_custom_call.1} parent=1 // pred_check
      _
    $region19: #{tpu_custom_call.1} parent=1 // pred_check_branch
      %61 = sbr.rel (0) target = $region21
    $region20: #{tpu_custom_call.1} parent=1 // pred_region
      %s63 = ssub.s32 16, 16
      %64 = vsyncadd [#allocation9], %s63
      %s66 = sshll.u32 [#allocation10], 4
      %s67 = int_to_ptr.vmem [resolvable:$true] %s66
      %69 = dma.hbm_to_vmem [thread:$0]  %s4, 16, %s67, [#allocation9]
    $region21: #{tpu_custom_call.1} parent=1 // pred_fallthru
      _
    // Predicated region
    $region22: #{tpu_custom_call.1} parent=1 // pred_check
      _
    $region23: #{tpu_custom_call.1} parent=1 // pred_check_branch
      %71 = sbr.rel (0) target = $region25
    $region24: #{tpu_custom_call.1} parent=1 // pred_region
      %72 = dma.done [#allocation3], 2432
    $region25: #{tpu_custom_call.1} parent=1 // pred_fallthru
      _
    // Predicated region
    $region26: #{tpu_custom_call.1} parent=1 // pred_check
      _
    $region27: #{tpu_custom_call.1} parent=1 // pred_check_branch
      %74 = sbr.rel (0) target = $region29
    $region28: #{tpu_custom_call.1} parent=1 // pred_region
      %75 = dma.done [#allocation6], 77824
    $region29: #{tpu_custom_call.1} parent=1 // pred_fallthru
      _
    // Predicated region
    $region30: #{tpu_custom_call.1} parent=1 // pred_check
      _
    $region31: #{tpu_custom_call.1} parent=1 // pred_check_branch
      %77 = sbr.rel (0) target = $region33
    $region32: #{tpu_custom_call.1} parent=1 // pred_region
      %78 = dma.done [#allocation6], 64
    $region33: #{tpu_custom_call.1} parent=1 // pred_fallthru
      _
    // Predicated region
    $region34: #{tpu_custom_call.1} parent=1 // pred_check
      _
    $region35: #{tpu_custom_call.1} parent=1 // pred_check_branch
      %80 = sbr.rel (0) target = $region37
    $region36: #{tpu_custom_call.1} parent=1 // pred_region
      %81 = dma.done [#allocation9], 4096
    $region37: #{tpu_custom_call.1} parent=1 // pred_fallthru
      _
    // Predicated region
    $region38: #{tpu_custom_call.1} parent=1 // pred_check
      _
    $region39: #{tpu_custom_call.1} parent=1 // pred_check_branch
      %83 = sbr.rel (0) target = $region41
    $region40: #{tpu_custom_call.1} parent=1 // pred_region
      %84 = dma.done [#allocation9], 16
    $region41: #{tpu_custom_call.1} parent=1 // pred_fallthru
      _
    %v86 = vld [vmem:[#allocation2] sm:$0xff]
    %v87 = vld [vmem:[#allocation2 + $0x8] sm:$0xff]
    %v88 = vld [vmem:[#allocation2 + $0x10] sm:$0xff]
    %v89 = vld [vmem:[#allocation2 + $0x18] sm:$0xff]
    %v90 = vld [vmem:[#allocation2 + $0x20] sm:$0xff]
    %v91 = vld [vmem:[#allocation2 + $0x28] sm:$0xff]
    %v92 = vld [vmem:[#allocation2 + $0x30] sm:$0xff]
    %v93 = vld [vmem:[#allocation2 + $0x38] sm:$0xff]
    %v94 = vld [vmem:[#allocation2 + $0x40] sm:$0xff]
    %v95 = vld [vmem:[#allocation2 + $0x48] sm:$0xf]
    %v96 = vld [vmem:[#allocation2 + $0x4c] sm:$0xff]
    %v97 = vld [vmem:[#allocation2 + $0x54] sm:$0xff]
    %v98 = vld [vmem:[#allocation2 + $0x5c] sm:$0xff]
    %v99 = vld [vmem:[#allocation2 + $0x64] sm:$0xff]
    %v100 = vld [vmem:[#allocation2 + $0x6c] sm:$0xff]
    %v101 = vld [vmem:[#allocation2 + $0x74] sm:$0xff]
    %v102 = vld [vmem:[#allocation2 + $0x7c] sm:$0xff]
    %v103 = vld [vmem:[#allocation2 + $0x84] sm:$0xff]
    %v104 = vld [vmem:[#allocation2 + $0x8c] sm:$0xff]
    %v105 = vld [vmem:[#allocation2 + $0x94] sm:$0xf]
    %v106 = vld [vmem:[#allocation5] sm:$0xff]
    %v107 = vld [vmem:[#allocation5 + $0x8] sm:$0xff]
    %v108 = vld [vmem:[#allocation5 + $0x10] sm:$0xff]
    %v109 = vld [vmem:[#allocation5 + $0x18] sm:$0xff]
    %v110 = vld [vmem:[#allocation5 + $0x20] sm:$0xff]
    %v111 = vld [vmem:[#allocation5 + $0x28] sm:$0xff]
    %v112 = vld [vmem:[#allocation5 + $0x30] sm:$0xff]
    %v113 = vld [vmem:[#allocation5 + $0x38] sm:$0xff]
    %v114 = vld [vmem:[#allocation5 + $0x40] sm:$0xff]
    %v115 = vld [vmem:[#allocation5 + $0x48] sm:$0xff]
    %v116 = vld [vmem:[#allocation5 + $0x50] sm:$0xff]
    %v117 = vld [vmem:[#allocation5 + $0x58] sm:$0xff]
    %v118 = vld [vmem:[#allocation5 + $0x60] sm:$0xff]
    %v119 = vld [vmem:[#allocation5 + $0x68] sm:$0xff]
    %v120 = vld [vmem:[#allocation5 + $0x70] sm:$0xff]
    %v121 = vld [vmem:[#allocation5 + $0x78] sm:$0xff]
    %v122 = vld [vmem:[#allocation5 + $0x80] sm:$0xff]
    %v123 = vld [vmem:[#allocation5 + $0x88] sm:$0xff]
    %v124 = vld [vmem:[#allocation5 + $0x90] sm:$0xff]
    %v125 = vld [vmem:[#allocation5 + $0x98] sm:$0xff]
    %v126 = vld [vmem:[#allocation5 + $0xa0] sm:$0xff]
    %v127 = vld [vmem:[#allocation5 + $0xa8] sm:$0xff]
    %v128 = vld [vmem:[#allocation5 + $0xb0] sm:$0xff]
    %v129 = vld [vmem:[#allocation5 + $0xb8] sm:$0xff]
    %v130 = vld [vmem:[#allocation5 + $0xc0] sm:$0xff]
    %v131 = vld [vmem:[#allocation5 + $0xc8] sm:$0xff]
    %v132 = vld [vmem:[#allocation5 + $0xd0] sm:$0xff]
    %v133 = vld [vmem:[#allocation5 + $0xd8] sm:$0xff]
    %v134 = vld [vmem:[#allocation5 + $0xe0] sm:$0xff]
    %v135 = vld [vmem:[#allocation5 + $0xe8] sm:$0xff]
    %v136 = vld [vmem:[#allocation5 + $0xf0] sm:$0xff]
    %v137 = vld [vmem:[#allocation5 + $0xf8] sm:$0xff]
    %v138 = vld [vmem:[#allocation5 + $0x100] sm:$0xff]
    %v139 = vld [vmem:[#allocation5 + $0x108] sm:$0xff]
    %v140 = vld [vmem:[#allocation5 + $0x110] sm:$0xff]
    %v141 = vld [vmem:[#allocation5 + $0x118] sm:$0xff]
    %v142 = vld [vmem:[#allocation5 + $0x120] sm:$0xff]
    %v143 = vld [vmem:[#allocation5 + $0x128] sm:$0xff]
    %v144 = vld [vmem:[#allocation5 + $0x130] sm:$0xff]
    %v145 = vld [vmem:[#allocation5 + $0x138] sm:$0xff]
    %v146 = vld [vmem:[#allocation5 + $0x140] sm:$0xff]
    %v147 = vld [vmem:[#allocation5 + $0x148] sm:$0xff]
    %v148 = vld [vmem:[#allocation5 + $0x150] sm:$0xff]
    %v149 = vld [vmem:[#allocation5 + $0x158] sm:$0xff]
    %v150 = vld [vmem:[#allocation5 + $0x160] sm:$0xff]
    %v151 = vld [vmem:[#allocation5 + $0x168] sm:$0xff]
    %v152 = vld [vmem:[#allocation5 + $0x170] sm:$0xff]
    %v153 = vld [vmem:[#allocation5 + $0x178] sm:$0xff]
    %v154 = vld [vmem:[#allocation5 + $0x180] sm:$0xff]
    %v155 = vld [vmem:[#allocation5 + $0x188] sm:$0xff]
    %v156 = vld [vmem:[#allocation5 + $0x190] sm:$0xff]
    %v157 = vld [vmem:[#allocation5 + $0x198] sm:$0xff]
    %v158 = vld [vmem:[#allocation5 + $0x1a0] sm:$0xff]
    %v159 = vld [vmem:[#allocation5 + $0x1a8] sm:$0xff]
    %v160 = vld [vmem:[#allocation5 + $0x1b0] sm:$0xff]
    %v161 = vld [vmem:[#allocation5 + $0x1b8] sm:$0xff]
    %v162 = vld [vmem:[#allocation5 + $0x1c0] sm:$0xff]
    %v163 = vld [vmem:[#allocation5 + $0x1c8] sm:$0xff]
    %v164 = vld [vmem:[#allocation5 + $0x1d0] sm:$0xff]
    %v165 = vld [vmem:[#allocation5 + $0x1d8] sm:$0xff]
    %v166 = vld [vmem:[#allocation5 + $0x1e0] sm:$0xff]
    %v167 = vld [vmem:[#allocation5 + $0x1e8] sm:$0xff]
    %v168 = vld [vmem:[#allocation5 + $0x1f0] sm:$0xff]
    %v169 = vld [vmem:[#allocation5 + $0x1f8] sm:$0xff]
    %v170 = vld [vmem:[#allocation5 + $0x200] sm:$0xff]
    %v171 = vld [vmem:[#allocation5 + $0x208] sm:$0xff]
    %v172 = vld [vmem:[#allocation5 + $0x210] sm:$0xff]
    %v173 = vld [vmem:[#allocation5 + $0x218] sm:$0xff]
    %v174 = vld [vmem:[#allocation5 + $0x220] sm:$0xff]
    %v175 = vld [vmem:[#allocation5 + $0x228] sm:$0xff]
    %v176 = vld [vmem:[#allocation5 + $0x230] sm:$0xff]
    %v177 = vld [vmem:[#allocation5 + $0x238] sm:$0xff]
    %v178 = vld [vmem:[#allocation5 + $0x240] sm:$0xff]
    %v179 = vld [vmem:[#allocation5 + $0x248] sm:$0xff]
    %v180 = vld [vmem:[#allocation5 + $0x250] sm:$0xff]
    %v181 = vld [vmem:[#allocation5 + $0x258] sm:$0xff]
    %v182 = vld [vmem:[#allocation5 + $0x260] sm:$0xff]
    %v183 = vld [vmem:[#allocation5 + $0x268] sm:$0xff]
    %v184 = vld [vmem:[#allocation5 + $0x270] sm:$0xff]
    %v185 = vld [vmem:[#allocation5 + $0x278] sm:$0xff]
    %v186 = vld [vmem:[#allocation5 + $0x280] sm:$0xff]
    %v187 = vld [vmem:[#allocation5 + $0x288] sm:$0xff]
    %v188 = vld [vmem:[#allocation5 + $0x290] sm:$0xff]
    %v189 = vld [vmem:[#allocation5 + $0x298] sm:$0xff]
    %v190 = vld [vmem:[#allocation5 + $0x2a0] sm:$0xff]
    %v191 = vld [vmem:[#allocation5 + $0x2a8] sm:$0xff]
    %v192 = vld [vmem:[#allocation5 + $0x2b0] sm:$0xff]
    %v193 = vld [vmem:[#allocation5 + $0x2b8] sm:$0xff]
    %v194 = vld [vmem:[#allocation5 + $0x2c0] sm:$0xff]
    %v195 = vld [vmem:[#allocation5 + $0x2c8] sm:$0xff]
    %v196 = vld [vmem:[#allocation5 + $0x2d0] sm:$0xff]
    %v197 = vld [vmem:[#allocation5 + $0x2d8] sm:$0xff]
    %v198 = vld [vmem:[#allocation5 + $0x2e0] sm:$0xff]
    %v199 = vld [vmem:[#allocation5 + $0x2e8] sm:$0xff]
    %v200 = vld [vmem:[#allocation5 + $0x2f0] sm:$0xff]
    %v201 = vld [vmem:[#allocation5 + $0x2f8] sm:$0xff]
    %v202 = vld [vmem:[#allocation5 + $0x300] sm:$0xff]
    %v203 = vld [vmem:[#allocation5 + $0x308] sm:$0xff]
    %v204 = vld [vmem:[#allocation5 + $0x310] sm:$0xff]
    %v205 = vld [vmem:[#allocation5 + $0x318] sm:$0xff]
    %v206 = vld [vmem:[#allocation5 + $0x320] sm:$0xff]
    %v207 = vld [vmem:[#allocation5 + $0x328] sm:$0xff]
    %v208 = vld [vmem:[#allocation5 + $0x330] sm:$0xff]
    %v209 = vld [vmem:[#allocation5 + $0x338] sm:$0xff]
    %v210 = vld [vmem:[#allocation5 + $0x340] sm:$0xff]
    %v211 = vld [vmem:[#allocation5 + $0x348] sm:$0xff]
    %v212 = vld [vmem:[#allocation5 + $0x350] sm:$0xff]
    %v213 = vld [vmem:[#allocation5 + $0x358] sm:$0xff]
    %v214 = vld [vmem:[#allocation5 + $0x360] sm:$0xff]
    %v215 = vld [vmem:[#allocation5 + $0x368] sm:$0xff]
    %v216 = vld [vmem:[#allocation5 + $0x370] sm:$0xff]
    %v217 = vld [vmem:[#allocation5 + $0x378] sm:$0xff]
    %v218 = vld [vmem:[#allocation5 + $0x380] sm:$0xff]
    %v219 = vld [vmem:[#allocation5 + $0x388] sm:$0xff]
    %v220 = vld [vmem:[#allocation5 + $0x390] sm:$0xff]
    %v221 = vld [vmem:[#allocation5 + $0x398] sm:$0xff]
    %v222 = vld [vmem:[#allocation5 + $0x3a0] sm:$0xff]
    %v223 = vld [vmem:[#allocation5 + $0x3a8] sm:$0xff]
    %v224 = vld [vmem:[#allocation5 + $0x3b0] sm:$0xff]
    %v225 = vld [vmem:[#allocation5 + $0x3b8] sm:$0xff]
    %v226 = vld [vmem:[#allocation5 + $0x3c0] sm:$0xff]
    %v227 = vld [vmem:[#allocation5 + $0x3c8] sm:$0xff]
    %v228 = vld [vmem:[#allocation5 + $0x3d0] sm:$0xff]
    %v229 = vld [vmem:[#allocation5 + $0x3d8] sm:$0xff]
    %v230 = vld [vmem:[#allocation5 + $0x3e0] sm:$0xff]
    %v231 = vld [vmem:[#allocation5 + $0x3e8] sm:$0xff]
    %v232 = vld [vmem:[#allocation5 + $0x3f0] sm:$0xff]
    %v233 = vld [vmem:[#allocation5 + $0x3f8] sm:$0xff]
    %v234 = vld [vmem:[#allocation5 + $0x400] sm:$0xff]
    %v235 = vld [vmem:[#allocation5 + $0x408] sm:$0xff]
    %v236 = vld [vmem:[#allocation5 + $0x410] sm:$0xff]
    %v237 = vld [vmem:[#allocation5 + $0x418] sm:$0xff]
    %v238 = vld [vmem:[#allocation5 + $0x420] sm:$0xff]
    %v239 = vld [vmem:[#allocation5 + $0x428] sm:$0xff]
    %v240 = vld [vmem:[#allocation5 + $0x430] sm:$0xff]
    %v241 = vld [vmem:[#allocation5 + $0x438] sm:$0xff]
    %v242 = vld [vmem:[#allocation5 + $0x440] sm:$0xff]
    %v243 = vld [vmem:[#allocation5 + $0x448] sm:$0xff]
    %v244 = vld [vmem:[#allocation5 + $0x450] sm:$0xff]
    %v245 = vld [vmem:[#allocation5 + $0x458] sm:$0xff]
    %v246 = vld [vmem:[#allocation5 + $0x460] sm:$0xff]
    %v247 = vld [vmem:[#allocation5 + $0x468] sm:$0xff]
    %v248 = vld [vmem:[#allocation5 + $0x470] sm:$0xff]
    %v249 = vld [vmem:[#allocation5 + $0x478] sm:$0xff]
    %v250 = vld [vmem:[#allocation5 + $0x480] sm:$0xff]
    %v251 = vld [vmem:[#allocation5 + $0x488] sm:$0xff]
    %v252 = vld [vmem:[#allocation5 + $0x490] sm:$0xff]
    %v253 = vld [vmem:[#allocation5 + $0x498] sm:$0xff]
    %v254 = vld [vmem:[#allocation5 + $0x4a0] sm:$0xff]
    %v255 = vld [vmem:[#allocation5 + $0x4a8] sm:$0xff]
    %v256 = vld [vmem:[#allocation5 + $0x4b0] sm:$0xff]
    %v257 = vld [vmem:[#allocation5 + $0x4b8] sm:$0xff]
    %v258 = vld [vmem:[#allocation5 + $0x4c0] sm:$0xff]
    %v259 = vld [vmem:[#allocation5 + $0x4c8] sm:$0xff]
    %v260 = vld [vmem:[#allocation5 + $0x4d0] sm:$0xff]
    %v261 = vld [vmem:[#allocation5 + $0x4d8] sm:$0xff]
    %v262 = vld [vmem:[#allocation5 + $0x4e0] sm:$0xff]
    %v263 = vld [vmem:[#allocation5 + $0x4e8] sm:$0xff]
    %v264 = vld [vmem:[#allocation5 + $0x4f0] sm:$0xff]
    %v265 = vld [vmem:[#allocation5 + $0x4f8] sm:$0xff]
    %v266 = vld [vmem:[#allocation5 + $0x500] sm:$0xff]
    %v267 = vld [vmem:[#allocation5 + $0x508] sm:$0xff]
    %v268 = vld [vmem:[#allocation5 + $0x510] sm:$0xff]
    %v269 = vld [vmem:[#allocation5 + $0x518] sm:$0xff]
    %v270 = vld [vmem:[#allocation5 + $0x520] sm:$0xff]
    %v271 = vld [vmem:[#allocation5 + $0x528] sm:$0xff]
    %v272 = vld [vmem:[#allocation5 + $0x530] sm:$0xff]
    %v273 = vld [vmem:[#allocation5 + $0x538] sm:$0xff]
    %v274 = vld [vmem:[#allocation5 + $0x540] sm:$0xff]
    %v275 = vld [vmem:[#allocation5 + $0x548] sm:$0xff]
    %v276 = vld [vmem:[#allocation5 + $0x550] sm:$0xff]
    %v277 = vld [vmem:[#allocation5 + $0x558] sm:$0xff]
    %v278 = vld [vmem:[#allocation5 + $0x560] sm:$0xff]
    %v279 = vld [vmem:[#allocation5 + $0x568] sm:$0xff]
    %v280 = vld [vmem:[#allocation5 + $0x570] sm:$0xff]
    %v281 = vld [vmem:[#allocation5 + $0x578] sm:$0xff]
    %v282 = vld [vmem:[#allocation5 + $0x580] sm:$0xff]
    %v283 = vld [vmem:[#allocation5 + $0x588] sm:$0xff]
    %v284 = vld [vmem:[#allocation5 + $0x590] sm:$0xff]
    %v285 = vld [vmem:[#allocation5 + $0x598] sm:$0xff]
    %v286 = vld [vmem:[#allocation5 + $0x5a0] sm:$0xff]
    %v287 = vld [vmem:[#allocation5 + $0x5a8] sm:$0xff]
    %v288 = vld [vmem:[#allocation5 + $0x5b0] sm:$0xff]
    %v289 = vld [vmem:[#allocation5 + $0x5b8] sm:$0xff]
    %v290 = vld [vmem:[#allocation5 + $0x5c0] sm:$0xff]
    %v291 = vld [vmem:[#allocation5 + $0x5c8] sm:$0xff]
    %v292 = vld [vmem:[#allocation5 + $0x5d0] sm:$0xff]
    %v293 = vld [vmem:[#allocation5 + $0x5d8] sm:$0xff]
    %v294 = vld [vmem:[#allocation5 + $0x5e0] sm:$0xff]
    %v295 = vld [vmem:[#allocation5 + $0x5e8] sm:$0xff]
    %v296 = vld [vmem:[#allocation5 + $0x5f0] sm:$0xff]
    %v297 = vld [vmem:[#allocation5 + $0x5f8] sm:$0xff]
    %v298 = vld [vmem:[#allocation5 + $0x600] sm:$0xff]
    %v299 = vld [vmem:[#allocation5 + $0x608] sm:$0xff]
    %v300 = vld [vmem:[#allocation5 + $0x610] sm:$0xff]
    %v301 = vld [vmem:[#allocation5 + $0x618] sm:$0xff]
    %v302 = vld [vmem:[#allocation5 + $0x620] sm:$0xff]
    %v303 = vld [vmem:[#allocation5 + $0x628] sm:$0xff]
    %v304 = vld [vmem:[#allocation5 + $0x630] sm:$0xff]
    %v305 = vld [vmem:[#allocation5 + $0x638] sm:$0xff]
    %v306 = vld [vmem:[#allocation5 + $0x640] sm:$0xff]
    %v307 = vld [vmem:[#allocation5 + $0x648] sm:$0xff]
    %v308 = vld [vmem:[#allocation5 + $0x650] sm:$0xff]
    %v309 = vld [vmem:[#allocation5 + $0x658] sm:$0xff]
    %v310 = vld [vmem:[#allocation5 + $0x660] sm:$0xff]
    %v311 = vld [vmem:[#allocation5 + $0x668] sm:$0xff]
    %v312 = vld [vmem:[#allocation5 + $0x670] sm:$0xff]
    %v313 = vld [vmem:[#allocation5 + $0x678] sm:$0xff]
    %v314 = vld [vmem:[#allocation5 + $0x680] sm:$0xff]
    %v315 = vld [vmem:[#allocation5 + $0x688] sm:$0xff]
    %v316 = vld [vmem:[#allocation5 + $0x690] sm:$0xff]
    %v317 = vld [vmem:[#allocation5 + $0x698] sm:$0xff]
    %v318 = vld [vmem:[#allocation5 + $0x6a0] sm:$0xff]
    %v319 = vld [vmem:[#allocation5 + $0x6a8] sm:$0xff]
    %v320 = vld [vmem:[#allocation5 + $0x6b0] sm:$0xff]
    %v321 = vld [vmem:[#allocation5 + $0x6b8] sm:$0xff]
    %v322 = vld [vmem:[#allocation5 + $0x6c0] sm:$0xff]
    %v323 = vld [vmem:[#allocation5 + $0x6c8] sm:$0xff]
    %v324 = vld [vmem:[#allocation5 + $0x6d0] sm:$0xff]
    %v325 = vld [vmem:[#allocation5 + $0x6d8] sm:$0xff]
    %v326 = vld [vmem:[#allocation5 + $0x6e0] sm:$0xff]
    %v327 = vld [vmem:[#allocation5 + $0x6e8] sm:$0xff]
    %v328 = vld [vmem:[#allocation5 + $0x6f0] sm:$0xff]
    %v329 = vld [vmem:[#allocation5 + $0x6f8] sm:$0xff]
    %v330 = vld [vmem:[#allocation5 + $0x700] sm:$0xff]
    %v331 = vld [vmem:[#allocation5 + $0x708] sm:$0xff]
    %v332 = vld [vmem:[#allocation5 + $0x710] sm:$0xff]
    %v333 = vld [vmem:[#allocation5 + $0x718] sm:$0xff]
    %v334 = vld [vmem:[#allocation5 + $0x720] sm:$0xff]
    %v335 = vld [vmem:[#allocation5 + $0x728] sm:$0xff]
    %v336 = vld [vmem:[#allocation5 + $0x730] sm:$0xff]
    %v337 = vld [vmem:[#allocation5 + $0x738] sm:$0xff]
    %v338 = vld [vmem:[#allocation5 + $0x740] sm:$0xff]
    %v339 = vld [vmem:[#allocation5 + $0x748] sm:$0xff]
    %v340 = vld [vmem:[#allocation5 + $0x750] sm:$0xff]
    %v341 = vld [vmem:[#allocation5 + $0x758] sm:$0xff]
    %v342 = vld [vmem:[#allocation5 + $0x760] sm:$0xff]
    %v343 = vld [vmem:[#allocation5 + $0x768] sm:$0xff]
    %v344 = vld [vmem:[#allocation5 + $0x770] sm:$0xff]
    %v345 = vld [vmem:[#allocation5 + $0x778] sm:$0xff]
    %v346 = vld [vmem:[#allocation5 + $0x780] sm:$0xff]
    %v347 = vld [vmem:[#allocation5 + $0x788] sm:$0xff]
    %v348 = vld [vmem:[#allocation5 + $0x790] sm:$0xff]
    %v349 = vld [vmem:[#allocation5 + $0x798] sm:$0xff]
    %v350 = vld [vmem:[#allocation5 + $0x7a0] sm:$0xff]
    %v351 = vld [vmem:[#allocation5 + $0x7a8] sm:$0xff]
    %v352 = vld [vmem:[#allocation5 + $0x7b0] sm:$0xff]
    %v353 = vld [vmem:[#allocation5 + $0x7b8] sm:$0xff]
    %v354 = vld [vmem:[#allocation5 + $0x7c0] sm:$0xff]
    %v355 = vld [vmem:[#allocation5 + $0x7c8] sm:$0xff]
    %v356 = vld [vmem:[#allocation5 + $0x7d0] sm:$0xff]
    %v357 = vld [vmem:[#allocation5 + $0x7d8] sm:$0xff]
    %v358 = vld [vmem:[#allocation5 + $0x7e0] sm:$0xff]
    %v359 = vld [vmem:[#allocation5 + $0x7e8] sm:$0xff]
    %v360 = vld [vmem:[#allocation5 + $0x7f0] sm:$0xff]
    %v361 = vld [vmem:[#allocation5 + $0x7f8] sm:$0xff]
    %v362 = vld [vmem:[#allocation5 + $0x800] sm:$0xff]
    %v363 = vld [vmem:[#allocation5 + $0x808] sm:$0xff]
    %v364 = vld [vmem:[#allocation5 + $0x810] sm:$0xff]
    %v365 = vld [vmem:[#allocation5 + $0x818] sm:$0xff]
    %v366 = vld [vmem:[#allocation5 + $0x820] sm:$0xff]
    %v367 = vld [vmem:[#allocation5 + $0x828] sm:$0xff]
    %v368 = vld [vmem:[#allocation5 + $0x830] sm:$0xff]
    %v369 = vld [vmem:[#allocation5 + $0x838] sm:$0xff]
    %v370 = vld [vmem:[#allocation5 + $0x840] sm:$0xff]
    %v371 = vld [vmem:[#allocation5 + $0x848] sm:$0xff]
    %v372 = vld [vmem:[#allocation5 + $0x850] sm:$0xff]
    %v373 = vld [vmem:[#allocation5 + $0x858] sm:$0xff]
    %v374 = vld [vmem:[#allocation5 + $0x860] sm:$0xff]
    %v375 = vld [vmem:[#allocation5 + $0x868] sm:$0xff]
    %v376 = vld [vmem:[#allocation5 + $0x870] sm:$0xff]
    %v377 = vld [vmem:[#allocation5 + $0x878] sm:$0xff]
    %v378 = vld [vmem:[#allocation5 + $0x880] sm:$0xff]
    %v379 = vld [vmem:[#allocation5 + $0x888] sm:$0xff]
    %v380 = vld [vmem:[#allocation5 + $0x890] sm:$0xff]
    %v381 = vld [vmem:[#allocation5 + $0x898] sm:$0xff]
    %v382 = vld [vmem:[#allocation5 + $0x8a0] sm:$0xff]
    %v383 = vld [vmem:[#allocation5 + $0x8a8] sm:$0xff]
    %v384 = vld [vmem:[#allocation5 + $0x8b0] sm:$0xff]
    %v385 = vld [vmem:[#allocation5 + $0x8b8] sm:$0xff]
    %v386 = vld [vmem:[#allocation5 + $0x8c0] sm:$0xff]
    %v387 = vld [vmem:[#allocation5 + $0x8c8] sm:$0xff]
    %v388 = vld [vmem:[#allocation5 + $0x8d0] sm:$0xff]
    %v389 = vld [vmem:[#allocation5 + $0x8d8] sm:$0xff]
    %v390 = vld [vmem:[#allocation5 + $0x8e0] sm:$0xff]
    %v391 = vld [vmem:[#allocation5 + $0x8e8] sm:$0xff]
    %v392 = vld [vmem:[#allocation5 + $0x8f0] sm:$0xff]
    %v393 = vld [vmem:[#allocation5 + $0x8f8] sm:$0xff]
    %v394 = vld [vmem:[#allocation5 + $0x900] sm:$0xff]
    %v395 = vld [vmem:[#allocation5 + $0x908] sm:$0xff]
    %v396 = vld [vmem:[#allocation5 + $0x910] sm:$0xff]
    %v397 = vld [vmem:[#allocation5 + $0x918] sm:$0xff]
    %v398 = vld [vmem:[#allocation5 + $0x920] sm:$0xff]
    %v399 = vld [vmem:[#allocation5 + $0x928] sm:$0xff]
    %v400 = vld [vmem:[#allocation5 + $0x930] sm:$0xff]
    %v401 = vld [vmem:[#allocation5 + $0x938] sm:$0xff]
    %v402 = vld [vmem:[#allocation5 + $0x940] sm:$0xff]
    %v403 = vld [vmem:[#allocation5 + $0x948] sm:$0xff]
    %v404 = vld [vmem:[#allocation5 + $0x950] sm:$0xff]
    %v405 = vld [vmem:[#allocation5 + $0x958] sm:$0xff]
    %v406 = vld [vmem:[#allocation5 + $0x960] sm:$0xff]
    %v407 = vld [vmem:[#allocation5 + $0x968] sm:$0xff]
    %v408 = vld [vmem:[#allocation5 + $0x970] sm:$0xff]
    %v409 = vld [vmem:[#allocation5 + $0x978] sm:$0xff]
    %v410 = vld [vmem:[#allocation5 + $0x980] sm:$0xff]
    %v411 = vld [vmem:[#allocation5 + $0x988] sm:$0xff]
    %v412 = vld [vmem:[#allocation5 + $0x990] sm:$0xff]
    %v413 = vld [vmem:[#allocation5 + $0x998] sm:$0xff]
    %v414 = vld [vmem:[#allocation5 + $0x9a0] sm:$0xff]
    %v415 = vld [vmem:[#allocation5 + $0x9a8] sm:$0xff]
    %v416 = vld [vmem:[#allocation5 + $0x9b0] sm:$0xff]
    %v417 = vld [vmem:[#allocation5 + $0x9b8] sm:$0xff]
    %v418 = vld [vmem:[#allocation5 + $0x9c0] sm:$0xff]
    %v419 = vld [vmem:[#allocation5 + $0x9c8] sm:$0xff]
    %v420 = vld [vmem:[#allocation5 + $0x9d0] sm:$0xff]
    %v421 = vld [vmem:[#allocation5 + $0x9d8] sm:$0xff]
    %v422 = vld [vmem:[#allocation5 + $0x9e0] sm:$0xff]
    %v423 = vld [vmem:[#allocation5 + $0x9e8] sm:$0xff]
    %v424 = vld [vmem:[#allocation5 + $0x9f0] sm:$0xff]
    %v425 = vld [vmem:[#allocation5 + $0x9f8] sm:$0xff]
    %v426 = vld [vmem:[#allocation5 + $0xa00] sm:$0xff]
    %v427 = vld [vmem:[#allocation5 + $0xa08] sm:$0xff]
    %v428 = vld [vmem:[#allocation5 + $0xa10] sm:$0xff]
    %v429 = vld [vmem:[#allocation5 + $0xa18] sm:$0xff]
    %v430 = vld [vmem:[#allocation5 + $0xa20] sm:$0xff]
    %v431 = vld [vmem:[#allocation5 + $0xa28] sm:$0xff]
    %v432 = vld [vmem:[#allocation5 + $0xa30] sm:$0xff]
    %v433 = vld [vmem:[#allocation5 + $0xa38] sm:$0xff]
    %v434 = vld [vmem:[#allocation5 + $0xa40] sm:$0xff]
    %v435 = vld [vmem:[#allocation5 + $0xa48] sm:$0xff]
    %v436 = vld [vmem:[#allocation5 + $0xa50] sm:$0xff]
    %v437 = vld [vmem:[#allocation5 + $0xa58] sm:$0xff]
    %v438 = vld [vmem:[#allocation5 + $0xa60] sm:$0xff]
    %v439 = vld [vmem:[#allocation5 + $0xa68] sm:$0xff]
    %v440 = vld [vmem:[#allocation5 + $0xa70] sm:$0xff]
    %v441 = vld [vmem:[#allocation5 + $0xa78] sm:$0xff]
    %v442 = vld [vmem:[#allocation5 + $0xa80] sm:$0xff]
    %v443 = vld [vmem:[#allocation5 + $0xa88] sm:$0xff]
    %v444 = vld [vmem:[#allocation5 + $0xa90] sm:$0xff]
    %v445 = vld [vmem:[#allocation5 + $0xa98] sm:$0xff]
    %v446 = vld [vmem:[#allocation5 + $0xaa0] sm:$0xff]
    %v447 = vld [vmem:[#allocation5 + $0xaa8] sm:$0xff]
    %v448 = vld [vmem:[#allocation5 + $0xab0] sm:$0xff]
    %v449 = vld [vmem:[#allocation5 + $0xab8] sm:$0xff]
    %v450 = vld [vmem:[#allocation5 + $0xac0] sm:$0xff]
    %v451 = vld [vmem:[#allocation5 + $0xac8] sm:$0xff]
    %v452 = vld [vmem:[#allocation5 + $0xad0] sm:$0xff]
    %v453 = vld [vmem:[#allocation5 + $0xad8] sm:$0xff]
    %v454 = vld [vmem:[#allocation5 + $0xae0] sm:$0xff]
    %v455 = vld [vmem:[#allocation5 + $0xae8] sm:$0xff]
    %v456 = vld [vmem:[#allocation5 + $0xaf0] sm:$0xff]
    %v457 = vld [vmem:[#allocation5 + $0xaf8] sm:$0xff]
    %v458 = vld [vmem:[#allocation5 + $0xb00] sm:$0xff]
    %v459 = vld [vmem:[#allocation5 + $0xb08] sm:$0xff]
    %v460 = vld [vmem:[#allocation5 + $0xb10] sm:$0xff]
    %v461 = vld [vmem:[#allocation5 + $0xb18] sm:$0xff]
    %v462 = vld [vmem:[#allocation5 + $0xb20] sm:$0xff]
    %v463 = vld [vmem:[#allocation5 + $0xb28] sm:$0xff]
    %v464 = vld [vmem:[#allocation5 + $0xb30] sm:$0xff]
    %v465 = vld [vmem:[#allocation5 + $0xb38] sm:$0xff]
    %v466 = vld [vmem:[#allocation5 + $0xb40] sm:$0xff]
    %v467 = vld [vmem:[#allocation5 + $0xb48] sm:$0xff]
    %v468 = vld [vmem:[#allocation5 + $0xb50] sm:$0xff]
    %v469 = vld [vmem:[#allocation5 + $0xb58] sm:$0xff]
    %v470 = vld [vmem:[#allocation5 + $0xb60] sm:$0xff]
    %v471 = vld [vmem:[#allocation5 + $0xb68] sm:$0xff]
    %v472 = vld [vmem:[#allocation5 + $0xb70] sm:$0xff]
    %v473 = vld [vmem:[#allocation5 + $0xb78] sm:$0xff]
    %v474 = vld [vmem:[#allocation5 + $0xb80] sm:$0xff]
    %v475 = vld [vmem:[#allocation5 + $0xb88] sm:$0xff]
    %v476 = vld [vmem:[#allocation5 + $0xb90] sm:$0xff]
    %v477 = vld [vmem:[#allocation5 + $0xb98] sm:$0xff]
    %v478 = vld [vmem:[#allocation5 + $0xba0] sm:$0xff]
    %v479 = vld [vmem:[#allocation5 + $0xba8] sm:$0xff]
    %v480 = vld [vmem:[#allocation5 + $0xbb0] sm:$0xff]
    %v481 = vld [vmem:[#allocation5 + $0xbb8] sm:$0xff]
    %v482 = vld [vmem:[#allocation5 + $0xbc0] sm:$0xff]
    %v483 = vld [vmem:[#allocation5 + $0xbc8] sm:$0xff]
    %v484 = vld [vmem:[#allocation5 + $0xbd0] sm:$0xff]
    %v485 = vld [vmem:[#allocation5 + $0xbd8] sm:$0xff]
    %v486 = vld [vmem:[#allocation5 + $0xbe0] sm:$0xff]
    %v487 = vld [vmem:[#allocation5 + $0xbe8] sm:$0xff]
    %v488 = vld [vmem:[#allocation5 + $0xbf0] sm:$0xff]
    %v489 = vld [vmem:[#allocation5 + $0xbf8] sm:$0xff]
    %v490 = vld [vmem:[#allocation5 + $0xc00] sm:$0xff]
    %v491 = vld [vmem:[#allocation5 + $0xc08] sm:$0xff]
    %v492 = vld [vmem:[#allocation5 + $0xc10] sm:$0xff]
    %v493 = vld [vmem:[#allocation5 + $0xc18] sm:$0xff]
    %v494 = vld [vmem:[#allocation5 + $0xc20] sm:$0xff]
    %v495 = vld [vmem:[#allocation5 + $0xc28] sm:$0xff]
    %v496 = vld [vmem:[#allocation5 + $0xc30] sm:$0xff]
    %v497 = vld [vmem:[#allocation5 + $0xc38] sm:$0xff]
    %v498 = vld [vmem:[#allocation5 + $0xc40] sm:$0xff]
    %v499 = vld [vmem:[#allocation5 + $0xc48] sm:$0xff]
    %v500 = vld [vmem:[#allocation5 + $0xc50] sm:$0xff]
    %v501 = vld [vmem:[#allocation5 + $0xc58] sm:$0xff]
    %v502 = vld [vmem:[#allocation5 + $0xc60] sm:$0xff]
    %v503 = vld [vmem:[#allocation5 + $0xc68] sm:$0xff]
    %v504 = vld [vmem:[#allocation5 + $0xc70] sm:$0xff]
    %v505 = vld [vmem:[#allocation5 + $0xc78] sm:$0xff]
    %v506 = vld [vmem:[#allocation5 + $0xc80] sm:$0xff]
    %v507 = vld [vmem:[#allocation5 + $0xc88] sm:$0xff]
    %v508 = vld [vmem:[#allocation5 + $0xc90] sm:$0xff]
    %v509 = vld [vmem:[#allocation5 + $0xc98] sm:$0xff]
    %v510 = vld [vmem:[#allocation5 + $0xca0] sm:$0xff]
    %v511 = vld [vmem:[#allocation5 + $0xca8] sm:$0xff]
    %v512 = vld [vmem:[#allocation5 + $0xcb0] sm:$0xff]
    %v513 = vld [vmem:[#allocation5 + $0xcb8] sm:$0xff]
    %v514 = vld [vmem:[#allocation5 + $0xcc0] sm:$0xff]
    %v515 = vld [vmem:[#allocation5 + $0xcc8] sm:$0xff]
    %v516 = vld [vmem:[#allocation5 + $0xcd0] sm:$0xff]
    %v517 = vld [vmem:[#allocation5 + $0xcd8] sm:$0xff]
    %v518 = vld [vmem:[#allocation5 + $0xce0] sm:$0xff]
    %v519 = vld [vmem:[#allocation5 + $0xce8] sm:$0xff]
    %v520 = vld [vmem:[#allocation5 + $0xcf0] sm:$0xff]
    %v521 = vld [vmem:[#allocation5 + $0xcf8] sm:$0xff]
    %v522 = vld [vmem:[#allocation5 + $0xd00] sm:$0xff]
    %v523 = vld [vmem:[#allocation5 + $0xd08] sm:$0xff]
    %v524 = vld [vmem:[#allocation5 + $0xd10] sm:$0xff]
    %v525 = vld [vmem:[#allocation5 + $0xd18] sm:$0xff]
    %v526 = vld [vmem:[#allocation5 + $0xd20] sm:$0xff]
    %v527 = vld [vmem:[#allocation5 + $0xd28] sm:$0xff]
    %v528 = vld [vmem:[#allocation5 + $0xd30] sm:$0xff]
    %v529 = vld [vmem:[#allocation5 + $0xd38] sm:$0xff]
    %v530 = vld [vmem:[#allocation5 + $0xd40] sm:$0xff]
    %v531 = vld [vmem:[#allocation5 + $0xd48] sm:$0xff]
    %v532 = vld [vmem:[#allocation5 + $0xd50] sm:$0xff]
    %v533 = vld [vmem:[#allocation5 + $0xd58] sm:$0xff]
    %v534 = vld [vmem:[#allocation5 + $0xd60] sm:$0xff]
    %v535 = vld [vmem:[#allocation5 + $0xd68] sm:$0xff]
    %v536 = vld [vmem:[#allocation5 + $0xd70] sm:$0xff]
    %v537 = vld [vmem:[#allocation5 + $0xd78] sm:$0xff]
    %v538 = vld [vmem:[#allocation5 + $0xd80] sm:$0xff]
    %v539 = vld [vmem:[#allocation5 + $0xd88] sm:$0xff]
    %v540 = vld [vmem:[#allocation5 + $0xd90] sm:$0xff]
    %v541 = vld [vmem:[#allocation5 + $0xd98] sm:$0xff]
    %v542 = vld [vmem:[#allocation5 + $0xda0] sm:$0xff]
    %v543 = vld [vmem:[#allocation5 + $0xda8] sm:$0xff]
    %v544 = vld [vmem:[#allocation5 + $0xdb0] sm:$0xff]
    %v545 = vld [vmem:[#allocation5 + $0xdb8] sm:$0xff]
    %v546 = vld [vmem:[#allocation5 + $0xdc0] sm:$0xff]
    %v547 = vld [vmem:[#allocation5 + $0xdc8] sm:$0xff]
    %v548 = vld [vmem:[#allocation5 + $0xdd0] sm:$0xff]
    %v549 = vld [vmem:[#allocation5 + $0xdd8] sm:$0xff]
    %v550 = vld [vmem:[#allocation5 + $0xde0] sm:$0xff]
    %v551 = vld [vmem:[#allocation5 + $0xde8] sm:$0xff]
    %v552 = vld [vmem:[#allocation5 + $0xdf0] sm:$0xff]
    %v553 = vld [vmem:[#allocation5 + $0xdf8] sm:$0xff]
    %v554 = vld [vmem:[#allocation5 + $0xe00] sm:$0xff]
    %v555 = vld [vmem:[#allocation5 + $0xe08] sm:$0xff]
    %v556 = vld [vmem:[#allocation5 + $0xe10] sm:$0xff]
    %v557 = vld [vmem:[#allocation5 + $0xe18] sm:$0xff]
    %v558 = vld [vmem:[#allocation5 + $0xe20] sm:$0xff]
    %v559 = vld [vmem:[#allocation5 + $0xe28] sm:$0xff]
    %v560 = vld [vmem:[#allocation5 + $0xe30] sm:$0xff]
    %v561 = vld [vmem:[#allocation5 + $0xe38] sm:$0xff]
    %v562 = vld [vmem:[#allocation5 + $0xe40] sm:$0xff]
    %v563 = vld [vmem:[#allocation5 + $0xe48] sm:$0xff]
    %v564 = vld [vmem:[#allocation5 + $0xe50] sm:$0xff]
    %v565 = vld [vmem:[#allocation5 + $0xe58] sm:$0xff]
    %v566 = vld [vmem:[#allocation5 + $0xe60] sm:$0xff]
    %v567 = vld [vmem:[#allocation5 + $0xe68] sm:$0xff]
    %v568 = vld [vmem:[#allocation5 + $0xe70] sm:$0xff]
    %v569 = vld [vmem:[#allocation5 + $0xe78] sm:$0xff]
    %v570 = vld [vmem:[#allocation5 + $0xe80] sm:$0xff]
    %v571 = vld [vmem:[#allocation5 + $0xe88] sm:$0xff]
    %v572 = vld [vmem:[#allocation5 + $0xe90] sm:$0xff]
    %v573 = vld [vmem:[#allocation5 + $0xe98] sm:$0xff]
    %v574 = vld [vmem:[#allocation5 + $0xea0] sm:$0xff]
    %v575 = vld [vmem:[#allocation5 + $0xea8] sm:$0xff]
    %v576 = vld [vmem:[#allocation5 + $0xeb0] sm:$0xff]
    %v577 = vld [vmem:[#allocation5 + $0xeb8] sm:$0xff]
    %v578 = vld [vmem:[#allocation5 + $0xec0] sm:$0xff]
    %v579 = vld [vmem:[#allocation5 + $0xec8] sm:$0xff]
    %v580 = vld [vmem:[#allocation5 + $0xed0] sm:$0xff]
    %v581 = vld [vmem:[#allocation5 + $0xed8] sm:$0xff]
    %v582 = vld [vmem:[#allocation5 + $0xee0] sm:$0xff]
    %v583 = vld [vmem:[#allocation5 + $0xee8] sm:$0xff]
    %v584 = vld [vmem:[#allocation5 + $0xef0] sm:$0xff]
    %v585 = vld [vmem:[#allocation5 + $0xef8] sm:$0xff]
    %v586 = vld [vmem:[#allocation5 + $0xf00] sm:$0xff]
    %v587 = vld [vmem:[#allocation5 + $0xf08] sm:$0xff]
    %v588 = vld [vmem:[#allocation5 + $0xf10] sm:$0xff]
    %v589 = vld [vmem:[#allocation5 + $0xf18] sm:$0xff]
    %v590 = vld [vmem:[#allocation5 + $0xf20] sm:$0xff]
    %v591 = vld [vmem:[#allocation5 + $0xf28] sm:$0xff]
    %v592 = vld [vmem:[#allocation5 + $0xf30] sm:$0xff]
    %v593 = vld [vmem:[#allocation5 + $0xf38] sm:$0xff]
    %v594 = vld [vmem:[#allocation5 + $0xf40] sm:$0xff]
    %v595 = vld [vmem:[#allocation5 + $0xf48] sm:$0xff]
    %v596 = vld [vmem:[#allocation5 + $0xf50] sm:$0xff]
    %v597 = vld [vmem:[#allocation5 + $0xf58] sm:$0xff]
    %v598 = vld [vmem:[#allocation5 + $0xf60] sm:$0xff]
    %v599 = vld [vmem:[#allocation5 + $0xf68] sm:$0xff]
    %v600 = vld [vmem:[#allocation5 + $0xf70] sm:$0xff]
    %v601 = vld [vmem:[#allocation5 + $0xf78] sm:$0xff]
    %v602 = vld [vmem:[#allocation5 + $0xf80] sm:$0xff]
    %v603 = vld [vmem:[#allocation5 + $0xf88] sm:$0xff]
    %v604 = vld [vmem:[#allocation5 + $0xf90] sm:$0xff]
    %v605 = vld [vmem:[#allocation5 + $0xf98] sm:$0xff]
    %v606 = vld [vmem:[#allocation5 + $0xfa0] sm:$0xff]
    %v607 = vld [vmem:[#allocation5 + $0xfa8] sm:$0xff]
    %v608 = vld [vmem:[#allocation5 + $0xfb0] sm:$0xff]
    %v609 = vld [vmem:[#allocation5 + $0xfb8] sm:$0xff]
    %v610 = vld [vmem:[#allocation5 + $0xfc0] sm:$0xff]
    %v611 = vld [vmem:[#allocation5 + $0xfc8] sm:$0xff]
    %v612 = vld [vmem:[#allocation5 + $0xfd0] sm:$0xff]
    %v613 = vld [vmem:[#allocation5 + $0xfd8] sm:$0xff]
    %v614 = vld [vmem:[#allocation5 + $0xfe0] sm:$0xff]
    %v615 = vld [vmem:[#allocation5 + $0xfe8] sm:$0xff]
    %v616 = vld [vmem:[#allocation5 + $0xff0] sm:$0xff]
    %v617 = vld [vmem:[#allocation5 + $0xff8] sm:$0xff]
    %v618 = vld [vmem:[#allocation5 + $0x1000] sm:$0xff]
    %v619 = vld [vmem:[#allocation5 + $0x1008] sm:$0xff]
    %v620 = vld [vmem:[#allocation5 + $0x1010] sm:$0xff]
    %v621 = vld [vmem:[#allocation5 + $0x1018] sm:$0xff]
    %v622 = vld [vmem:[#allocation5 + $0x1020] sm:$0xff]
    %v623 = vld [vmem:[#allocation5 + $0x1028] sm:$0xff]
    %v624 = vld [vmem:[#allocation5 + $0x1030] sm:$0xff]
    %v625 = vld [vmem:[#allocation5 + $0x1038] sm:$0xff]
    %v626 = vld [vmem:[#allocation5 + $0x1040] sm:$0xff]
    %v627 = vld [vmem:[#allocation5 + $0x1048] sm:$0xff]
    %v628 = vld [vmem:[#allocation5 + $0x1050] sm:$0xff]
    %v629 = vld [vmem:[#allocation5 + $0x1058] sm:$0xff]
    %v630 = vld [vmem:[#allocation5 + $0x1060] sm:$0xff]
    %v631 = vld [vmem:[#allocation5 + $0x1068] sm:$0xff]
    %v632 = vld [vmem:[#allocation5 + $0x1070] sm:$0xff]
    %v633 = vld [vmem:[#allocation5 + $0x1078] sm:$0xff]
    %v634 = vld [vmem:[#allocation5 + $0x1080] sm:$0xff]
    %v635 = vld [vmem:[#allocation5 + $0x1088] sm:$0xff]
    %v636 = vld [vmem:[#allocation5 + $0x1090] sm:$0xff]
    %v637 = vld [vmem:[#allocation5 + $0x1098] sm:$0xff]
    %v638 = vld [vmem:[#allocation5 + $0x10a0] sm:$0xff]
    %v639 = vld [vmem:[#allocation5 + $0x10a8] sm:$0xff]
    %v640 = vld [vmem:[#allocation5 + $0x10b0] sm:$0xff]
    %v641 = vld [vmem:[#allocation5 + $0x10b8] sm:$0xff]
    %v642 = vld [vmem:[#allocation5 + $0x10c0] sm:$0xff]
    %v643 = vld [vmem:[#allocation5 + $0x10c8] sm:$0xff]
    %v644 = vld [vmem:[#allocation5 + $0x10d0] sm:$0xff]
    %v645 = vld [vmem:[#allocation5 + $0x10d8] sm:$0xff]
    %v646 = vld [vmem:[#allocation5 + $0x10e0] sm:$0xff]
    %v647 = vld [vmem:[#allocation5 + $0x10e8] sm:$0xff]
    %v648 = vld [vmem:[#allocation5 + $0x10f0] sm:$0xff]
    %v649 = vld [vmem:[#allocation5 + $0x10f8] sm:$0xff]
    %v650 = vld [vmem:[#allocation5 + $0x1100] sm:$0xff]
    %v651 = vld [vmem:[#allocation5 + $0x1108] sm:$0xff]
    %v652 = vld [vmem:[#allocation5 + $0x1110] sm:$0xff]
    %v653 = vld [vmem:[#allocation5 + $0x1118] sm:$0xff]
    %v654 = vld [vmem:[#allocation5 + $0x1120] sm:$0xff]
    %v655 = vld [vmem:[#allocation5 + $0x1128] sm:$0xff]
    %v656 = vld [vmem:[#allocation5 + $0x1130] sm:$0xff]
    %v657 = vld [vmem:[#allocation5 + $0x1138] sm:$0xff]
    %v658 = vld [vmem:[#allocation5 + $0x1140] sm:$0xff]
    %v659 = vld [vmem:[#allocation5 + $0x1148] sm:$0xff]
    %v660 = vld [vmem:[#allocation5 + $0x1150] sm:$0xff]
    %v661 = vld [vmem:[#allocation5 + $0x1158] sm:$0xff]
    %v662 = vld [vmem:[#allocation5 + $0x1160] sm:$0xff]
    %v663 = vld [vmem:[#allocation5 + $0x1168] sm:$0xff]
    %v664 = vld [vmem:[#allocation5 + $0x1170] sm:$0xff]
    %v665 = vld [vmem:[#allocation5 + $0x1178] sm:$0xff]
    %v666 = vld [vmem:[#allocation5 + $0x1180] sm:$0xff]
    %v667 = vld [vmem:[#allocation5 + $0x1188] sm:$0xff]
    %v668 = vld [vmem:[#allocation5 + $0x1190] sm:$0xff]
    %v669 = vld [vmem:[#allocation5 + $0x1198] sm:$0xff]
    %v670 = vld [vmem:[#allocation5 + $0x11a0] sm:$0xff]
    %v671 = vld [vmem:[#allocation5 + $0x11a8] sm:$0xff]
    %v672 = vld [vmem:[#allocation5 + $0x11b0] sm:$0xff]
    %v673 = vld [vmem:[#allocation5 + $0x11b8] sm:$0xff]
    %v674 = vld [vmem:[#allocation5 + $0x11c0] sm:$0xff]
    %v675 = vld [vmem:[#allocation5 + $0x11c8] sm:$0xff]
    %v676 = vld [vmem:[#allocation5 + $0x11d0] sm:$0xff]
    %v677 = vld [vmem:[#allocation5 + $0x11d8] sm:$0xff]
    %v678 = vld [vmem:[#allocation5 + $0x11e0] sm:$0xff]
    %v679 = vld [vmem:[#allocation5 + $0x11e8] sm:$0xff]
    %v680 = vld [vmem:[#allocation5 + $0x11f0] sm:$0xff]
    %v681 = vld [vmem:[#allocation5 + $0x11f8] sm:$0xff]
    %v682 = vld [vmem:[#allocation5 + $0x1200] sm:$0xff]
    %v683 = vld [vmem:[#allocation5 + $0x1208] sm:$0xff]
    %v684 = vld [vmem:[#allocation5 + $0x1210] sm:$0xff]
    %v685 = vld [vmem:[#allocation5 + $0x1218] sm:$0xff]
    %v686 = vld [vmem:[#allocation5 + $0x1220] sm:$0xff]
    %v687 = vld [vmem:[#allocation5 + $0x1228] sm:$0xff]
    %v688 = vld [vmem:[#allocation5 + $0x1230] sm:$0xff]
    %v689 = vld [vmem:[#allocation5 + $0x1238] sm:$0xff]
    %v690 = vld [vmem:[#allocation5 + $0x1240] sm:$0xff]
    %v691 = vld [vmem:[#allocation5 + $0x1248] sm:$0xff]
    %v692 = vld [vmem:[#allocation5 + $0x1250] sm:$0xff]
    %v693 = vld [vmem:[#allocation5 + $0x1258] sm:$0xff]
    %v694 = vld [vmem:[#allocation5 + $0x1260] sm:$0xff]
    %v695 = vld [vmem:[#allocation5 + $0x1268] sm:$0xff]
    %v696 = vld [vmem:[#allocation5 + $0x1270] sm:$0xff]
    %v697 = vld [vmem:[#allocation5 + $0x1278] sm:$0xff]
    %v698 = vld [vmem:[#allocation5 + $0x1280] sm:$0xff]
    %v699 = vld [vmem:[#allocation5 + $0x1288] sm:$0xff]
    %v700 = vld [vmem:[#allocation5 + $0x1290] sm:$0xff]
    %v701 = vld [vmem:[#allocation5 + $0x1298] sm:$0xff]
    %v702 = vld [vmem:[#allocation5 + $0x12a0] sm:$0xff]
    %v703 = vld [vmem:[#allocation5 + $0x12a8] sm:$0xff]
    %v704 = vld [vmem:[#allocation5 + $0x12b0] sm:$0xff]
    %v705 = vld [vmem:[#allocation5 + $0x12b8] sm:$0xff]
    %v706 = vld [vmem:[#allocation5 + $0x12c0] sm:$0xff]
    %v707 = vld [vmem:[#allocation5 + $0x12c8] sm:$0xff]
    %v708 = vld [vmem:[#allocation5 + $0x12d0] sm:$0xff]
    %v709 = vld [vmem:[#allocation5 + $0x12d8] sm:$0xff]
    %v710 = vld [vmem:[#allocation5 + $0x12e0] sm:$0xff]
    %v711 = vld [vmem:[#allocation5 + $0x12e8] sm:$0xff]
    %v712 = vld [vmem:[#allocation5 + $0x12f0] sm:$0xff]
    %v713 = vld [vmem:[#allocation5 + $0x12f8] sm:$0xff]
    %v714 = vld [vmem:[#allocation7] sm:$0xf]
    %v716 = vlaneseq
    %v717 = vshrl.u32 %v716, 7
    %v718 = vsub.s32 0, %v717
    %v719 = vrot.slane %v714, %v718
    %v720 = vlaneseq
    %v721 = vshrl.u32 %v720, 7
    %v722 = vsub.s32 1, %v721
    %v723 = vrot.slane %v714, %v722
    %v724 = vlaneseq
    %v725 = vshrl.u32 %v724, 7
    %v726 = vsub.s32 2, %v725
    %v727 = vrot.slane %v714, %v726
    %v728 = vlaneseq
    %v729 = vshrl.u32 %v728, 7
    %v730 = vsub.s32 3, %v729
    %v731 = vrot.slane %v714, %v730
    %v756 = vunpack.c.l.b16 %v86
    %v757 = vunpack.c.h.b16 %v86
    %v758 = vunpack.c.l.b16 %v87
    %v759 = vunpack.c.h.b16 %v87
    %v760 = vunpack.c.l.b16 %v88
    %v761 = vunpack.c.h.b16 %v88
    %v762 = vunpack.c.l.b16 %v89
    %v763 = vunpack.c.h.b16 %v89
    %v764 = vunpack.c.l.b16 %v90
    %v765 = vunpack.c.h.b16 %v90
    %v766 = vunpack.c.l.b16 %v91
    %v767 = vunpack.c.h.b16 %v91
    %v768 = vunpack.c.l.b16 %v92
    %v769 = vunpack.c.h.b16 %v92
    %v770 = vunpack.c.l.b16 %v93
    %v771 = vunpack.c.h.b16 %v93
    %v772 = vunpack.c.l.b16 %v94
    %v773 = vunpack.c.h.b16 %v94
    %v774 = vunpack.c.l.b16 %v95
    %v775 = vunpack.c.l.b16 %v96
    %v776 = vunpack.c.h.b16 %v96
    %v777 = vunpack.c.l.b16 %v97
    %v778 = vunpack.c.h.b16 %v97
    %v779 = vunpack.c.l.b16 %v98
    %v780 = vunpack.c.h.b16 %v98
    %v781 = vunpack.c.l.b16 %v99
    %v782 = vunpack.c.h.b16 %v99
    %v783 = vunpack.c.l.b16 %v100
    %v784 = vunpack.c.h.b16 %v100
    %v785 = vunpack.c.l.b16 %v101
    %v786 = vunpack.c.h.b16 %v101
    %v787 = vunpack.c.l.b16 %v102
    %v788 = vunpack.c.h.b16 %v102
    %v789 = vunpack.c.l.b16 %v103
    %v790 = vunpack.c.h.b16 %v103
    %v791 = vunpack.c.l.b16 %v104
    %v792 = vunpack.c.h.b16 %v104
    %v793 = vunpack.c.l.b16 %v105
    %v794 = vpack.c.b16 %v775, %v756
    %v795 = vpack.c.b16 %v776, %v757
    %v796 = vpack.c.b16 %v777, %v758
    %v797 = vpack.c.b16 %v778, %v759
    %v798 = vpack.c.b16 %v779, %v760
    %v799 = vpack.c.b16 %v780, %v761
    %v800 = vpack.c.b16 %v781, %v762
    %v801 = vpack.c.b16 %v782, %v763
    %v802 = vpack.c.b16 %v783, %v764
    %v803 = vpack.c.b16 %v784, %v765
    %v804 = vpack.c.b16 %v785, %v766
    %v805 = vpack.c.b16 %v786, %v767
    %v806 = vpack.c.b16 %v787, %v768
    %v807 = vpack.c.b16 %v788, %v769
    %v808 = vpack.c.b16 %v789, %v770
    %v809 = vpack.c.b16 %v790, %v771
    %v810 = vpack.c.b16 %v791, %v772
    %v811 = vpack.c.b16 %v792, %v773
    %v812 = vpack.c.b16 %v793, %v774
    %v1440 = vunpack.c.l.b16 %v106
    %v1441 = vunpack.c.h.b16 %v106
    %v1442 = vunpack.c.l.b16 %v107
    %v1443 = vunpack.c.h.b16 %v107
    %v1444 = vunpack.c.l.b16 %v108
    %v1445 = vunpack.c.h.b16 %v108
    %v1446 = vunpack.c.l.b16 %v109
    %v1447 = vunpack.c.h.b16 %v109
    %v1448 = vunpack.c.l.b16 %v110
    %v1449 = vunpack.c.h.b16 %v110
    %v1450 = vunpack.c.l.b16 %v111
    %v1451 = vunpack.c.h.b16 %v111
    %v1452 = vunpack.c.l.b16 %v112
    %v1453 = vunpack.c.h.b16 %v112
    %v1454 = vunpack.c.l.b16 %v113
    %v1455 = vunpack.c.h.b16 %v113
    %v1456 = vunpack.c.l.b16 %v114
    %v1457 = vunpack.c.h.b16 %v114
    %v1458 = vunpack.c.l.b16 %v115
    %v1459 = vunpack.c.h.b16 %v115
    %v1460 = vunpack.c.l.b16 %v116
    %v1461 = vunpack.c.h.b16 %v116
    %v1462 = vunpack.c.l.b16 %v117
    %v1463 = vunpack.c.h.b16 %v117
    %v1464 = vunpack.c.l.b16 %v118
    %v1465 = vunpack.c.h.b16 %v118
    %v1466 = vunpack.c.l.b16 %v119
    %v1467 = vunpack.c.h.b16 %v119
    %v1468 = vunpack.c.l.b16 %v120
    %v1469 = vunpack.c.h.b16 %v120
    %v1470 = vunpack.c.l.b16 %v121
    %v1471 = vunpack.c.h.b16 %v121
    %v1472 = vunpack.c.l.b16 %v122
    %v1473 = vunpack.c.h.b16 %v122
    %v1474 = vunpack.c.l.b16 %v123
    %v1475 = vunpack.c.h.b16 %v123
    %v1476 = vunpack.c.l.b16 %v124
    %v1477 = vunpack.c.h.b16 %v124
    %v1478 = vunpack.c.l.b16 %v125
    %v1479 = vunpack.c.h.b16 %v125
    %v1480 = vunpack.c.l.b16 %v126
    %v1481 = vunpack.c.h.b16 %v126
    %v1482 = vunpack.c.l.b16 %v127
    %v1483 = vunpack.c.h.b16 %v127
    %v1484 = vunpack.c.l.b16 %v128
    %v1485 = vunpack.c.h.b16 %v128
    %v1486 = vunpack.c.l.b16 %v129
    %v1487 = vunpack.c.h.b16 %v129
    %v1488 = vunpack.c.l.b16 %v130
    %v1489 = vunpack.c.h.b16 %v130
    %v1490 = vunpack.c.l.b16 %v131
    %v1491 = vunpack.c.h.b16 %v131
    %v1492 = vunpack.c.l.b16 %v132
    %v1493 = vunpack.c.h.b16 %v132
    %v1494 = vunpack.c.l.b16 %v133
    %v1495 = vunpack.c.h.b16 %v133
    %v1496 = vunpack.c.l.b16 %v134
    %v1497 = vunpack.c.h.b16 %v134
    %v1498 = vunpack.c.l.b16 %v135
    %v1499 = vunpack.c.h.b16 %v135
    %v1500 = vunpack.c.l.b16 %v136
    %v1501 = vunpack.c.h.b16 %v136
    %v1502 = vunpack.c.l.b16 %v137
    %v1503 = vunpack.c.h.b16 %v137
    %v1504 = vunpack.c.l.b16 %v138
    %v1505 = vunpack.c.h.b16 %v138
    %v1506 = vunpack.c.l.b16 %v139
    %v1507 = vunpack.c.h.b16 %v139
    %v1508 = vunpack.c.l.b16 %v140
    %v1509 = vunpack.c.h.b16 %v140
    %v1510 = vunpack.c.l.b16 %v141
    %v1511 = vunpack.c.h.b16 %v141
    %v1512 = vunpack.c.l.b16 %v142
    %v1513 = vunpack.c.h.b16 %v142
    %v1514 = vunpack.c.l.b16 %v143
    %v1515 = vunpack.c.h.b16 %v143
    %v1516 = vunpack.c.l.b16 %v144
    %v1517 = vunpack.c.h.b16 %v144
    %v1518 = vunpack.c.l.b16 %v145
    %v1519 = vunpack.c.h.b16 %v145
    %v1520 = vunpack.c.l.b16 %v146
    %v1521 = vunpack.c.h.b16 %v146
    %v1522 = vunpack.c.l.b16 %v147
    %v1523 = vunpack.c.h.b16 %v147
    %v1524 = vunpack.c.l.b16 %v148
    %v1525 = vunpack.c.h.b16 %v148
    %v1526 = vunpack.c.l.b16 %v149
    %v1527 = vunpack.c.h.b16 %v149
    %v1528 = vunpack.c.l.b16 %v150
    %v1529 = vunpack.c.h.b16 %v150
    %v1530 = vunpack.c.l.b16 %v151
    %v1531 = vunpack.c.h.b16 %v151
    %v1532 = vunpack.c.l.b16 %v152
    %v1533 = vunpack.c.h.b16 %v152
    %v1534 = vunpack.c.l.b16 %v153
    %v1535 = vunpack.c.h.b16 %v153
    %v1536 = vunpack.c.l.b16 %v154
    %v1537 = vunpack.c.h.b16 %v154
    %v1538 = vunpack.c.l.b16 %v155
    %v1539 = vunpack.c.h.b16 %v155
    %v1540 = vunpack.c.l.b16 %v156
    %v1541 = vunpack.c.h.b16 %v156
    %v1542 = vunpack.c.l.b16 %v157
    %v1543 = vunpack.c.h.b16 %v157
    %v1544 = vunpack.c.l.b16 %v158
    %v1545 = vunpack.c.h.b16 %v158
    %v1546 = vunpack.c.l.b16 %v159
    %v1547 = vunpack.c.h.b16 %v159
    %v1548 = vunpack.c.l.b16 %v160
    %v1549 = vunpack.c.h.b16 %v160
    %v1550 = vunpack.c.l.b16 %v161
    %v1551 = vunpack.c.h.b16 %v161
    %v1552 = vunpack.c.l.b16 %v162
    %v1553 = vunpack.c.h.b16 %v162
    %v1554 = vunpack.c.l.b16 %v163
    %v1555 = vunpack.c.h.b16 %v163
    %v1556 = vunpack.c.l.b16 %v164
    %v1557 = vunpack.c.h.b16 %v164
    %v1558 = vunpack.c.l.b16 %v165
    %v1559 = vunpack.c.h.b16 %v165
    %v1560 = vunpack.c.l.b16 %v166
    %v1561 = vunpack.c.h.b16 %v166
    %v1562 = vunpack.c.l.b16 %v167
    %v1563 = vunpack.c.h.b16 %v167
    %v1564 = vunpack.c.l.b16 %v168
    %v1565 = vunpack.c.h.b16 %v168
    %v1566 = vunpack.c.l.b16 %v169
    %v1567 = vunpack.c.h.b16 %v169
    %v1568 = vunpack.c.l.b16 %v170
    %v1569 = vunpack.c.h.b16 %v170
    %v1570 = vunpack.c.l.b16 %v171
    %v1571 = vunpack.c.h.b16 %v171
    %v1572 = vunpack.c.l.b16 %v172
    %v1573 = vunpack.c.h.b16 %v172
    %v1574 = vunpack.c.l.b16 %v173
    %v1575 = vunpack.c.h.b16 %v173
    %v1576 = vunpack.c.l.b16 %v174
    %v1577 = vunpack.c.h.b16 %v174
    %v1578 = vunpack.c.l.b16 %v175
    %v1579 = vunpack.c.h.b16 %v175
    %v1580 = vunpack.c.l.b16 %v176
    %v1581 = vunpack.c.h.b16 %v176
    %v1582 = vunpack.c.l.b16 %v177
    %v1583 = vunpack.c.h.b16 %v177
    %v1584 = vunpack.c.l.b16 %v178
    %v1585 = vunpack.c.h.b16 %v178
    %v1586 = vunpack.c.l.b16 %v179
    %v1587 = vunpack.c.h.b16 %v179
    %v1588 = vunpack.c.l.b16 %v180
    %v1589 = vunpack.c.h.b16 %v180
    %v1590 = vunpack.c.l.b16 %v181
    %v1591 = vunpack.c.h.b16 %v181
    %v1592 = vunpack.c.l.b16 %v182
    %v1593 = vunpack.c.h.b16 %v182
    %v1594 = vunpack.c.l.b16 %v183
    %v1595 = vunpack.c.h.b16 %v183
    %v1596 = vunpack.c.l.b16 %v184
    %v1597 = vunpack.c.h.b16 %v184
    %v1598 = vunpack.c.l.b16 %v185
    %v1599 = vunpack.c.h.b16 %v185
    %v1600 = vunpack.c.l.b16 %v186
    %v1601 = vunpack.c.h.b16 %v186
    %v1602 = vunpack.c.l.b16 %v187
    %v1603 = vunpack.c.h.b16 %v187
    %v1604 = vunpack.c.l.b16 %v188
    %v1605 = vunpack.c.h.b16 %v188
    %v1606 = vunpack.c.l.b16 %v189
    %v1607 = vunpack.c.h.b16 %v189
    %v1608 = vunpack.c.l.b16 %v190
    %v1609 = vunpack.c.h.b16 %v190
    %v1610 = vunpack.c.l.b16 %v191
    %v1611 = vunpack.c.h.b16 %v191
    %v1612 = vunpack.c.l.b16 %v192
    %v1613 = vunpack.c.h.b16 %v192
    %v1614 = vunpack.c.l.b16 %v193
    %v1615 = vunpack.c.h.b16 %v193
    %v1616 = vunpack.c.l.b16 %v194
    %v1617 = vunpack.c.h.b16 %v194
    %v1618 = vunpack.c.l.b16 %v195
    %v1619 = vunpack.c.h.b16 %v195
    %v1620 = vunpack.c.l.b16 %v196
    %v1621 = vunpack.c.h.b16 %v196
    %v1622 = vunpack.c.l.b16 %v197
    %v1623 = vunpack.c.h.b16 %v197
    %v1624 = vunpack.c.l.b16 %v198
    %v1625 = vunpack.c.h.b16 %v198
    %v1626 = vunpack.c.l.b16 %v199
    %v1627 = vunpack.c.h.b16 %v199
    %v1628 = vunpack.c.l.b16 %v200
    %v1629 = vunpack.c.h.b16 %v200
    %v1630 = vunpack.c.l.b16 %v201
    %v1631 = vunpack.c.h.b16 %v201
    %v1632 = vunpack.c.l.b16 %v202
    %v1633 = vunpack.c.h.b16 %v202
    %v1634 = vunpack.c.l.b16 %v203
    %v1635 = vunpack.c.h.b16 %v203
    %v1636 = vunpack.c.l.b16 %v204
    %v1637 = vunpack.c.h.b16 %v204
    %v1638 = vunpack.c.l.b16 %v205
    %v1639 = vunpack.c.h.b16 %v205
    %v1640 = vunpack.c.l.b16 %v206
    %v1641 = vunpack.c.h.b16 %v206
    %v1642 = vunpack.c.l.b16 %v207
    %v1643 = vunpack.c.h.b16 %v207
    %v1644 = vunpack.c.l.b16 %v208
    %v1645 = vunpack.c.h.b16 %v208
    %v1646 = vunpack.c.l.b16 %v209
    %v1647 = vunpack.c.h.b16 %v209
    %v1648 = vunpack.c.l.b16 %v210
    %v1649 = vunpack.c.h.b16 %v210
    %v1650 = vunpack.c.l.b16 %v211
    %v1651 = vunpack.c.h.b16 %v211
    %v1652 = vunpack.c.l.b16 %v212
    %v1653 = vunpack.c.h.b16 %v212
    %v1654 = vunpack.c.l.b16 %v213
    %v1655 = vunpack.c.h.b16 %v213
    %v1656 = vunpack.c.l.b16 %v214
    %v1657 = vunpack.c.h.b16 %v214
    %v1658 = vunpack.c.l.b16 %v215
    %v1659 = vunpack.c.h.b16 %v215
    %v1660 = vunpack.c.l.b16 %v216
    %v1661 = vunpack.c.h.b16 %v216
    %v1662 = vunpack.c.l.b16 %v217
    %v1663 = vunpack.c.h.b16 %v217
    %v1664 = vunpack.c.l.b16 %v218
    %v1665 = vunpack.c.h.b16 %v218
    %v1666 = vunpack.c.l.b16 %v219
    %v1667 = vunpack.c.h.b16 %v219
    %v1668 = vunpack.c.l.b16 %v220
    %v1669 = vunpack.c.h.b16 %v220
    %v1670 = vunpack.c.l.b16 %v221
    %v1671 = vunpack.c.h.b16 %v221
    %v1672 = vunpack.c.l.b16 %v222
    %v1673 = vunpack.c.h.b16 %v222
    %v1674 = vunpack.c.l.b16 %v223
    %v1675 = vunpack.c.h.b16 %v223
    %v1676 = vunpack.c.l.b16 %v224
    %v1677 = vunpack.c.h.b16 %v224
    %v1678 = vunpack.c.l.b16 %v225
    %v1679 = vunpack.c.h.b16 %v225
    %v1680 = vunpack.c.l.b16 %v226
    %v1681 = vunpack.c.h.b16 %v226
    %v1682 = vunpack.c.l.b16 %v227
    %v1683 = vunpack.c.h.b16 %v227
    %v1684 = vunpack.c.l.b16 %v228
    %v1685 = vunpack.c.h.b16 %v228
    %v1686 = vunpack.c.l.b16 %v229
    %v1687 = vunpack.c.h.b16 %v229
    %v1688 = vunpack.c.l.b16 %v230
    %v1689 = vunpack.c.h.b16 %v230
    %v1690 = vunpack.c.l.b16 %v231
    %v1691 = vunpack.c.h.b16 %v231
    %v1692 = vunpack.c.l.b16 %v232
    %v1693 = vunpack.c.h.b16 %v232
    %v1694 = vunpack.c.l.b16 %v233
    %v1695 = vunpack.c.h.b16 %v233
    %v1696 = vunpack.c.l.b16 %v234
    %v1697 = vunpack.c.h.b16 %v234
    %v1698 = vunpack.c.l.b16 %v235
    %v1699 = vunpack.c.h.b16 %v235
    %v1700 = vunpack.c.l.b16 %v236
    %v1701 = vunpack.c.h.b16 %v236
    %v1702 = vunpack.c.l.b16 %v237
    %v1703 = vunpack.c.h.b16 %v237
    %v1704 = vunpack.c.l.b16 %v238
    %v1705 = vunpack.c.h.b16 %v238
    %v1706 = vunpack.c.l.b16 %v239
    %v1707 = vunpack.c.h.b16 %v239
    %v1708 = vunpack.c.l.b16 %v240
    %v1709 = vunpack.c.h.b16 %v240
    %v1710 = vunpack.c.l.b16 %v241
    %v1711 = vunpack.c.h.b16 %v241
    %v1712 = vunpack.c.l.b16 %v242
    %v1713 = vunpack.c.h.b16 %v242
    %v1714 = vunpack.c.l.b16 %v243
    %v1715 = vunpack.c.h.b16 %v243
    %v1716 = vunpack.c.l.b16 %v244
    %v1717 = vunpack.c.h.b16 %v244
    %v1718 = vunpack.c.l.b16 %v245
    %v1719 = vunpack.c.h.b16 %v245
    %v1720 = vunpack.c.l.b16 %v246
    %v1721 = vunpack.c.h.b16 %v246
    %v1722 = vunpack.c.l.b16 %v247
    %v1723 = vunpack.c.h.b16 %v247
    %v1724 = vunpack.c.l.b16 %v248
    %v1725 = vunpack.c.h.b16 %v248
    %v1726 = vunpack.c.l.b16 %v249
    %v1727 = vunpack.c.h.b16 %v249
    %v1728 = vunpack.c.l.b16 %v250
    %v1729 = vunpack.c.h.b16 %v250
    %v1730 = vunpack.c.l.b16 %v251
    %v1731 = vunpack.c.h.b16 %v251
    %v1732 = vunpack.c.l.b16 %v252
    %v1733 = vunpack.c.h.b16 %v252
    %v1734 = vunpack.c.l.b16 %v253
    %v1735 = vunpack.c.h.b16 %v253
    %v1736 = vunpack.c.l.b16 %v254
    %v1737 = vunpack.c.h.b16 %v254
    %v1738 = vunpack.c.l.b16 %v255
    %v1739 = vunpack.c.h.b16 %v255
    %v1740 = vunpack.c.l.b16 %v256
    %v1741 = vunpack.c.h.b16 %v256
    %v1742 = vunpack.c.l.b16 %v257
    %v1743 = vunpack.c.h.b16 %v257
    %v1744 = vunpack.c.l.b16 %v258
    %v1745 = vunpack.c.h.b16 %v258
    %v1746 = vunpack.c.l.b16 %v259
    %v1747 = vunpack.c.h.b16 %v259
    %v1748 = vunpack.c.l.b16 %v260
    %v1749 = vunpack.c.h.b16 %v260
    %v1750 = vunpack.c.l.b16 %v261
    %v1751 = vunpack.c.h.b16 %v261
    %v1752 = vunpack.c.l.b16 %v262
    %v1753 = vunpack.c.h.b16 %v262
    %v1754 = vunpack.c.l.b16 %v263
    %v1755 = vunpack.c.h.b16 %v263
    %v1756 = vunpack.c.l.b16 %v264
    %v1757 = vunpack.c.h.b16 %v264
    %v1758 = vunpack.c.l.b16 %v265
    %v1759 = vunpack.c.h.b16 %v265
    %v1760 = vunpack.c.l.b16 %v266
    %v1761 = vunpack.c.h.b16 %v266
    %v1762 = vunpack.c.l.b16 %v267
    %v1763 = vunpack.c.h.b16 %v267
    %v1764 = vunpack.c.l.b16 %v268
    %v1765 = vunpack.c.h.b16 %v268
    %v1766 = vunpack.c.l.b16 %v269
    %v1767 = vunpack.c.h.b16 %v269
    %v1768 = vunpack.c.l.b16 %v270
    %v1769 = vunpack.c.h.b16 %v270
    %v1770 = vunpack.c.l.b16 %v271
    %v1771 = vunpack.c.h.b16 %v271
    %v1772 = vunpack.c.l.b16 %v272
    %v1773 = vunpack.c.h.b16 %v272
    %v1774 = vunpack.c.l.b16 %v273
    %v1775 = vunpack.c.h.b16 %v273
    %v1776 = vunpack.c.l.b16 %v274
    %v1777 = vunpack.c.h.b16 %v274
    %v1778 = vunpack.c.l.b16 %v275
    %v1779 = vunpack.c.h.b16 %v275
    %v1780 = vunpack.c.l.b16 %v276
    %v1781 = vunpack.c.h.b16 %v276
    %v1782 = vunpack.c.l.b16 %v277
    %v1783 = vunpack.c.h.b16 %v277
    %v1784 = vunpack.c.l.b16 %v278
    %v1785 = vunpack.c.h.b16 %v278
    %v1786 = vunpack.c.l.b16 %v279
    %v1787 = vunpack.c.h.b16 %v279
    %v1788 = vunpack.c.l.b16 %v280
    %v1789 = vunpack.c.h.b16 %v280
    %v1790 = vunpack.c.l.b16 %v281
    %v1791 = vunpack.c.h.b16 %v281
    %v1792 = vunpack.c.l.b16 %v282
    %v1793 = vunpack.c.h.b16 %v282
    %v1794 = vunpack.c.l.b16 %v283
    %v1795 = vunpack.c.h.b16 %v283
    %v1796 = vunpack.c.l.b16 %v284
    %v1797 = vunpack.c.h.b16 %v284
    %v1798 = vunpack.c.l.b16 %v285
    %v1799 = vunpack.c.h.b16 %v285
    %v1800 = vunpack.c.l.b16 %v286
    %v1801 = vunpack.c.h.b16 %v286
    %v1802 = vunpack.c.l.b16 %v287
    %v1803 = vunpack.c.h.b16 %v287
    %v1804 = vunpack.c.l.b16 %v288
    %v1805 = vunpack.c.h.b16 %v288
    %v1806 = vunpack.c.l.b16 %v289
    %v1807 = vunpack.c.h.b16 %v289
    %v1808 = vunpack.c.l.b16 %v290
    %v1809 = vunpack.c.h.b16 %v290
    %v1810 = vunpack.c.l.b16 %v291
    %v1811 = vunpack.c.h.b16 %v291
    %v1812 = vunpack.c.l.b16 %v292
    %v1813 = vunpack.c.h.b16 %v292
    %v1814 = vunpack.c.l.b16 %v293
    %v1815 = vunpack.c.h.b16 %v293
    %v1816 = vunpack.c.l.b16 %v294
    %v1817 = vunpack.c.h.b16 %v294
    %v1818 = vunpack.c.l.b16 %v295
    %v1819 = vunpack.c.h.b16 %v295
    %v1820 = vunpack.c.l.b16 %v296
    %v1821 = vunpack.c.h.b16 %v296
    %v1822 = vunpack.c.l.b16 %v297
    %v1823 = vunpack.c.h.b16 %v297
    %v1824 = vunpack.c.l.b16 %v298
    %v1825 = vunpack.c.h.b16 %v298
    %v1826 = vunpack.c.l.b16 %v299
    %v1827 = vunpack.c.h.b16 %v299
    %v1828 = vunpack.c.l.b16 %v300
    %v1829 = vunpack.c.h.b16 %v300
    %v1830 = vunpack.c.l.b16 %v301
    %v1831 = vunpack.c.h.b16 %v301
    %v1832 = vunpack.c.l.b16 %v302
    %v1833 = vunpack.c.h.b16 %v302
    %v1834 = vunpack.c.l.b16 %v303
    %v1835 = vunpack.c.h.b16 %v303
    %v1836 = vunpack.c.l.b16 %v304
    %v1837 = vunpack.c.h.b16 %v304
    %v1838 = vunpack.c.l.b16 %v305
    %v1839 = vunpack.c.h.b16 %v305
    %v1840 = vunpack.c.l.b16 %v306
    %v1841 = vunpack.c.h.b16 %v306
    %v1842 = vunpack.c.l.b16 %v307
    %v1843 = vunpack.c.h.b16 %v307
    %v1844 = vunpack.c.l.b16 %v308
    %v1845 = vunpack.c.h.b16 %v308
    %v1846 = vunpack.c.l.b16 %v309
    %v1847 = vunpack.c.h.b16 %v309
    %v1848 = vunpack.c.l.b16 %v310
    %v1849 = vunpack.c.h.b16 %v310
    %v1850 = vunpack.c.l.b16 %v311
    %v1851 = vunpack.c.h.b16 %v311
    %v1852 = vunpack.c.l.b16 %v312
    %v1853 = vunpack.c.h.b16 %v312
    %v1854 = vunpack.c.l.b16 %v313
    %v1855 = vunpack.c.h.b16 %v313
    %v1856 = vunpack.c.l.b16 %v314
    %v1857 = vunpack.c.h.b16 %v314
    %v1858 = vunpack.c.l.b16 %v315
    %v1859 = vunpack.c.h.b16 %v315
    %v1860 = vunpack.c.l.b16 %v316
    %v1861 = vunpack.c.h.b16 %v316
    %v1862 = vunpack.c.l.b16 %v317
    %v1863 = vunpack.c.h.b16 %v317
    %v1864 = vunpack.c.l.b16 %v318
    %v1865 = vunpack.c.h.b16 %v318
    %v1866 = vunpack.c.l.b16 %v319
    %v1867 = vunpack.c.h.b16 %v319
    %v1868 = vunpack.c.l.b16 %v320
    %v1869 = vunpack.c.h.b16 %v320
    %v1870 = vunpack.c.l.b16 %v321
    %v1871 = vunpack.c.h.b16 %v321
    %v1872 = vunpack.c.l.b16 %v322
    %v1873 = vunpack.c.h.b16 %v322
    %v1874 = vunpack.c.l.b16 %v323
    %v1875 = vunpack.c.h.b16 %v323
    %v1876 = vunpack.c.l.b16 %v324
    %v1877 = vunpack.c.h.b16 %v324
    %v1878 = vunpack.c.l.b16 %v325
    %v1879 = vunpack.c.h.b16 %v325
    %v1880 = vunpack.c.l.b16 %v326
    %v1881 = vunpack.c.h.b16 %v326
    %v1882 = vunpack.c.l.b16 %v327
    %v1883 = vunpack.c.h.b16 %v327
    %v1884 = vunpack.c.l.b16 %v328
    %v1885 = vunpack.c.h.b16 %v328
    %v1886 = vunpack.c.l.b16 %v329
    %v1887 = vunpack.c.h.b16 %v329
    %v1888 = vunpack.c.l.b16 %v330
    %v1889 = vunpack.c.h.b16 %v330
    %v1890 = vunpack.c.l.b16 %v331
    %v1891 = vunpack.c.h.b16 %v331
    %v1892 = vunpack.c.l.b16 %v332
    %v1893 = vunpack.c.h.b16 %v332
    %v1894 = vunpack.c.l.b16 %v333
    %v1895 = vunpack.c.h.b16 %v333
    %v1896 = vunpack.c.l.b16 %v334
    %v1897 = vunpack.c.h.b16 %v334
    %v1898 = vunpack.c.l.b16 %v335
    %v1899 = vunpack.c.h.b16 %v335
    %v1900 = vunpack.c.l.b16 %v336
    %v1901 = vunpack.c.h.b16 %v336
    %v1902 = vunpack.c.l.b16 %v337
    %v1903 = vunpack.c.h.b16 %v337
    %v1904 = vunpack.c.l.b16 %v338
    %v1905 = vunpack.c.h.b16 %v338
    %v1906 = vunpack.c.l.b16 %v339
    %v1907 = vunpack.c.h.b16 %v339
    %v1908 = vunpack.c.l.b16 %v340
    %v1909 = vunpack.c.h.b16 %v340
    %v1910 = vunpack.c.l.b16 %v341
    %v1911 = vunpack.c.h.b16 %v341
    %v1912 = vunpack.c.l.b16 %v342
    %v1913 = vunpack.c.h.b16 %v342
    %v1914 = vunpack.c.l.b16 %v343
    %v1915 = vunpack.c.h.b16 %v343
    %v1916 = vunpack.c.l.b16 %v344
    %v1917 = vunpack.c.h.b16 %v344
    %v1918 = vunpack.c.l.b16 %v345
    %v1919 = vunpack.c.h.b16 %v345
    %v1920 = vunpack.c.l.b16 %v346
    %v1921 = vunpack.c.h.b16 %v346
    %v1922 = vunpack.c.l.b16 %v347
    %v1923 = vunpack.c.h.b16 %v347
    %v1924 = vunpack.c.l.b16 %v348
    %v1925 = vunpack.c.h.b16 %v348
    %v1926 = vunpack.c.l.b16 %v349
    %v1927 = vunpack.c.h.b16 %v349
    %v1928 = vunpack.c.l.b16 %v350
    %v1929 = vunpack.c.h.b16 %v350
    %v1930 = vunpack.c.l.b16 %v351
    %v1931 = vunpack.c.h.b16 %v351
    %v1932 = vunpack.c.l.b16 %v352
    %v1933 = vunpack.c.h.b16 %v352
    %v1934 = vunpack.c.l.b16 %v353
    %v1935 = vunpack.c.h.b16 %v353
    %v1936 = vunpack.c.l.b16 %v354
    %v1937 = vunpack.c.h.b16 %v354
    %v1938 = vunpack.c.l.b16 %v355
    %v1939 = vunpack.c.h.b16 %v355
    %v1940 = vunpack.c.l.b16 %v356
    %v1941 = vunpack.c.h.b16 %v356
    %v1942 = vunpack.c.l.b16 %v357
    %v1943 = vunpack.c.h.b16 %v357
    %v1944 = vunpack.c.l.b16 %v358
    %v1945 = vunpack.c.h.b16 %v358
    %v1946 = vunpack.c.l.b16 %v359
    %v1947 = vunpack.c.h.b16 %v359
    %v1948 = vunpack.c.l.b16 %v360
    %v1949 = vunpack.c.h.b16 %v360
    %v1950 = vunpack.c.l.b16 %v361
    %v1951 = vunpack.c.h.b16 %v361
    %v1952 = vunpack.c.l.b16 %v362
    %v1953 = vunpack.c.h.b16 %v362
    %v1954 = vunpack.c.l.b16 %v363
    %v1955 = vunpack.c.h.b16 %v363
    %v1956 = vunpack.c.l.b16 %v364
    %v1957 = vunpack.c.h.b16 %v364
    %v1958 = vunpack.c.l.b16 %v365
    %v1959 = vunpack.c.h.b16 %v365
    %v1960 = vunpack.c.l.b16 %v366
    %v1961 = vunpack.c.h.b16 %v366
    %v1962 = vunpack.c.l.b16 %v367
    %v1963 = vunpack.c.h.b16 %v367
    %v1964 = vunpack.c.l.b16 %v368
    %v1965 = vunpack.c.h.b16 %v368
    %v1966 = vunpack.c.l.b16 %v369
    %v1967 = vunpack.c.h.b16 %v369
    %v1968 = vunpack.c.l.b16 %v370
    %v1969 = vunpack.c.h.b16 %v370
    %v1970 = vunpack.c.l.b16 %v371
    %v1971 = vunpack.c.h.b16 %v371
    %v1972 = vunpack.c.l.b16 %v372
    %v1973 = vunpack.c.h.b16 %v372
    %v1974 = vunpack.c.l.b16 %v373
    %v1975 = vunpack.c.h.b16 %v373
    %v1976 = vunpack.c.l.b16 %v374
    %v1977 = vunpack.c.h.b16 %v374
    %v1978 = vunpack.c.l.b16 %v375
    %v1979 = vunpack.c.h.b16 %v375
    %v1980 = vunpack.c.l.b16 %v376
    %v1981 = vunpack.c.h.b16 %v376
    %v1982 = vunpack.c.l.b16 %v377
    %v1983 = vunpack.c.h.b16 %v377
    %v1984 = vunpack.c.l.b16 %v378
    %v1985 = vunpack.c.h.b16 %v378
    %v1986 = vunpack.c.l.b16 %v379
    %v1987 = vunpack.c.h.b16 %v379
    %v1988 = vunpack.c.l.b16 %v380
    %v1989 = vunpack.c.h.b16 %v380
    %v1990 = vunpack.c.l.b16 %v381
    %v1991 = vunpack.c.h.b16 %v381
    %v1992 = vunpack.c.l.b16 %v382
    %v1993 = vunpack.c.h.b16 %v382
    %v1994 = vunpack.c.l.b16 %v383
    %v1995 = vunpack.c.h.b16 %v383
    %v1996 = vunpack.c.l.b16 %v384
    %v1997 = vunpack.c.h.b16 %v384
    %v1998 = vunpack.c.l.b16 %v385
    %v1999 = vunpack.c.h.b16 %v385
    %v2000 = vunpack.c.l.b16 %v386
    %v2001 = vunpack.c.h.b16 %v386
    %v2002 = vunpack.c.l.b16 %v387
    %v2003 = vunpack.c.h.b16 %v387
    %v2004 = vunpack.c.l.b16 %v388
    %v2005 = vunpack.c.h.b16 %v388
    %v2006 = vunpack.c.l.b16 %v389
    %v2007 = vunpack.c.h.b16 %v389
    %v2008 = vunpack.c.l.b16 %v390
    %v2009 = vunpack.c.h.b16 %v390
    %v2010 = vunpack.c.l.b16 %v391
    %v2011 = vunpack.c.h.b16 %v391
    %v2012 = vunpack.c.l.b16 %v392
    %v2013 = vunpack.c.h.b16 %v392
    %v2014 = vunpack.c.l.b16 %v393
    %v2015 = vunpack.c.h.b16 %v393
    %v2016 = vunpack.c.l.b16 %v394
    %v2017 = vunpack.c.h.b16 %v394
    %v2018 = vunpack.c.l.b16 %v395
    %v2019 = vunpack.c.h.b16 %v395
    %v2020 = vunpack.c.l.b16 %v396
    %v2021 = vunpack.c.h.b16 %v396
    %v2022 = vunpack.c.l.b16 %v397
    %v2023 = vunpack.c.h.b16 %v397
    %v2024 = vunpack.c.l.b16 %v398
    %v2025 = vunpack.c.h.b16 %v398
    %v2026 = vunpack.c.l.b16 %v399
    %v2027 = vunpack.c.h.b16 %v399
    %v2028 = vunpack.c.l.b16 %v400
    %v2029 = vunpack.c.h.b16 %v400
    %v2030 = vunpack.c.l.b16 %v401
    %v2031 = vunpack.c.h.b16 %v401
    %v2032 = vunpack.c.l.b16 %v402
    %v2033 = vunpack.c.h.b16 %v402
    %v2034 = vunpack.c.l.b16 %v403
    %v2035 = vunpack.c.h.b16 %v403
    %v2036 = vunpack.c.l.b16 %v404
    %v2037 = vunpack.c.h.b16 %v404
    %v2038 = vunpack.c.l.b16 %v405
    %v2039 = vunpack.c.h.b16 %v405
    %v2040 = vunpack.c.l.b16 %v406
    %v2041 = vunpack.c.h.b16 %v406
    %v2042 = vunpack.c.l.b16 %v407
    %v2043 = vunpack.c.h.b16 %v407
    %v2044 = vunpack.c.l.b16 %v408
    %v2045 = vunpack.c.h.b16 %v408
    %v2046 = vunpack.c.l.b16 %v409
    %v2047 = vunpack.c.h.b16 %v409
    %v2048 = vunpack.c.l.b16 %v410
    %v2049 = vunpack.c.h.b16 %v410
    %v2050 = vunpack.c.l.b16 %v411
    %v2051 = vunpack.c.h.b16 %v411
    %v2052 = vunpack.c.l.b16 %v412
    %v2053 = vunpack.c.h.b16 %v412
    %v2054 = vunpack.c.l.b16 %v413
    %v2055 = vunpack.c.h.b16 %v413
    %v2056 = vunpack.c.l.b16 %v414
    %v2057 = vunpack.c.h.b16 %v414
    %v2058 = vunpack.c.l.b16 %v415
    %v2059 = vunpack.c.h.b16 %v415
    %v2060 = vunpack.c.l.b16 %v416
    %v2061 = vunpack.c.h.b16 %v416
    %v2062 = vunpack.c.l.b16 %v417
    %v2063 = vunpack.c.h.b16 %v417
    %v2064 = vunpack.c.l.b16 %v418
    %v2065 = vunpack.c.h.b16 %v418
    %v2066 = vunpack.c.l.b16 %v419
    %v2067 = vunpack.c.h.b16 %v419
    %v2068 = vunpack.c.l.b16 %v420
    %v2069 = vunpack.c.h.b16 %v420
    %v2070 = vunpack.c.l.b16 %v421
    %v2071 = vunpack.c.h.b16 %v421
    %v2072 = vunpack.c.l.b16 %v422
    %v2073 = vunpack.c.h.b16 %v422
    %v2074 = vunpack.c.l.b16 %v423
    %v2075 = vunpack.c.h.b16 %v423
    %v2076 = vunpack.c.l.b16 %v424
    %v2077 = vunpack.c.h.b16 %v424
    %v2078 = vunpack.c.l.b16 %v425
    %v2079 = vunpack.c.h.b16 %v425
    %v2080 = vunpack.c.l.b16 %v426
    %v2081 = vunpack.c.h.b16 %v426
    %v2082 = vunpack.c.l.b16 %v427
    %v2083 = vunpack.c.h.b16 %v427
    %v2084 = vunpack.c.l.b16 %v428
    %v2085 = vunpack.c.h.b16 %v428
    %v2086 = vunpack.c.l.b16 %v429
    %v2087 = vunpack.c.h.b16 %v429
    %v2088 = vunpack.c.l.b16 %v430
    %v2089 = vunpack.c.h.b16 %v430
    %v2090 = vunpack.c.l.b16 %v431
    %v2091 = vunpack.c.h.b16 %v431
    %v2092 = vunpack.c.l.b16 %v432
    %v2093 = vunpack.c.h.b16 %v432
    %v2094 = vunpack.c.l.b16 %v433
    %v2095 = vunpack.c.h.b16 %v433
    %v2096 = vunpack.c.l.b16 %v434
    %v2097 = vunpack.c.h.b16 %v434
    %v2098 = vunpack.c.l.b16 %v435
    %v2099 = vunpack.c.h.b16 %v435
    %v2100 = vunpack.c.l.b16 %v436
    %v2101 = vunpack.c.h.b16 %v436
    %v2102 = vunpack.c.l.b16 %v437
    %v2103 = vunpack.c.h.b16 %v437
    %v2104 = vunpack.c.l.b16 %v438
    %v2105 = vunpack.c.h.b16 %v438
    %v2106 = vunpack.c.l.b16 %v439
    %v2107 = vunpack.c.h.b16 %v439
    %v2108 = vunpack.c.l.b16 %v440
    %v2109 = vunpack.c.h.b16 %v440
    %v2110 = vunpack.c.l.b16 %v441
    %v2111 = vunpack.c.h.b16 %v441
    %v2112 = vunpack.c.l.b16 %v442
    %v2113 = vunpack.c.h.b16 %v442
    %v2114 = vunpack.c.l.b16 %v443
    %v2115 = vunpack.c.h.b16 %v443
    %v2116 = vunpack.c.l.b16 %v444
    %v2117 = vunpack.c.h.b16 %v444
    %v2118 = vunpack.c.l.b16 %v445
    %v2119 = vunpack.c.h.b16 %v445
    %v2120 = vunpack.c.l.b16 %v446
    %v2121 = vunpack.c.h.b16 %v446
    %v2122 = vunpack.c.l.b16 %v447
    %v2123 = vunpack.c.h.b16 %v447
    %v2124 = vunpack.c.l.b16 %v448
    %v2125 = vunpack.c.h.b16 %v448
    %v2126 = vunpack.c.l.b16 %v449
    %v2127 = vunpack.c.h.b16 %v449
    %v2128 = vunpack.c.l.b16 %v450
    %v2129 = vunpack.c.h.b16 %v450
    %v2130 = vunpack.c.l.b16 %v451
    %v2131 = vunpack.c.h.b16 %v451
    %v2132 = vunpack.c.l.b16 %v452
    %v2133 = vunpack.c.h.b16 %v452
    %v2134 = vunpack.c.l.b16 %v453
    %v2135 = vunpack.c.h.b16 %v453
    %v2136 = vunpack.c.l.b16 %v454
    %v2137 = vunpack.c.h.b16 %v454
    %v2138 = vunpack.c.l.b16 %v455
    %v2139 = vunpack.c.h.b16 %v455
    %v2140 = vunpack.c.l.b16 %v456
    %v2141 = vunpack.c.h.b16 %v456
    %v2142 = vunpack.c.l.b16 %v457
    %v2143 = vunpack.c.h.b16 %v457
    %v2144 = vunpack.c.l.b16 %v458
    %v2145 = vunpack.c.h.b16 %v458
    %v2146 = vunpack.c.l.b16 %v459
    %v2147 = vunpack.c.h.b16 %v459
    %v2148 = vunpack.c.l.b16 %v460
    %v2149 = vunpack.c.h.b16 %v460
    %v2150 = vunpack.c.l.b16 %v461
    %v2151 = vunpack.c.h.b16 %v461
    %v2152 = vunpack.c.l.b16 %v462
    %v2153 = vunpack.c.h.b16 %v462
    %v2154 = vunpack.c.l.b16 %v463
    %v2155 = vunpack.c.h.b16 %v463
    %v2156 = vunpack.c.l.b16 %v464
    %v2157 = vunpack.c.h.b16 %v464
    %v2158 = vunpack.c.l.b16 %v465
    %v2159 = vunpack.c.h.b16 %v465
    %v2160 = vunpack.c.l.b16 %v466
    %v2161 = vunpack.c.h.b16 %v466
    %v2162 = vunpack.c.l.b16 %v467
    %v2163 = vunpack.c.h.b16 %v467
    %v2164 = vunpack.c.l.b16 %v468
    %v2165 = vunpack.c.h.b16 %v468
    %v2166 = vunpack.c.l.b16 %v469
    %v2167 = vunpack.c.h.b16 %v469
    %v2168 = vunpack.c.l.b16 %v470
    %v2169 = vunpack.c.h.b16 %v470
    %v2170 = vunpack.c.l.b16 %v471
    %v2171 = vunpack.c.h.b16 %v471
    %v2172 = vunpack.c.l.b16 %v472
    %v2173 = vunpack.c.h.b16 %v472
    %v2174 = vunpack.c.l.b16 %v473
    %v2175 = vunpack.c.h.b16 %v473
    %v2176 = vunpack.c.l.b16 %v474
    %v2177 = vunpack.c.h.b16 %v474
    %v2178 = vunpack.c.l.b16 %v475
    %v2179 = vunpack.c.h.b16 %v475
    %v2180 = vunpack.c.l.b16 %v476
    %v2181 = vunpack.c.h.b16 %v476
    %v2182 = vunpack.c.l.b16 %v477
    %v2183 = vunpack.c.h.b16 %v477
    %v2184 = vunpack.c.l.b16 %v478
    %v2185 = vunpack.c.h.b16 %v478
    %v2186 = vunpack.c.l.b16 %v479
    %v2187 = vunpack.c.h.b16 %v479
    %v2188 = vunpack.c.l.b16 %v480
    %v2189 = vunpack.c.h.b16 %v480
    %v2190 = vunpack.c.l.b16 %v481
    %v2191 = vunpack.c.h.b16 %v481
    %v2192 = vunpack.c.l.b16 %v482
    %v2193 = vunpack.c.h.b16 %v482
    %v2194 = vunpack.c.l.b16 %v483
    %v2195 = vunpack.c.h.b16 %v483
    %v2196 = vunpack.c.l.b16 %v484
    %v2197 = vunpack.c.h.b16 %v484
    %v2198 = vunpack.c.l.b16 %v485
    %v2199 = vunpack.c.h.b16 %v485
    %v2200 = vunpack.c.l.b16 %v486
    %v2201 = vunpack.c.h.b16 %v486
    %v2202 = vunpack.c.l.b16 %v487
    %v2203 = vunpack.c.h.b16 %v487
    %v2204 = vunpack.c.l.b16 %v488
    %v2205 = vunpack.c.h.b16 %v488
    %v2206 = vunpack.c.l.b16 %v489
    %v2207 = vunpack.c.h.b16 %v489
    %v2208 = vunpack.c.l.b16 %v490
    %v2209 = vunpack.c.h.b16 %v490
    %v2210 = vunpack.c.l.b16 %v491
    %v2211 = vunpack.c.h.b16 %v491
    %v2212 = vunpack.c.l.b16 %v492
    %v2213 = vunpack.c.h.b16 %v492
    %v2214 = vunpack.c.l.b16 %v493
    %v2215 = vunpack.c.h.b16 %v493
    %v2216 = vunpack.c.l.b16 %v494
    %v2217 = vunpack.c.h.b16 %v494
    %v2218 = vunpack.c.l.b16 %v495
    %v2219 = vunpack.c.h.b16 %v495
    %v2220 = vunpack.c.l.b16 %v496
    %v2221 = vunpack.c.h.b16 %v496
    %v2222 = vunpack.c.l.b16 %v497
    %v2223 = vunpack.c.h.b16 %v497
    %v2224 = vunpack.c.l.b16 %v498
    %v2225 = vunpack.c.h.b16 %v498
    %v2226 = vunpack.c.l.b16 %v499
    %v2227 = vunpack.c.h.b16 %v499
    %v2228 = vunpack.c.l.b16 %v500
    %v2229 = vunpack.c.h.b16 %v500
    %v2230 = vunpack.c.l.b16 %v501
    %v2231 = vunpack.c.h.b16 %v501
    %v2232 = vunpack.c.l.b16 %v502
    %v2233 = vunpack.c.h.b16 %v502
    %v2234 = vunpack.c.l.b16 %v503
    %v2235 = vunpack.c.h.b16 %v503
    %v2236 = vunpack.c.l.b16 %v504
    %v2237 = vunpack.c.h.b16 %v504
    %v2238 = vunpack.c.l.b16 %v505
    %v2239 = vunpack.c.h.b16 %v505
    %v2240 = vunpack.c.l.b16 %v506
    %v2241 = vunpack.c.h.b16 %v506
    %v2242 = vunpack.c.l.b16 %v507
    %v2243 = vunpack.c.h.b16 %v507
    %v2244 = vunpack.c.l.b16 %v508
    %v2245 = vunpack.c.h.b16 %v508
    %v2246 = vunpack.c.l.b16 %v509
    %v2247 = vunpack.c.h.b16 %v509
    %v2248 = vunpack.c.l.b16 %v510
    %v2249 = vunpack.c.h.b16 %v510
    %v2250 = vunpack.c.l.b16 %v511
    %v2251 = vunpack.c.h.b16 %v511
    %v2252 = vunpack.c.l.b16 %v512
    %v2253 = vunpack.c.h.b16 %v512
    %v2254 = vunpack.c.l.b16 %v513
    %v2255 = vunpack.c.h.b16 %v513
    %v2256 = vunpack.c.l.b16 %v514
    %v2257 = vunpack.c.h.b16 %v514
    %v2258 = vunpack.c.l.b16 %v515
    %v2259 = vunpack.c.h.b16 %v515
    %v2260 = vunpack.c.l.b16 %v516
    %v2261 = vunpack.c.h.b16 %v516
    %v2262 = vunpack.c.l.b16 %v517
    %v2263 = vunpack.c.h.b16 %v517
    %v2264 = vunpack.c.l.b16 %v518
    %v2265 = vunpack.c.h.b16 %v518
    %v2266 = vunpack.c.l.b16 %v519
    %v2267 = vunpack.c.h.b16 %v519
    %v2268 = vunpack.c.l.b16 %v520
    %v2269 = vunpack.c.h.b16 %v520
    %v2270 = vunpack.c.l.b16 %v521
    %v2271 = vunpack.c.h.b16 %v521
    %v2272 = vunpack.c.l.b16 %v522
    %v2273 = vunpack.c.h.b16 %v522
    %v2274 = vunpack.c.l.b16 %v523
    %v2275 = vunpack.c.h.b16 %v523
    %v2276 = vunpack.c.l.b16 %v524
    %v2277 = vunpack.c.h.b16 %v524
    %v2278 = vunpack.c.l.b16 %v525
    %v2279 = vunpack.c.h.b16 %v525
    %v2280 = vunpack.c.l.b16 %v526
    %v2281 = vunpack.c.h.b16 %v526
    %v2282 = vunpack.c.l.b16 %v527
    %v2283 = vunpack.c.h.b16 %v527
    %v2284 = vunpack.c.l.b16 %v528
    %v2285 = vunpack.c.h.b16 %v528
    %v2286 = vunpack.c.l.b16 %v529
    %v2287 = vunpack.c.h.b16 %v529
    %v2288 = vunpack.c.l.b16 %v530
    %v2289 = vunpack.c.h.b16 %v530
    %v2290 = vunpack.c.l.b16 %v531
    %v2291 = vunpack.c.h.b16 %v531
    %v2292 = vunpack.c.l.b16 %v532
    %v2293 = vunpack.c.h.b16 %v532
    %v2294 = vunpack.c.l.b16 %v533
    %v2295 = vunpack.c.h.b16 %v533
    %v2296 = vunpack.c.l.b16 %v534
    %v2297 = vunpack.c.h.b16 %v534
    %v2298 = vunpack.c.l.b16 %v535
    %v2299 = vunpack.c.h.b16 %v535
    %v2300 = vunpack.c.l.b16 %v536
    %v2301 = vunpack.c.h.b16 %v536
    %v2302 = vunpack.c.l.b16 %v537
    %v2303 = vunpack.c.h.b16 %v537
    %v2304 = vunpack.c.l.b16 %v538
    %v2305 = vunpack.c.h.b16 %v538
    %v2306 = vunpack.c.l.b16 %v539
    %v2307 = vunpack.c.h.b16 %v539
    %v2308 = vunpack.c.l.b16 %v540
    %v2309 = vunpack.c.h.b16 %v540
    %v2310 = vunpack.c.l.b16 %v541
    %v2311 = vunpack.c.h.b16 %v541
    %v2312 = vunpack.c.l.b16 %v542
    %v2313 = vunpack.c.h.b16 %v542
    %v2314 = vunpack.c.l.b16 %v543
    %v2315 = vunpack.c.h.b16 %v543
    %v2316 = vunpack.c.l.b16 %v544
    %v2317 = vunpack.c.h.b16 %v544
    %v2318 = vunpack.c.l.b16 %v545
    %v2319 = vunpack.c.h.b16 %v545
    %v2320 = vunpack.c.l.b16 %v546
    %v2321 = vunpack.c.h.b16 %v546
    %v2322 = vunpack.c.l.b16 %v547
    %v2323 = vunpack.c.h.b16 %v547
    %v2324 = vunpack.c.l.b16 %v548
    %v2325 = vunpack.c.h.b16 %v548
    %v2326 = vunpack.c.l.b16 %v549
    %v2327 = vunpack.c.h.b16 %v549
    %v2328 = vunpack.c.l.b16 %v550
    %v2329 = vunpack.c.h.b16 %v550
    %v2330 = vunpack.c.l.b16 %v551
    %v2331 = vunpack.c.h.b16 %v551
    %v2332 = vunpack.c.l.b16 %v552
    %v2333 = vunpack.c.h.b16 %v552
    %v2334 = vunpack.c.l.b16 %v553
    %v2335 = vunpack.c.h.b16 %v553
    %v2336 = vunpack.c.l.b16 %v554
    %v2337 = vunpack.c.h.b16 %v554
    %v2338 = vunpack.c.l.b16 %v555
    %v2339 = vunpack.c.h.b16 %v555
    %v2340 = vunpack.c.l.b16 %v556
    %v2341 = vunpack.c.h.b16 %v556
    %v2342 = vunpack.c.l.b16 %v557
    %v2343 = vunpack.c.h.b16 %v557
    %v2344 = vunpack.c.l.b16 %v558
    %v2345 = vunpack.c.h.b16 %v558
    %v2346 = vunpack.c.l.b16 %v559
    %v2347 = vunpack.c.h.b16 %v559
    %v2348 = vunpack.c.l.b16 %v560
    %v2349 = vunpack.c.h.b16 %v560
    %v2350 = vunpack.c.l.b16 %v561
    %v2351 = vunpack.c.h.b16 %v561
    %v2352 = vunpack.c.l.b16 %v562
    %v2353 = vunpack.c.h.b16 %v562
    %v2354 = vunpack.c.l.b16 %v563
    %v2355 = vunpack.c.h.b16 %v563
    %v2356 = vunpack.c.l.b16 %v564
    %v2357 = vunpack.c.h.b16 %v564
    %v2358 = vunpack.c.l.b16 %v565
    %v2359 = vunpack.c.h.b16 %v565
    %v2360 = vunpack.c.l.b16 %v566
    %v2361 = vunpack.c.h.b16 %v566
    %v2362 = vunpack.c.l.b16 %v567
    %v2363 = vunpack.c.h.b16 %v567
    %v2364 = vunpack.c.l.b16 %v568
    %v2365 = vunpack.c.h.b16 %v568
    %v2366 = vunpack.c.l.b16 %v569
    %v2367 = vunpack.c.h.b16 %v569
    %v2368 = vunpack.c.l.b16 %v570
    %v2369 = vunpack.c.h.b16 %v570
    %v2370 = vunpack.c.l.b16 %v571
    %v2371 = vunpack.c.h.b16 %v571
    %v2372 = vunpack.c.l.b16 %v572
    %v2373 = vunpack.c.h.b16 %v572
    %v2374 = vunpack.c.l.b16 %v573
    %v2375 = vunpack.c.h.b16 %v573
    %v2376 = vunpack.c.l.b16 %v574
    %v2377 = vunpack.c.h.b16 %v574
    %v2378 = vunpack.c.l.b16 %v575
    %v2379 = vunpack.c.h.b16 %v575
    %v2380 = vunpack.c.l.b16 %v576
    %v2381 = vunpack.c.h.b16 %v576
    %v2382 = vunpack.c.l.b16 %v577
    %v2383 = vunpack.c.h.b16 %v577
    %v2384 = vunpack.c.l.b16 %v578
    %v2385 = vunpack.c.h.b16 %v578
    %v2386 = vunpack.c.l.b16 %v579
    %v2387 = vunpack.c.h.b16 %v579
    %v2388 = vunpack.c.l.b16 %v580
    %v2389 = vunpack.c.h.b16 %v580
    %v2390 = vunpack.c.l.b16 %v581
    %v2391 = vunpack.c.h.b16 %v581
    %v2392 = vunpack.c.l.b16 %v582
    %v2393 = vunpack.c.h.b16 %v582
    %v2394 = vunpack.c.l.b16 %v583
    %v2395 = vunpack.c.h.b16 %v583
    %v2396 = vunpack.c.l.b16 %v584
    %v2397 = vunpack.c.h.b16 %v584
    %v2398 = vunpack.c.l.b16 %v585
    %v2399 = vunpack.c.h.b16 %v585
    %v2400 = vunpack.c.l.b16 %v586
    %v2401 = vunpack.c.h.b16 %v586
    %v2402 = vunpack.c.l.b16 %v587
    %v2403 = vunpack.c.h.b16 %v587
    %v2404 = vunpack.c.l.b16 %v588
    %v2405 = vunpack.c.h.b16 %v588
    %v2406 = vunpack.c.l.b16 %v589
    %v2407 = vunpack.c.h.b16 %v589
    %v2408 = vunpack.c.l.b16 %v590
    %v2409 = vunpack.c.h.b16 %v590
    %v2410 = vunpack.c.l.b16 %v591
    %v2411 = vunpack.c.h.b16 %v591
    %v2412 = vunpack.c.l.b16 %v592
    %v2413 = vunpack.c.h.b16 %v592
    %v2414 = vunpack.c.l.b16 %v593
    %v2415 = vunpack.c.h.b16 %v593
    %v2416 = vunpack.c.l.b16 %v594
    %v2417 = vunpack.c.h.b16 %v594
    %v2418 = vunpack.c.l.b16 %v595
    %v2419 = vunpack.c.h.b16 %v595
    %v2420 = vunpack.c.l.b16 %v596
    %v2421 = vunpack.c.h.b16 %v596
    %v2422 = vunpack.c.l.b16 %v597
    %v2423 = vunpack.c.h.b16 %v597
    %v2424 = vunpack.c.l.b16 %v598
    %v2425 = vunpack.c.h.b16 %v598
    %v2426 = vunpack.c.l.b16 %v599
    %v2427 = vunpack.c.h.b16 %v599
    %v2428 = vunpack.c.l.b16 %v600
    %v2429 = vunpack.c.h.b16 %v600
    %v2430 = vunpack.c.l.b16 %v601
    %v2431 = vunpack.c.h.b16 %v601
    %v2432 = vunpack.c.l.b16 %v602
    %v2433 = vunpack.c.h.b16 %v602
    %v2434 = vunpack.c.l.b16 %v603
    %v2435 = vunpack.c.h.b16 %v603
    %v2436 = vunpack.c.l.b16 %v604
    %v2437 = vunpack.c.h.b16 %v604
    %v2438 = vunpack.c.l.b16 %v605
    %v2439 = vunpack.c.h.b16 %v605
    %v2440 = vunpack.c.l.b16 %v606
    %v2441 = vunpack.c.h.b16 %v606
    %v2442 = vunpack.c.l.b16 %v607
    %v2443 = vunpack.c.h.b16 %v607
    %v2444 = vunpack.c.l.b16 %v608
    %v2445 = vunpack.c.h.b16 %v608
    %v2446 = vunpack.c.l.b16 %v609
    %v2447 = vunpack.c.h.b16 %v609
    %v2448 = vunpack.c.l.b16 %v610
    %v2449 = vunpack.c.h.b16 %v610
    %v2450 = vunpack.c.l.b16 %v611
    %v2451 = vunpack.c.h.b16 %v611
    %v2452 = vunpack.c.l.b16 %v612
    %v2453 = vunpack.c.h.b16 %v612
    %v2454 = vunpack.c.l.b16 %v613
    %v2455 = vunpack.c.h.b16 %v613
    %v2456 = vunpack.c.l.b16 %v614
    %v2457 = vunpack.c.h.b16 %v614
    %v2458 = vunpack.c.l.b16 %v615
    %v2459 = vunpack.c.h.b16 %v615
    %v2460 = vunpack.c.l.b16 %v616
    %v2461 = vunpack.c.h.b16 %v616
    %v2462 = vunpack.c.l.b16 %v617
    %v2463 = vunpack.c.h.b16 %v617
    %v2464 = vunpack.c.l.b16 %v618
    %v2465 = vunpack.c.h.b16 %v618
    %v2466 = vunpack.c.l.b16 %v619
    %v2467 = vunpack.c.h.b16 %v619
    %v2468 = vunpack.c.l.b16 %v620
    %v2469 = vunpack.c.h.b16 %v620
    %v2470 = vunpack.c.l.b16 %v621
    %v2471 = vunpack.c.h.b16 %v621
    %v2472 = vunpack.c.l.b16 %v622
    %v2473 = vunpack.c.h.b16 %v622
    %v2474 = vunpack.c.l.b16 %v623
    %v2475 = vunpack.c.h.b16 %v623
    %v2476 = vunpack.c.l.b16 %v624
    %v2477 = vunpack.c.h.b16 %v624
    %v2478 = vunpack.c.l.b16 %v625
    %v2479 = vunpack.c.h.b16 %v625
    %v2480 = vunpack.c.l.b16 %v626
    %v2481 = vunpack.c.h.b16 %v626
    %v2482 = vunpack.c.l.b16 %v627
    %v2483 = vunpack.c.h.b16 %v627
    %v2484 = vunpack.c.l.b16 %v628
    %v2485 = vunpack.c.h.b16 %v628
    %v2486 = vunpack.c.l.b16 %v629
    %v2487 = vunpack.c.h.b16 %v629
    %v2488 = vunpack.c.l.b16 %v630
    %v2489 = vunpack.c.h.b16 %v630
    %v2490 = vunpack.c.l.b16 %v631
    %v2491 = vunpack.c.h.b16 %v631
    %v2492 = vunpack.c.l.b16 %v632
    %v2493 = vunpack.c.h.b16 %v632
    %v2494 = vunpack.c.l.b16 %v633
    %v2495 = vunpack.c.h.b16 %v633
    %v2496 = vunpack.c.l.b16 %v634
    %v2497 = vunpack.c.h.b16 %v634
    %v2498 = vunpack.c.l.b16 %v635
    %v2499 = vunpack.c.h.b16 %v635
    %v2500 = vunpack.c.l.b16 %v636
    %v2501 = vunpack.c.h.b16 %v636
    %v2502 = vunpack.c.l.b16 %v637
    %v2503 = vunpack.c.h.b16 %v637
    %v2504 = vunpack.c.l.b16 %v638
    %v2505 = vunpack.c.h.b16 %v638
    %v2506 = vunpack.c.l.b16 %v639
    %v2507 = vunpack.c.h.b16 %v639
    %v2508 = vunpack.c.l.b16 %v640
    %v2509 = vunpack.c.h.b16 %v640
    %v2510 = vunpack.c.l.b16 %v641
    %v2511 = vunpack.c.h.b16 %v641
    %v2512 = vunpack.c.l.b16 %v642
    %v2513 = vunpack.c.h.b16 %v642
    %v2514 = vunpack.c.l.b16 %v643
    %v2515 = vunpack.c.h.b16 %v643
    %v2516 = vunpack.c.l.b16 %v644
    %v2517 = vunpack.c.h.b16 %v644
    %v2518 = vunpack.c.l.b16 %v645
    %v2519 = vunpack.c.h.b16 %v645
    %v2520 = vunpack.c.l.b16 %v646
    %v2521 = vunpack.c.h.b16 %v646
    %v2522 = vunpack.c.l.b16 %v647
    %v2523 = vunpack.c.h.b16 %v647
    %v2524 = vunpack.c.l.b16 %v648
    %v2525 = vunpack.c.h.b16 %v648
    %v2526 = vunpack.c.l.b16 %v649
    %v2527 = vunpack.c.h.b16 %v649
    %v2528 = vunpack.c.l.b16 %v650
    %v2529 = vunpack.c.h.b16 %v650
    %v2530 = vunpack.c.l.b16 %v651
    %v2531 = vunpack.c.h.b16 %v651
    %v2532 = vunpack.c.l.b16 %v652
    %v2533 = vunpack.c.h.b16 %v652
    %v2534 = vunpack.c.l.b16 %v653
    %v2535 = vunpack.c.h.b16 %v653
    %v2536 = vunpack.c.l.b16 %v654
    %v2537 = vunpack.c.h.b16 %v654
    %v2538 = vunpack.c.l.b16 %v655
    %v2539 = vunpack.c.h.b16 %v655
    %v2540 = vunpack.c.l.b16 %v656
    %v2541 = vunpack.c.h.b16 %v656
    %v2542 = vunpack.c.l.b16 %v657
    %v2543 = vunpack.c.h.b16 %v657
    %v2544 = vunpack.c.l.b16 %v658
    %v2545 = vunpack.c.h.b16 %v658
    %v2546 = vunpack.c.l.b16 %v659
    %v2547 = vunpack.c.h.b16 %v659
    %v2548 = vunpack.c.l.b16 %v660
    %v2549 = vunpack.c.h.b16 %v660
    %v2550 = vunpack.c.l.b16 %v661
    %v2551 = vunpack.c.h.b16 %v661
    %v2552 = vunpack.c.l.b16 %v662
    %v2553 = vunpack.c.h.b16 %v662
    %v2554 = vunpack.c.l.b16 %v663
    %v2555 = vunpack.c.h.b16 %v663
    %v2556 = vunpack.c.l.b16 %v664
    %v2557 = vunpack.c.h.b16 %v664
    %v2558 = vunpack.c.l.b16 %v665
    %v2559 = vunpack.c.h.b16 %v665
    %v2560 = vunpack.c.l.b16 %v666
    %v2561 = vunpack.c.h.b16 %v666
    %v2562 = vunpack.c.l.b16 %v667
    %v2563 = vunpack.c.h.b16 %v667
    %v2564 = vunpack.c.l.b16 %v668
    %v2565 = vunpack.c.h.b16 %v668
    %v2566 = vunpack.c.l.b16 %v669
    %v2567 = vunpack.c.h.b16 %v669
    %v2568 = vunpack.c.l.b16 %v670
    %v2569 = vunpack.c.h.b16 %v670
    %v2570 = vunpack.c.l.b16 %v671
    %v2571 = vunpack.c.h.b16 %v671
    %v2572 = vunpack.c.l.b16 %v672
    %v2573 = vunpack.c.h.b16 %v672
    %v2574 = vunpack.c.l.b16 %v673
    %v2575 = vunpack.c.h.b16 %v673
    %v2576 = vunpack.c.l.b16 %v674
    %v2577 = vunpack.c.h.b16 %v674
    %v2578 = vunpack.c.l.b16 %v675
    %v2579 = vunpack.c.h.b16 %v675
    %v2580 = vunpack.c.l.b16 %v676
    %v2581 = vunpack.c.h.b16 %v676
    %v2582 = vunpack.c.l.b16 %v677
    %v2583 = vunpack.c.h.b16 %v677
    %v2584 = vunpack.c.l.b16 %v678
    %v2585 = vunpack.c.h.b16 %v678
    %v2586 = vunpack.c.l.b16 %v679
    %v2587 = vunpack.c.h.b16 %v679
    %v2588 = vunpack.c.l.b16 %v680
    %v2589 = vunpack.c.h.b16 %v680
    %v2590 = vunpack.c.l.b16 %v681
    %v2591 = vunpack.c.h.b16 %v681
    %v2592 = vunpack.c.l.b16 %v682
    %v2593 = vunpack.c.h.b16 %v682
    %v2594 = vunpack.c.l.b16 %v683
    %v2595 = vunpack.c.h.b16 %v683
    %v2596 = vunpack.c.l.b16 %v684
    %v2597 = vunpack.c.h.b16 %v684
    %v2598 = vunpack.c.l.b16 %v685
    %v2599 = vunpack.c.h.b16 %v685
    %v2600 = vunpack.c.l.b16 %v686
    %v2601 = vunpack.c.h.b16 %v686
    %v2602 = vunpack.c.l.b16 %v687
    %v2603 = vunpack.c.h.b16 %v687
    %v2604 = vunpack.c.l.b16 %v688
    %v2605 = vunpack.c.h.b16 %v688
    %v2606 = vunpack.c.l.b16 %v689
    %v2607 = vunpack.c.h.b16 %v689
    %v2608 = vunpack.c.l.b16 %v690
    %v2609 = vunpack.c.h.b16 %v690
    %v2610 = vunpack.c.l.b16 %v691
    %v2611 = vunpack.c.h.b16 %v691
    %v2612 = vunpack.c.l.b16 %v692
    %v2613 = vunpack.c.h.b16 %v692
    %v2614 = vunpack.c.l.b16 %v693
    %v2615 = vunpack.c.h.b16 %v693
    %v2616 = vunpack.c.l.b16 %v694
    %v2617 = vunpack.c.h.b16 %v694
    %v2618 = vunpack.c.l.b16 %v695
    %v2619 = vunpack.c.h.b16 %v695
    %v2620 = vunpack.c.l.b16 %v696
    %v2621 = vunpack.c.h.b16 %v696
    %v2622 = vunpack.c.l.b16 %v697
    %v2623 = vunpack.c.h.b16 %v697
    %v2624 = vunpack.c.l.b16 %v698
    %v2625 = vunpack.c.h.b16 %v698
    %v2626 = vunpack.c.l.b16 %v699
    %v2627 = vunpack.c.h.b16 %v699
    %v2628 = vunpack.c.l.b16 %v700
    %v2629 = vunpack.c.h.b16 %v700
    %v2630 = vunpack.c.l.b16 %v701
    %v2631 = vunpack.c.h.b16 %v701
    %v2632 = vunpack.c.l.b16 %v702
    %v2633 = vunpack.c.h.b16 %v702
    %v2634 = vunpack.c.l.b16 %v703
    %v2635 = vunpack.c.h.b16 %v703
    %v2636 = vunpack.c.l.b16 %v704
    %v2637 = vunpack.c.h.b16 %v704
    %v2638 = vunpack.c.l.b16 %v705
    %v2639 = vunpack.c.h.b16 %v705
    %v2640 = vunpack.c.l.b16 %v706
    %v2641 = vunpack.c.h.b16 %v706
    %v2642 = vunpack.c.l.b16 %v707
    %v2643 = vunpack.c.h.b16 %v707
    %v2644 = vunpack.c.l.b16 %v708
    %v2645 = vunpack.c.h.b16 %v708
    %v2646 = vunpack.c.l.b16 %v709
    %v2647 = vunpack.c.h.b16 %v709
    %v2648 = vunpack.c.l.b16 %v710
    %v2649 = vunpack.c.h.b16 %v710
    %v2650 = vunpack.c.l.b16 %v711
    %v2651 = vunpack.c.h.b16 %v711
    %v2652 = vunpack.c.l.b16 %v712
    %v2653 = vunpack.c.h.b16 %v712
    %v2654 = vunpack.c.l.b16 %v713
    %v2655 = vunpack.c.h.b16 %v713
    %v2656 = vpack.c.b16 %v1444, %v1440
    %v2657 = vpack.c.b16 %v1445, %v1441
    %v2658 = vpack.c.b16 %v1446, %v1442
    %v2659 = vpack.c.b16 %v1447, %v1443
    %v2660 = vpack.c.b16 %v1452, %v1448
    %v2661 = vpack.c.b16 %v1453, %v1449
    %v2662 = vpack.c.b16 %v1454, %v1450
    %v2663 = vpack.c.b16 %v1455, %v1451
    %v2664 = vpack.c.b16 %v1460, %v1456
    %v2665 = vpack.c.b16 %v1461, %v1457
    %v2666 = vpack.c.b16 %v1462, %v1458
    %v2667 = vpack.c.b16 %v1463, %v1459
    %v2668 = vpack.c.b16 %v1468, %v1464
    %v2669 = vpack.c.b16 %v1469, %v1465
    %v2670 = vpack.c.b16 %v1470, %v1466
    %v2671 = vpack.c.b16 %v1471, %v1467
    %v2672 = vpack.c.b16 %v1476, %v1472
    %v2673 = vpack.c.b16 %v1477, %v1473
    %v2674 = vpack.c.b16 %v1478, %v1474
    %v2675 = vpack.c.b16 %v1479, %v1475
    %v2676 = vpack.c.b16 %v1484, %v1480
    %v2677 = vpack.c.b16 %v1485, %v1481
    %v2678 = vpack.c.b16 %v1486, %v1482
    %v2679 = vpack.c.b16 %v1487, %v1483
    %v2680 = vpack.c.b16 %v1492, %v1488
    %v2681 = vpack.c.b16 %v1493, %v1489
    %v2682 = vpack.c.b16 %v1494, %v1490
    %v2683 = vpack.c.b16 %v1495, %v1491
    %v2684 = vpack.c.b16 %v1500, %v1496
    %v2685 = vpack.c.b16 %v1501, %v1497
    %v2686 = vpack.c.b16 %v1502, %v1498
    %v2687 = vpack.c.b16 %v1503, %v1499
    %v2688 = vpack.c.b16 %v1508, %v1504
    %v2689 = vpack.c.b16 %v1509, %v1505
    %v2690 = vpack.c.b16 %v1510, %v1506
    %v2691 = vpack.c.b16 %v1511, %v1507
    %v2692 = vpack.c.b16 %v1516, %v1512
    %v2693 = vpack.c.b16 %v1517, %v1513
    %v2694 = vpack.c.b16 %v1518, %v1514
    %v2695 = vpack.c.b16 %v1519, %v1515
    %v2696 = vpack.c.b16 %v1524, %v1520
    %v2697 = vpack.c.b16 %v1525, %v1521
    %v2698 = vpack.c.b16 %v1526, %v1522
    %v2699 = vpack.c.b16 %v1527, %v1523
    %v2700 = vpack.c.b16 %v1532, %v1528
    %v2701 = vpack.c.b16 %v1533, %v1529
    %v2702 = vpack.c.b16 %v1534, %v1530
    %v2703 = vpack.c.b16 %v1535, %v1531
    %v2704 = vpack.c.b16 %v1540, %v1536
    %v2705 = vpack.c.b16 %v1541, %v1537
    %v2706 = vpack.c.b16 %v1542, %v1538
    %v2707 = vpack.c.b16 %v1543, %v1539
    %v2708 = vpack.c.b16 %v1548, %v1544
    %v2709 = vpack.c.b16 %v1549, %v1545
    %v2710 = vpack.c.b16 %v1550, %v1546
    %v2711 = vpack.c.b16 %v1551, %v1547
    %v2712 = vpack.c.b16 %v1556, %v1552
    %v2713 = vpack.c.b16 %v1557, %v1553
    %v2714 = vpack.c.b16 %v1558, %v1554
    %v2715 = vpack.c.b16 %v1559, %v1555
    %v2716 = vpack.c.b16 %v1564, %v1560
    %v2717 = vpack.c.b16 %v1565, %v1561
    %v2718 = vpack.c.b16 %v1566, %v1562
    %v2719 = vpack.c.b16 %v1567, %v1563
    %v2720 = vpack.c.b16 %v1572, %v1568
    %v2721 = vpack.c.b16 %v1573, %v1569
    %v2722 = vpack.c.b16 %v1574, %v1570
    %v2723 = vpack.c.b16 %v1575, %v1571
    %v2724 = vpack.c.b16 %v1580, %v1576
    %v2725 = vpack.c.b16 %v1581, %v1577
    %v2726 = vpack.c.b16 %v1582, %v1578
    %v2727 = vpack.c.b16 %v1583, %v1579
    %v2728 = vpack.c.b16 %v1588, %v1584
    %v2729 = vpack.c.b16 %v1589, %v1585
    %v2730 = vpack.c.b16 %v1590, %v1586
    %v2731 = vpack.c.b16 %v1591, %v1587
    %v2732 = vpack.c.b16 %v1596, %v1592
    %v2733 = vpack.c.b16 %v1597, %v1593
    %v2734 = vpack.c.b16 %v1598, %v1594
    %v2735 = vpack.c.b16 %v1599, %v1595
    %v2736 = vpack.c.b16 %v1604, %v1600
    %v2737 = vpack.c.b16 %v1605, %v1601
    %v2738 = vpack.c.b16 %v1606, %v1602
    %v2739 = vpack.c.b16 %v1607, %v1603
    %v2740 = vpack.c.b16 %v1612, %v1608
    %v2741 = vpack.c.b16 %v1613, %v1609
    %v2742 = vpack.c.b16 %v1614, %v1610
    %v2743 = vpack.c.b16 %v1615, %v1611
    %v2744 = vpack.c.b16 %v1620, %v1616
    %v2745 = vpack.c.b16 %v1621, %v1617
    %v2746 = vpack.c.b16 %v1622, %v1618
    %v2747 = vpack.c.b16 %v1623, %v1619
    %v2748 = vpack.c.b16 %v1628, %v1624
    %v2749 = vpack.c.b16 %v1629, %v1625
    %v2750 = vpack.c.b16 %v1630, %v1626
    %v2751 = vpack.c.b16 %v1631, %v1627
    %v2752 = vpack.c.b16 %v1636, %v1632
    %v2753 = vpack.c.b16 %v1637, %v1633
    %v2754 = vpack.c.b16 %v1638, %v1634
    %v2755 = vpack.c.b16 %v1639, %v1635
    %v2756 = vpack.c.b16 %v1644, %v1640
    %v2757 = vpack.c.b16 %v1645, %v1641
    %v2758 = vpack.c.b16 %v1646, %v1642
    %v2759 = vpack.c.b16 %v1647, %v1643
    %v2760 = vpack.c.b16 %v1652, %v1648
    %v2761 = vpack.c.b16 %v1653, %v1649
    %v2762 = vpack.c.b16 %v1654, %v1650
    %v2763 = vpack.c.b16 %v1655, %v1651
    %v2764 = vpack.c.b16 %v1660, %v1656
    %v2765 = vpack.c.b16 %v1661, %v1657
    %v2766 = vpack.c.b16 %v1662, %v1658
    %v2767 = vpack.c.b16 %v1663, %v1659
    %v2768 = vpack.c.b16 %v1668, %v1664
    %v2769 = vpack.c.b16 %v1669, %v1665
    %v2770 = vpack.c.b16 %v1670, %v1666
    %v2771 = vpack.c.b16 %v1671, %v1667
    %v2772 = vpack.c.b16 %v1676, %v1672
    %v2773 = vpack.c.b16 %v1677, %v1673
    %v2774 = vpack.c.b16 %v1678, %v1674
    %v2775 = vpack.c.b16 %v1679, %v1675
    %v2776 = vpack.c.b16 %v1684, %v1680
    %v2777 = vpack.c.b16 %v1685, %v1681
    %v2778 = vpack.c.b16 %v1686, %v1682
    %v2779 = vpack.c.b16 %v1687, %v1683
    %v2780 = vpack.c.b16 %v1692, %v1688
    %v2781 = vpack.c.b16 %v1693, %v1689
    %v2782 = vpack.c.b16 %v1694, %v1690
    %v2783 = vpack.c.b16 %v1695, %v1691
    %v2784 = vpack.c.b16 %v1700, %v1696
    %v2785 = vpack.c.b16 %v1701, %v1697
    %v2786 = vpack.c.b16 %v1702, %v1698
    %v2787 = vpack.c.b16 %v1703, %v1699
    %v2788 = vpack.c.b16 %v1708, %v1704
    %v2789 = vpack.c.b16 %v1709, %v1705
    %v2790 = vpack.c.b16 %v1710, %v1706
    %v2791 = vpack.c.b16 %v1711, %v1707
    %v2792 = vpack.c.b16 %v1716, %v1712
    %v2793 = vpack.c.b16 %v1717, %v1713
    %v2794 = vpack.c.b16 %v1718, %v1714
    %v2795 = vpack.c.b16 %v1719, %v1715
    %v2796 = vpack.c.b16 %v1724, %v1720
    %v2797 = vpack.c.b16 %v1725, %v1721
    %v2798 = vpack.c.b16 %v1726, %v1722
    %v2799 = vpack.c.b16 %v1727, %v1723
    %v2800 = vpack.c.b16 %v1732, %v1728
    %v2801 = vpack.c.b16 %v1733, %v1729
    %v2802 = vpack.c.b16 %v1734, %v1730
    %v2803 = vpack.c.b16 %v1735, %v1731
    %v2804 = vpack.c.b16 %v1740, %v1736
    %v2805 = vpack.c.b16 %v1741, %v1737
    %v2806 = vpack.c.b16 %v1742, %v1738
    %v2807 = vpack.c.b16 %v1743, %v1739
    %v2808 = vpack.c.b16 %v1748, %v1744
    %v2809 = vpack.c.b16 %v1749, %v1745
    %v2810 = vpack.c.b16 %v1750, %v1746
    %v2811 = vpack.c.b16 %v1751, %v1747
    %v2812 = vpack.c.b16 %v1756, %v1752
    %v2813 = vpack.c.b16 %v1757, %v1753
    %v2814 = vpack.c.b16 %v1758, %v1754
    %v2815 = vpack.c.b16 %v1759, %v1755
    %v2816 = vpack.c.b16 %v1764, %v1760
    %v2817 = vpack.c.b16 %v1765, %v1761
    %v2818 = vpack.c.b16 %v1766, %v1762
    %v2819 = vpack.c.b16 %v1767, %v1763
    %v2820 = vpack.c.b16 %v1772, %v1768
    %v2821 = vpack.c.b16 %v1773, %v1769
    %v2822 = vpack.c.b16 %v1774, %v1770
    %v2823 = vpack.c.b16 %v1775, %v1771
    %v2824 = vpack.c.b16 %v1780, %v1776
    %v2825 = vpack.c.b16 %v1781, %v1777
    %v2826 = vpack.c.b16 %v1782, %v1778
    %v2827 = vpack.c.b16 %v1783, %v1779
    %v2828 = vpack.c.b16 %v1788, %v1784
    %v2829 = vpack.c.b16 %v1789, %v1785
    %v2830 = vpack.c.b16 %v1790, %v1786
    %v2831 = vpack.c.b16 %v1791, %v1787
    %v2832 = vpack.c.b16 %v1796, %v1792
    %v2833 = vpack.c.b16 %v1797, %v1793
    %v2834 = vpack.c.b16 %v1798, %v1794
    %v2835 = vpack.c.b16 %v1799, %v1795
    %v2836 = vpack.c.b16 %v1804, %v1800
    %v2837 = vpack.c.b16 %v1805, %v1801
    %v2838 = vpack.c.b16 %v1806, %v1802
    %v2839 = vpack.c.b16 %v1807, %v1803
    %v2840 = vpack.c.b16 %v1812, %v1808
    %v2841 = vpack.c.b16 %v1813, %v1809
    %v2842 = vpack.c.b16 %v1814, %v1810
    %v2843 = vpack.c.b16 %v1815, %v1811
    %v2844 = vpack.c.b16 %v1820, %v1816
    %v2845 = vpack.c.b16 %v1821, %v1817
    %v2846 = vpack.c.b16 %v1822, %v1818
    %v2847 = vpack.c.b16 %v1823, %v1819
    %v2848 = vpack.c.b16 %v1828, %v1824
    %v2849 = vpack.c.b16 %v1829, %v1825
    %v2850 = vpack.c.b16 %v1830, %v1826
    %v2851 = vpack.c.b16 %v1831, %v1827
    %v2852 = vpack.c.b16 %v1836, %v1832
    %v2853 = vpack.c.b16 %v1837, %v1833
    %v2854 = vpack.c.b16 %v1838, %v1834
    %v2855 = vpack.c.b16 %v1839, %v1835
    %v2856 = vpack.c.b16 %v1844, %v1840
    %v2857 = vpack.c.b16 %v1845, %v1841
    %v2858 = vpack.c.b16 %v1846, %v1842
    %v2859 = vpack.c.b16 %v1847, %v1843
    %v2860 = vpack.c.b16 %v1852, %v1848
    %v2861 = vpack.c.b16 %v1853, %v1849
    %v2862 = vpack.c.b16 %v1854, %v1850
    %v2863 = vpack.c.b16 %v1855, %v1851
    %v2864 = vpack.c.b16 %v1860, %v1856
    %v2865 = vpack.c.b16 %v1861, %v1857
    %v2866 = vpack.c.b16 %v1862, %v1858
    %v2867 = vpack.c.b16 %v1863, %v1859
    %v2868 = vpack.c.b16 %v1868, %v1864
    %v2869 = vpack.c.b16 %v1869, %v1865
    %v2870 = vpack.c.b16 %v1870, %v1866
    %v2871 = vpack.c.b16 %v1871, %v1867
    %v2872 = vpack.c.b16 %v1876, %v1872
    %v2873 = vpack.c.b16 %v1877, %v1873
    %v2874 = vpack.c.b16 %v1878, %v1874
    %v2875 = vpack.c.b16 %v1879, %v1875
    %v2876 = vpack.c.b16 %v1884, %v1880
    %v2877 = vpack.c.b16 %v1885, %v1881
    %v2878 = vpack.c.b16 %v1886, %v1882
    %v2879 = vpack.c.b16 %v1887, %v1883
    %v2880 = vpack.c.b16 %v1892, %v1888
    %v2881 = vpack.c.b16 %v1893, %v1889
    %v2882 = vpack.c.b16 %v1894, %v1890
    %v2883 = vpack.c.b16 %v1895, %v1891
    %v2884 = vpack.c.b16 %v1900, %v1896
    %v2885 = vpack.c.b16 %v1901, %v1897
    %v2886 = vpack.c.b16 %v1902, %v1898
    %v2887 = vpack.c.b16 %v1903, %v1899
    %v2888 = vpack.c.b16 %v1908, %v1904
    %v2889 = vpack.c.b16 %v1909, %v1905
    %v2890 = vpack.c.b16 %v1910, %v1906
    %v2891 = vpack.c.b16 %v1911, %v1907
    %v2892 = vpack.c.b16 %v1916, %v1912
    %v2893 = vpack.c.b16 %v1917, %v1913
    %v2894 = vpack.c.b16 %v1918, %v1914
    %v2895 = vpack.c.b16 %v1919, %v1915
    %v2896 = vpack.c.b16 %v1924, %v1920
    %v2897 = vpack.c.b16 %v1925, %v1921
    %v2898 = vpack.c.b16 %v1926, %v1922
    %v2899 = vpack.c.b16 %v1927, %v1923
    %v2900 = vpack.c.b16 %v1932, %v1928
    %v2901 = vpack.c.b16 %v1933, %v1929
    %v2902 = vpack.c.b16 %v1934, %v1930
    %v2903 = vpack.c.b16 %v1935, %v1931
    %v2904 = vpack.c.b16 %v1940, %v1936
    %v2905 = vpack.c.b16 %v1941, %v1937
    %v2906 = vpack.c.b16 %v1942, %v1938
    %v2907 = vpack.c.b16 %v1943, %v1939
    %v2908 = vpack.c.b16 %v1948, %v1944
    %v2909 = vpack.c.b16 %v1949, %v1945
    %v2910 = vpack.c.b16 %v1950, %v1946
    %v2911 = vpack.c.b16 %v1951, %v1947
    %v2912 = vpack.c.b16 %v1956, %v1952
    %v2913 = vpack.c.b16 %v1957, %v1953
    %v2914 = vpack.c.b16 %v1958, %v1954
    %v2915 = vpack.c.b16 %v1959, %v1955
    %v2916 = vpack.c.b16 %v1964, %v1960
    %v2917 = vpack.c.b16 %v1965, %v1961
    %v2918 = vpack.c.b16 %v1966, %v1962
    %v2919 = vpack.c.b16 %v1967, %v1963
    %v2920 = vpack.c.b16 %v1972, %v1968
    %v2921 = vpack.c.b16 %v1973, %v1969
    %v2922 = vpack.c.b16 %v1974, %v1970
    %v2923 = vpack.c.b16 %v1975, %v1971
    %v2924 = vpack.c.b16 %v1980, %v1976
    %v2925 = vpack.c.b16 %v1981, %v1977
    %v2926 = vpack.c.b16 %v1982, %v1978
    %v2927 = vpack.c.b16 %v1983, %v1979
    %v2928 = vpack.c.b16 %v1988, %v1984
    %v2929 = vpack.c.b16 %v1989, %v1985
    %v2930 = vpack.c.b16 %v1990, %v1986
    %v2931 = vpack.c.b16 %v1991, %v1987
    %v2932 = vpack.c.b16 %v1996, %v1992
    %v2933 = vpack.c.b16 %v1997, %v1993
    %v2934 = vpack.c.b16 %v1998, %v1994
    %v2935 = vpack.c.b16 %v1999, %v1995
    %v2936 = vpack.c.b16 %v2004, %v2000
    %v2937 = vpack.c.b16 %v2005, %v2001
    %v2938 = vpack.c.b16 %v2006, %v2002
    %v2939 = vpack.c.b16 %v2007, %v2003
    %v2940 = vpack.c.b16 %v2012, %v2008
    %v2941 = vpack.c.b16 %v2013, %v2009
    %v2942 = vpack.c.b16 %v2014, %v2010
    %v2943 = vpack.c.b16 %v2015, %v2011
    %v2944 = vpack.c.b16 %v2020, %v2016
    %v2945 = vpack.c.b16 %v2021, %v2017
    %v2946 = vpack.c.b16 %v2022, %v2018
    %v2947 = vpack.c.b16 %v2023, %v2019
    %v2948 = vpack.c.b16 %v2028, %v2024
    %v2949 = vpack.c.b16 %v2029, %v2025
    %v2950 = vpack.c.b16 %v2030, %v2026
    %v2951 = vpack.c.b16 %v2031, %v2027
    %v2952 = vpack.c.b16 %v2036, %v2032
    %v2953 = vpack.c.b16 %v2037, %v2033
    %v2954 = vpack.c.b16 %v2038, %v2034
    %v2955 = vpack.c.b16 %v2039, %v2035
    %v2956 = vpack.c.b16 %v2044, %v2040
    %v2957 = vpack.c.b16 %v2045, %v2041
    %v2958 = vpack.c.b16 %v2046, %v2042
    %v2959 = vpack.c.b16 %v2047, %v2043
    %v2960 = vpack.c.b16 %v2052, %v2048
    %v2961 = vpack.c.b16 %v2053, %v2049
    %v2962 = vpack.c.b16 %v2054, %v2050
    %v2963 = vpack.c.b16 %v2055, %v2051
    %v2964 = vpack.c.b16 %v2060, %v2056
    %v2965 = vpack.c.b16 %v2061, %v2057
    %v2966 = vpack.c.b16 %v2062, %v2058
    %v2967 = vpack.c.b16 %v2063, %v2059
    %v2968 = vpack.c.b16 %v2068, %v2064
    %v2969 = vpack.c.b16 %v2069, %v2065
    %v2970 = vpack.c.b16 %v2070, %v2066
    %v2971 = vpack.c.b16 %v2071, %v2067
    %v2972 = vpack.c.b16 %v2076, %v2072
    %v2973 = vpack.c.b16 %v2077, %v2073
    %v2974 = vpack.c.b16 %v2078, %v2074
    %v2975 = vpack.c.b16 %v2079, %v2075
    %v2976 = vpack.c.b16 %v2084, %v2080
    %v2977 = vpack.c.b16 %v2085, %v2081
    %v2978 = vpack.c.b16 %v2086, %v2082
    %v2979 = vpack.c.b16 %v2087, %v2083
    %v2980 = vpack.c.b16 %v2092, %v2088
    %v2981 = vpack.c.b16 %v2093, %v2089
    %v2982 = vpack.c.b16 %v2094, %v2090
    %v2983 = vpack.c.b16 %v2095, %v2091
    %v2984 = vpack.c.b16 %v2100, %v2096
    %v2985 = vpack.c.b16 %v2101, %v2097
    %v2986 = vpack.c.b16 %v2102, %v2098
    %v2987 = vpack.c.b16 %v2103, %v2099
    %v2988 = vpack.c.b16 %v2108, %v2104
    %v2989 = vpack.c.b16 %v2109, %v2105
    %v2990 = vpack.c.b16 %v2110, %v2106
    %v2991 = vpack.c.b16 %v2111, %v2107
    %v2992 = vpack.c.b16 %v2116, %v2112
    %v2993 = vpack.c.b16 %v2117, %v2113
    %v2994 = vpack.c.b16 %v2118, %v2114
    %v2995 = vpack.c.b16 %v2119, %v2115
    %v2996 = vpack.c.b16 %v2124, %v2120
    %v2997 = vpack.c.b16 %v2125, %v2121
    %v2998 = vpack.c.b16 %v2126, %v2122
    %v2999 = vpack.c.b16 %v2127, %v2123
    %v3000 = vpack.c.b16 %v2132, %v2128
    %v3001 = vpack.c.b16 %v2133, %v2129
    %v3002 = vpack.c.b16 %v2134, %v2130
    %v3003 = vpack.c.b16 %v2135, %v2131
    %v3004 = vpack.c.b16 %v2140, %v2136
    %v3005 = vpack.c.b16 %v2141, %v2137
    %v3006 = vpack.c.b16 %v2142, %v2138
    %v3007 = vpack.c.b16 %v2143, %v2139
    %v3008 = vpack.c.b16 %v2148, %v2144
    %v3009 = vpack.c.b16 %v2149, %v2145
    %v3010 = vpack.c.b16 %v2150, %v2146
    %v3011 = vpack.c.b16 %v2151, %v2147
    %v3012 = vpack.c.b16 %v2156, %v2152
    %v3013 = vpack.c.b16 %v2157, %v2153
    %v3014 = vpack.c.b16 %v2158, %v2154
    %v3015 = vpack.c.b16 %v2159, %v2155
    %v3016 = vpack.c.b16 %v2164, %v2160
    %v3017 = vpack.c.b16 %v2165, %v2161
    %v3018 = vpack.c.b16 %v2166, %v2162
    %v3019 = vpack.c.b16 %v2167, %v2163
    %v3020 = vpack.c.b16 %v2172, %v2168
    %v3021 = vpack.c.b16 %v2173, %v2169
    %v3022 = vpack.c.b16 %v2174, %v2170
    %v3023 = vpack.c.b16 %v2175, %v2171
    %v3024 = vpack.c.b16 %v2180, %v2176
    %v3025 = vpack.c.b16 %v2181, %v2177
    %v3026 = vpack.c.b16 %v2182, %v2178
    %v3027 = vpack.c.b16 %v2183, %v2179
    %v3028 = vpack.c.b16 %v2188, %v2184
    %v3029 = vpack.c.b16 %v2189, %v2185
    %v3030 = vpack.c.b16 %v2190, %v2186
    %v3031 = vpack.c.b16 %v2191, %v2187
    %v3032 = vpack.c.b16 %v2196, %v2192
    %v3033 = vpack.c.b16 %v2197, %v2193
    %v3034 = vpack.c.b16 %v2198, %v2194
    %v3035 = vpack.c.b16 %v2199, %v2195
    %v3036 = vpack.c.b16 %v2204, %v2200
    %v3037 = vpack.c.b16 %v2205, %v2201
    %v3038 = vpack.c.b16 %v2206, %v2202
    %v3039 = vpack.c.b16 %v2207, %v2203
    %v3040 = vpack.c.b16 %v2212, %v2208
    %v3041 = vpack.c.b16 %v2213, %v2209
    %v3042 = vpack.c.b16 %v2214, %v2210
    %v3043 = vpack.c.b16 %v2215, %v2211
    %v3044 = vpack.c.b16 %v2220, %v2216
    %v3045 = vpack.c.b16 %v2221, %v2217
    %v3046 = vpack.c.b16 %v2222, %v2218
    %v3047 = vpack.c.b16 %v2223, %v2219
    %v3048 = vpack.c.b16 %v2228, %v2224
    %v3049 = vpack.c.b16 %v2229, %v2225
    %v3050 = vpack.c.b16 %v2230, %v2226
    %v3051 = vpack.c.b16 %v2231, %v2227
    %v3052 = vpack.c.b16 %v2236, %v2232
    %v3053 = vpack.c.b16 %v2237, %v2233
    %v3054 = vpack.c.b16 %v2238, %v2234
    %v3055 = vpack.c.b16 %v2239, %v2235
    %v3056 = vpack.c.b16 %v2244, %v2240
    %v3057 = vpack.c.b16 %v2245, %v2241
    %v3058 = vpack.c.b16 %v2246, %v2242
    %v3059 = vpack.c.b16 %v2247, %v2243
    %v3060 = vpack.c.b16 %v2252, %v2248
    %v3061 = vpack.c.b16 %v2253, %v2249
    %v3062 = vpack.c.b16 %v2254, %v2250
    %v3063 = vpack.c.b16 %v2255, %v2251
    %v3064 = vpack.c.b16 %v2260, %v2256
    %v3065 = vpack.c.b16 %v2261, %v2257
    %v3066 = vpack.c.b16 %v2262, %v2258
    %v3067 = vpack.c.b16 %v2263, %v2259
    %v3068 = vpack.c.b16 %v2268, %v2264
    %v3069 = vpack.c.b16 %v2269, %v2265
    %v3070 = vpack.c.b16 %v2270, %v2266
    %v3071 = vpack.c.b16 %v2271, %v2267
    %v3072 = vpack.c.b16 %v2276, %v2272
    %v3073 = vpack.c.b16 %v2277, %v2273
    %v3074 = vpack.c.b16 %v2278, %v2274
    %v3075 = vpack.c.b16 %v2279, %v2275
    %v3076 = vpack.c.b16 %v2284, %v2280
    %v3077 = vpack.c.b16 %v2285, %v2281
    %v3078 = vpack.c.b16 %v2286, %v2282
    %v3079 = vpack.c.b16 %v2287, %v2283
    %v3080 = vpack.c.b16 %v2292, %v2288
    %v3081 = vpack.c.b16 %v2293, %v2289
    %v3082 = vpack.c.b16 %v2294, %v2290
    %v3083 = vpack.c.b16 %v2295, %v2291
    %v3084 = vpack.c.b16 %v2300, %v2296
    %v3085 = vpack.c.b16 %v2301, %v2297
    %v3086 = vpack.c.b16 %v2302, %v2298
    %v3087 = vpack.c.b16 %v2303, %v2299
    %v3088 = vpack.c.b16 %v2308, %v2304
    %v3089 = vpack.c.b16 %v2309, %v2305
    %v3090 = vpack.c.b16 %v2310, %v2306
    %v3091 = vpack.c.b16 %v2311, %v2307
    %v3092 = vpack.c.b16 %v2316, %v2312
    %v3093 = vpack.c.b16 %v2317, %v2313
    %v3094 = vpack.c.b16 %v2318, %v2314
    %v3095 = vpack.c.b16 %v2319, %v2315
    %v3096 = vpack.c.b16 %v2324, %v2320
    %v3097 = vpack.c.b16 %v2325, %v2321
    %v3098 = vpack.c.b16 %v2326, %v2322
    %v3099 = vpack.c.b16 %v2327, %v2323
    %v3100 = vpack.c.b16 %v2332, %v2328
    %v3101 = vpack.c.b16 %v2333, %v2329
    %v3102 = vpack.c.b16 %v2334, %v2330
    %v3103 = vpack.c.b16 %v2335, %v2331
    %v3104 = vpack.c.b16 %v2340, %v2336
    %v3105 = vpack.c.b16 %v2341, %v2337
    %v3106 = vpack.c.b16 %v2342, %v2338
    %v3107 = vpack.c.b16 %v2343, %v2339
    %v3108 = vpack.c.b16 %v2348, %v2344
    %v3109 = vpack.c.b16 %v2349, %v2345
    %v3110 = vpack.c.b16 %v2350, %v2346
    %v3111 = vpack.c.b16 %v2351, %v2347
    %v3112 = vpack.c.b16 %v2356, %v2352
    %v3113 = vpack.c.b16 %v2357, %v2353
    %v3114 = vpack.c.b16 %v2358, %v2354
    %v3115 = vpack.c.b16 %v2359, %v2355
    %v3116 = vpack.c.b16 %v2364, %v2360
    %v3117 = vpack.c.b16 %v2365, %v2361
    %v3118 = vpack.c.b16 %v2366, %v2362
    %v3119 = vpack.c.b16 %v2367, %v2363
    %v3120 = vpack.c.b16 %v2372, %v2368
    %v3121 = vpack.c.b16 %v2373, %v2369
    %v3122 = vpack.c.b16 %v2374, %v2370
    %v3123 = vpack.c.b16 %v2375, %v2371
    %v3124 = vpack.c.b16 %v2380, %v2376
    %v3125 = vpack.c.b16 %v2381, %v2377
    %v3126 = vpack.c.b16 %v2382, %v2378
    %v3127 = vpack.c.b16 %v2383, %v2379
    %v3128 = vpack.c.b16 %v2388, %v2384
    %v3129 = vpack.c.b16 %v2389, %v2385
    %v3130 = vpack.c.b16 %v2390, %v2386
    %v3131 = vpack.c.b16 %v2391, %v2387
    %v3132 = vpack.c.b16 %v2396, %v2392
    %v3133 = vpack.c.b16 %v2397, %v2393
    %v3134 = vpack.c.b16 %v2398, %v2394
    %v3135 = vpack.c.b16 %v2399, %v2395
    %v3136 = vpack.c.b16 %v2404, %v2400
    %v3137 = vpack.c.b16 %v2405, %v2401
    %v3138 = vpack.c.b16 %v2406, %v2402
    %v3139 = vpack.c.b16 %v2407, %v2403
    %v3140 = vpack.c.b16 %v2412, %v2408
    %v3141 = vpack.c.b16 %v2413, %v2409
    %v3142 = vpack.c.b16 %v2414, %v2410
    %v3143 = vpack.c.b16 %v2415, %v2411
    %v3144 = vpack.c.b16 %v2420, %v2416
    %v3145 = vpack.c.b16 %v2421, %v2417
    %v3146 = vpack.c.b16 %v2422, %v2418
    %v3147 = vpack.c.b16 %v2423, %v2419
    %v3148 = vpack.c.b16 %v2428, %v2424
    %v3149 = vpack.c.b16 %v2429, %v2425
    %v3150 = vpack.c.b16 %v2430, %v2426
    %v3151 = vpack.c.b16 %v2431, %v2427
    %v3152 = vpack.c.b16 %v2436, %v2432
    %v3153 = vpack.c.b16 %v2437, %v2433
    %v3154 = vpack.c.b16 %v2438, %v2434
    %v3155 = vpack.c.b16 %v2439, %v2435
    %v3156 = vpack.c.b16 %v2444, %v2440
    %v3157 = vpack.c.b16 %v2445, %v2441
    %v3158 = vpack.c.b16 %v2446, %v2442
    %v3159 = vpack.c.b16 %v2447, %v2443
    %v3160 = vpack.c.b16 %v2452, %v2448
    %v3161 = vpack.c.b16 %v2453, %v2449
    %v3162 = vpack.c.b16 %v2454, %v2450
    %v3163 = vpack.c.b16 %v2455, %v2451
    %v3164 = vpack.c.b16 %v2460, %v2456
    %v3165 = vpack.c.b16 %v2461, %v2457
    %v3166 = vpack.c.b16 %v2462, %v2458
    %v3167 = vpack.c.b16 %v2463, %v2459
    %v3168 = vpack.c.b16 %v2468, %v2464
    %v3169 = vpack.c.b16 %v2469, %v2465
    %v3170 = vpack.c.b16 %v2470, %v2466
    %v3171 = vpack.c.b16 %v2471, %v2467
    %v3172 = vpack.c.b16 %v2476, %v2472
    %v3173 = vpack.c.b16 %v2477, %v2473
    %v3174 = vpack.c.b16 %v2478, %v2474
    %v3175 = vpack.c.b16 %v2479, %v2475
    %v3176 = vpack.c.b16 %v2484, %v2480
    %v3177 = vpack.c.b16 %v2485, %v2481
    %v3178 = vpack.c.b16 %v2486, %v2482
    %v3179 = vpack.c.b16 %v2487, %v2483
    %v3180 = vpack.c.b16 %v2492, %v2488
    %v3181 = vpack.c.b16 %v2493, %v2489
    %v3182 = vpack.c.b16 %v2494, %v2490
    %v3183 = vpack.c.b16 %v2495, %v2491
    %v3184 = vpack.c.b16 %v2500, %v2496
    %v3185 = vpack.c.b16 %v2501, %v2497
    %v3186 = vpack.c.b16 %v2502, %v2498
    %v3187 = vpack.c.b16 %v2503, %v2499
    %v3188 = vpack.c.b16 %v2508, %v2504
    %v3189 = vpack.c.b16 %v2509, %v2505
    %v3190 = vpack.c.b16 %v2510, %v2506
    %v3191 = vpack.c.b16 %v2511, %v2507
    %v3192 = vpack.c.b16 %v2516, %v2512
    %v3193 = vpack.c.b16 %v2517, %v2513
    %v3194 = vpack.c.b16 %v2518, %v2514
    %v3195 = vpack.c.b16 %v2519, %v2515
    %v3196 = vpack.c.b16 %v2524, %v2520
    %v3197 = vpack.c.b16 %v2525, %v2521
    %v3198 = vpack.c.b16 %v2526, %v2522
    %v3199 = vpack.c.b16 %v2527, %v2523
    %v3200 = vpack.c.b16 %v2532, %v2528
    %v3201 = vpack.c.b16 %v2533, %v2529
    %v3202 = vpack.c.b16 %v2534, %v2530
    %v3203 = vpack.c.b16 %v2535, %v2531
    %v3204 = vpack.c.b16 %v2540, %v2536
    %v3205 = vpack.c.b16 %v2541, %v2537
    %v3206 = vpack.c.b16 %v2542, %v2538
    %v3207 = vpack.c.b16 %v2543, %v2539
    %v3208 = vpack.c.b16 %v2548, %v2544
    %v3209 = vpack.c.b16 %v2549, %v2545
    %v3210 = vpack.c.b16 %v2550, %v2546
    %v3211 = vpack.c.b16 %v2551, %v2547
    %v3212 = vpack.c.b16 %v2556, %v2552
    %v3213 = vpack.c.b16 %v2557, %v2553
    %v3214 = vpack.c.b16 %v2558, %v2554
    %v3215 = vpack.c.b16 %v2559, %v2555
    %v3216 = vpack.c.b16 %v2564, %v2560
    %v3217 = vpack.c.b16 %v2565, %v2561
    %v3218 = vpack.c.b16 %v2566, %v2562
    %v3219 = vpack.c.b16 %v2567, %v2563
    %v3220 = vpack.c.b16 %v2572, %v2568
    %v3221 = vpack.c.b16 %v2573, %v2569
    %v3222 = vpack.c.b16 %v2574, %v2570
    %v3223 = vpack.c.b16 %v2575, %v2571
    %v3224 = vpack.c.b16 %v2580, %v2576
    %v3225 = vpack.c.b16 %v2581, %v2577
    %v3226 = vpack.c.b16 %v2582, %v2578
    %v3227 = vpack.c.b16 %v2583, %v2579
    %v3228 = vpack.c.b16 %v2588, %v2584
    %v3229 = vpack.c.b16 %v2589, %v2585
    %v3230 = vpack.c.b16 %v2590, %v2586
    %v3231 = vpack.c.b16 %v2591, %v2587
    %v3232 = vpack.c.b16 %v2596, %v2592
    %v3233 = vpack.c.b16 %v2597, %v2593
    %v3234 = vpack.c.b16 %v2598, %v2594
    %v3235 = vpack.c.b16 %v2599, %v2595
    %v3236 = vpack.c.b16 %v2604, %v2600
    %v3237 = vpack.c.b16 %v2605, %v2601
    %v3238 = vpack.c.b16 %v2606, %v2602
    %v3239 = vpack.c.b16 %v2607, %v2603
    %v3240 = vpack.c.b16 %v2612, %v2608
    %v3241 = vpack.c.b16 %v2613, %v2609
    %v3242 = vpack.c.b16 %v2614, %v2610
    %v3243 = vpack.c.b16 %v2615, %v2611
    %v3244 = vpack.c.b16 %v2620, %v2616
    %v3245 = vpack.c.b16 %v2621, %v2617
    %v3246 = vpack.c.b16 %v2622, %v2618
    %v3247 = vpack.c.b16 %v2623, %v2619
    %v3248 = vpack.c.b16 %v2628, %v2624
    %v3249 = vpack.c.b16 %v2629, %v2625
    %v3250 = vpack.c.b16 %v2630, %v2626
    %v3251 = vpack.c.b16 %v2631, %v2627
    %v3252 = vpack.c.b16 %v2636, %v2632
    %v3253 = vpack.c.b16 %v2637, %v2633
    %v3254 = vpack.c.b16 %v2638, %v2634
    %v3255 = vpack.c.b16 %v2639, %v2635
    %v3256 = vpack.c.b16 %v2644, %v2640
    %v3257 = vpack.c.b16 %v2645, %v2641
    %v3258 = vpack.c.b16 %v2646, %v2642
    %v3259 = vpack.c.b16 %v2647, %v2643
    %v3260 = vpack.c.b16 %v2652, %v2648
    %v3261 = vpack.c.b16 %v2653, %v2649
    %v3262 = vpack.c.b16 %v2654, %v2650
    %v3263 = vpack.c.b16 %v2655, %v2651
    %3872 = vmatprep.subr.bf16.mxu0 %v2657
    %3873 = vmatpush1.bf16.msra.mxu0 %v2656
    %3874 = vmatprep.subr.bf16.mxu0 %v2661
    %3875 = vmatpush1.bf16.msra.mxu0 %v2660
    %3876 = vmatprep.subr.bf16.mxu0 %v2665
    %3877 = vmatpush1.bf16.msra.mxu0 %v2664
    %3878 = vmatprep.subr.bf16.mxu0 %v2669
    %3879 = vmatpush1.bf16.msra.mxu0 %v2668
    %3880 = vmatprep.subr.bf16.mxu0 %v2673
    %3881 = vmatpush1.bf16.msra.mxu0 %v2672
    %3882 = vmatprep.subr.bf16.mxu0 %v2677
    %3883 = vmatpush1.bf16.msra.mxu0 %v2676
    %3884 = vmatprep.subr.bf16.mxu0 %v2681
    %3885 = vmatpush1.bf16.msra.mxu0 %v2680
    %3886 = vmatprep.subr.bf16.mxu0 %v2685
    %3887 = vmatpush1.bf16.msra.mxu0 %v2684
    %3888 = vmatprep.subr.bf16.mxu0 %v2689
    %3889 = vmatpush1.bf16.msra.mxu0 %v2688
    %3890 = vmatprep.subr.bf16.mxu0 %v2693
    %3891 = vmatpush1.bf16.msra.mxu0 %v2692
    %3892 = vmatprep.subr.bf16.mxu0 %v2697
    %3893 = vmatpush1.bf16.msra.mxu0 %v2696
    %3894 = vmatprep.subr.bf16.mxu0 %v2701
    %3895 = vmatpush1.bf16.msra.mxu0 %v2700
    %3896 = vmatprep.subr.bf16.mxu0 %v2705
    %3897 = vmatpush1.bf16.msra.mxu0 %v2704
    %3898 = vmatprep.subr.bf16.mxu0 %v2709
    %3899 = vmatpush1.bf16.msra.mxu0 %v2708
    %3900 = vmatprep.subr.bf16.mxu0 %v2713
    %3901 = vmatpush1.bf16.msra.mxu0 %v2712
    %3902 = vmatprep.subr.bf16.mxu0 %v2717
    %3903 = vmatpush1.bf16.msra.mxu0 %v2716
    %3904 = vmatprep.mubr.bf16.mxu0 %v795
    %3905 = vmatmul.mubr.bf16.gmra.mrb[0].mxu0 %v794
    %v3906 = vpop.f32.mrb[0].mxu0
    %v3907 = vadd.f32 %v719, %v3906
    %v3908 = vpop.f32.mrb[0].mxu0
    %v3909 = vadd.f32 %v723, %v3908
    %v3910 = vpop.f32.mrb[0].mxu0
    %v3911 = vadd.f32 %v719, %v3910
    %v3912 = vpop.f32.mrb[0].mxu0
    %v3913 = vadd.f32 %v723, %v3912
    %3914 = vdwg.mxu0
    %3915 = vmatprep.subr.bf16.mxu0 %v2721
    %3916 = vmatpush1.bf16.msra.mxu0 %v2720
    %3917 = vmatprep.subr.bf16.mxu0 %v2725
    %3918 = vmatpush1.bf16.msra.mxu0 %v2724
    %3919 = vmatprep.subr.bf16.mxu0 %v2729
    %3920 = vmatpush1.bf16.msra.mxu0 %v2728
    %3921 = vmatprep.subr.bf16.mxu0 %v2733
    %3922 = vmatpush1.bf16.msra.mxu0 %v2732
    %3923 = vmatprep.subr.bf16.mxu0 %v2737
    %3924 = vmatpush1.bf16.msra.mxu0 %v2736
    %3925 = vmatprep.subr.bf16.mxu0 %v2741
    %3926 = vmatpush1.bf16.msra.mxu0 %v2740
    %3927 = vmatprep.subr.bf16.mxu0 %v2745
    %3928 = vmatpush1.bf16.msra.mxu0 %v2744
    %3929 = vmatprep.subr.bf16.mxu0 %v2749
    %3930 = vmatpush1.bf16.msra.mxu0 %v2748
    %3931 = vmatprep.subr.bf16.mxu0 %v2753
    %3932 = vmatpush1.bf16.msra.mxu0 %v2752
    %3933 = vmatprep.subr.bf16.mxu0 %v2757
    %3934 = vmatpush1.bf16.msra.mxu0 %v2756
    %3935 = vmatprep.subr.bf16.mxu0 %v2761
    %3936 = vmatpush1.bf16.msra.mxu0 %v2760
    %3937 = vmatprep.subr.bf16.mxu0 %v2765
    %3938 = vmatpush1.bf16.msra.mxu0 %v2764
    %3939 = vmatprep.subr.bf16.mxu0 %v2769
    %3940 = vmatpush1.bf16.msra.mxu0 %v2768
    %3941 = vmatprep.subr.bf16.mxu0 %v2773
    %3942 = vmatpush1.bf16.msra.mxu0 %v2772
    %3943 = vmatprep.subr.bf16.mxu0 %v2777
    %3944 = vmatpush1.bf16.msra.mxu0 %v2776
    %3945 = vmatprep.subr.bf16.mxu0 %v2781
    %3946 = vmatpush1.bf16.msra.mxu0 %v2780
    %3947 = vmatprep.mubr.bf16.mxu0 %v797
    %3948 = vmatmul.mubr.bf16.gmra.mrb[0].mxu0 %v796
    %v3949 = vpop.f32.mrb[0].mxu0
    %v3950 = vadd.f32 %v3907, %v3949
    %v3951 = vpop.f32.mrb[0].mxu0
    %v3952 = vadd.f32 %v3909, %v3951
    %v3953 = vpop.f32.mrb[0].mxu0
    %v3954 = vadd.f32 %v3911, %v3953
    %v3955 = vpop.f32.mrb[0].mxu0
    %v3956 = vadd.f32 %v3913, %v3955
    %3957 = vdwg.mxu0
    %3958 = vmatprep.subr.bf16.mxu0 %v2785
    %3959 = vmatpush1.bf16.msra.mxu0 %v2784
    %3960 = vmatprep.subr.bf16.mxu0 %v2789
    %3961 = vmatpush1.bf16.msra.mxu0 %v2788
    %3962 = vmatprep.subr.bf16.mxu0 %v2793
    %3963 = vmatpush1.bf16.msra.mxu0 %v2792
    %3964 = vmatprep.subr.bf16.mxu0 %v2797
    %3965 = vmatpush1.bf16.msra.mxu0 %v2796
    %3966 = vmatprep.subr.bf16.mxu0 %v2801
    %3967 = vmatpush1.bf16.msra.mxu0 %v2800
    %3968 = vmatprep.subr.bf16.mxu0 %v2805
    %3969 = vmatpush1.bf16.msra.mxu0 %v2804
    %3970 = vmatprep.subr.bf16.mxu0 %v2809
    %3971 = vmatpush1.bf16.msra.mxu0 %v2808
    %3972 = vmatprep.subr.bf16.mxu0 %v2813
    %3973 = vmatpush1.bf16.msra.mxu0 %v2812
    %3974 = vmatprep.subr.bf16.mxu0 %v2817
    %3975 = vmatpush1.bf16.msra.mxu0 %v2816
    %3976 = vmatprep.subr.bf16.mxu0 %v2821
    %3977 = vmatpush1.bf16.msra.mxu0 %v2820
    %3978 = vmatprep.subr.bf16.mxu0 %v2825
    %3979 = vmatpush1.bf16.msra.mxu0 %v2824
    %3980 = vmatprep.subr.bf16.mxu0 %v2829
    %3981 = vmatpush1.bf16.msra.mxu0 %v2828
    %3982 = vmatprep.subr.bf16.mxu0 %v2833
    %3983 = vmatpush1.bf16.msra.mxu0 %v2832
    %3984 = vmatprep.subr.bf16.mxu0 %v2837
    %3985 = vmatpush1.bf16.msra.mxu0 %v2836
    %3986 = vmatprep.subr.bf16.mxu0 %v2841
    %3987 = vmatpush1.bf16.msra.mxu0 %v2840
    %3988 = vmatprep.subr.bf16.mxu0 %v2845
    %3989 = vmatpush1.bf16.msra.mxu0 %v2844
    %3990 = vmatprep.mubr.bf16.mxu0 %v799
    %3991 = vmatmul.mubr.bf16.gmra.mrb[0].mxu0 %v798
    %v3992 = vpop.f32.mrb[0].mxu0
    %v3993 = vadd.f32 %v3950, %v3992
    %v3994 = vpop.f32.mrb[0].mxu0
    %v3995 = vadd.f32 %v3952, %v3994
    %v3996 = vpop.f32.mrb[0].mxu0
    %v3997 = vadd.f32 %v3954, %v3996
    %v3998 = vpop.f32.mrb[0].mxu0
    %v3999 = vadd.f32 %v3956, %v3998
    %4000 = vdwg.mxu0
    %4001 = vmatprep.subr.bf16.mxu0 %v2849
    %4002 = vmatpush1.bf16.msra.mxu0 %v2848
    %4003 = vmatprep.subr.bf16.mxu0 %v2853
    %4004 = vmatpush1.bf16.msra.mxu0 %v2852
    %4005 = vmatprep.subr.bf16.mxu0 %v2857
    %4006 = vmatpush1.bf16.msra.mxu0 %v2856
    %4007 = vmatprep.subr.bf16.mxu0 %v2861
    %4008 = vmatpush1.bf16.msra.mxu0 %v2860
    %4009 = vmatprep.subr.bf16.mxu0 %v2865
    %4010 = vmatpush1.bf16.msra.mxu0 %v2864
    %4011 = vmatprep.subr.bf16.mxu0 %v2869
    %4012 = vmatpush1.bf16.msra.mxu0 %v2868
    %4013 = vmatprep.subr.bf16.mxu0 %v2873
    %4014 = vmatpush1.bf16.msra.mxu0 %v2872
    %4015 = vmatprep.subr.bf16.mxu0 %v2877
    %4016 = vmatpush1.bf16.msra.mxu0 %v2876
    %4017 = vmatprep.subr.bf16.mxu0 %v2881
    %4018 = vmatpush1.bf16.msra.mxu0 %v2880
    %4019 = vmatprep.subr.bf16.mxu0 %v2885
    %4020 = vmatpush1.bf16.msra.mxu0 %v2884
    %4021 = vmatprep.subr.bf16.mxu0 %v2889
    %4022 = vmatpush1.bf16.msra.mxu0 %v2888
    %4023 = vmatprep.subr.bf16.mxu0 %v2893
    %4024 = vmatpush1.bf16.msra.mxu0 %v2892
    %4025 = vmatprep.subr.bf16.mxu0 %v2897
    %4026 = vmatpush1.bf16.msra.mxu0 %v2896
    %4027 = vmatprep.subr.bf16.mxu0 %v2901
    %4028 = vmatpush1.bf16.msra.mxu0 %v2900
    %4029 = vmatprep.subr.bf16.mxu0 %v2905
    %4030 = vmatpush1.bf16.msra.mxu0 %v2904
    %4031 = vmatprep.subr.bf16.mxu0 %v2909
    %4032 = vmatpush1.bf16.msra.mxu0 %v2908
    %4033 = vmatprep.mubr.bf16.mxu0 %v801
    %4034 = vmatmul.mubr.bf16.gmra.mrb[0].mxu0 %v800
    %v4035 = vpop.f32.mrb[0].mxu0
    %v4036 = vadd.f32 %v3993, %v4035
    %v4037 = vpop.f32.mrb[0].mxu0
    %v4038 = vadd.f32 %v3995, %v4037
    %v4039 = vpop.f32.mrb[0].mxu0
    %v4040 = vadd.f32 %v3997, %v4039
    %v4041 = vpop.f32.mrb[0].mxu0
    %v4042 = vadd.f32 %v3999, %v4041
    %4043 = vdwg.mxu0
    %4044 = vmatprep.subr.bf16.mxu0 %v2913
    %4045 = vmatpush1.bf16.msra.mxu0 %v2912
    %4046 = vmatprep.subr.bf16.mxu0 %v2917
    %4047 = vmatpush1.bf16.msra.mxu0 %v2916
    %4048 = vmatprep.subr.bf16.mxu0 %v2921
    %4049 = vmatpush1.bf16.msra.mxu0 %v2920
    %4050 = vmatprep.subr.bf16.mxu0 %v2925
    %4051 = vmatpush1.bf16.msra.mxu0 %v2924
    %4052 = vmatprep.subr.bf16.mxu0 %v2929
    %4053 = vmatpush1.bf16.msra.mxu0 %v2928
    %4054 = vmatprep.subr.bf16.mxu0 %v2933
    %4055 = vmatpush1.bf16.msra.mxu0 %v2932
    %4056 = vmatprep.subr.bf16.mxu0 %v2937
    %4057 = vmatpush1.bf16.msra.mxu0 %v2936
    %4058 = vmatprep.subr.bf16.mxu0 %v2941
    %4059 = vmatpush1.bf16.msra.mxu0 %v2940
    %4060 = vmatprep.subr.bf16.mxu0 %v2945
    %4061 = vmatpush1.bf16.msra.mxu0 %v2944
    %4062 = vmatprep.subr.bf16.mxu0 %v2949
    %4063 = vmatpush1.bf16.msra.mxu0 %v2948
    %4064 = vmatprep.subr.bf16.mxu0 %v2953
    %4065 = vmatpush1.bf16.msra.mxu0 %v2952
    %4066 = vmatprep.subr.bf16.mxu0 %v2957
    %4067 = vmatpush1.bf16.msra.mxu0 %v2956
    %4068 = vmatprep.subr.bf16.mxu0 %v2961
    %4069 = vmatpush1.bf16.msra.mxu0 %v2960
    %4070 = vmatprep.subr.bf16.mxu0 %v2965
    %4071 = vmatpush1.bf16.msra.mxu0 %v2964
    %4072 = vmatprep.subr.bf16.mxu0 %v2969
    %4073 = vmatpush1.bf16.msra.mxu0 %v2968
    %4074 = vmatprep.subr.bf16.mxu0 %v2973
    %4075 = vmatpush1.bf16.msra.mxu0 %v2972
    %4076 = vmatprep.mubr.bf16.mxu0 %v803
    %4077 = vmatmul.mubr.bf16.gmra.mrb[0].mxu0 %v802
    %v4078 = vpop.f32.mrb[0].mxu0
    %v4079 = vadd.f32 %v4036, %v4078
    %v4080 = vpop.f32.mrb[0].mxu0
    %v4081 = vadd.f32 %v4038, %v4080
    %v4082 = vpop.f32.mrb[0].mxu0
    %v4083 = vadd.f32 %v4040, %v4082
    %v4084 = vpop.f32.mrb[0].mxu0
    %v4085 = vadd.f32 %v4042, %v4084
    %4086 = vdwg.mxu0
    %4087 = vmatprep.subr.bf16.mxu0 %v2977
    %4088 = vmatpush1.bf16.msra.mxu0 %v2976
    %4089 = vmatprep.subr.bf16.mxu0 %v2981
    %4090 = vmatpush1.bf16.msra.mxu0 %v2980
    %4091 = vmatprep.subr.bf16.mxu0 %v2985
    %4092 = vmatpush1.bf16.msra.mxu0 %v2984
    %4093 = vmatprep.subr.bf16.mxu0 %v2989
    %4094 = vmatpush1.bf16.msra.mxu0 %v2988
    %4095 = vmatprep.subr.bf16.mxu0 %v2993
    %4096 = vmatpush1.bf16.msra.mxu0 %v2992
    %4097 = vmatprep.subr.bf16.mxu0 %v2997
    %4098 = vmatpush1.bf16.msra.mxu0 %v2996
    %4099 = vmatprep.subr.bf16.mxu0 %v3001
    %4100 = vmatpush1.bf16.msra.mxu0 %v3000
    %4101 = vmatprep.subr.bf16.mxu0 %v3005
    %4102 = vmatpush1.bf16.msra.mxu0 %v3004
    %4103 = vmatprep.subr.bf16.mxu0 %v3009
    %4104 = vmatpush1.bf16.msra.mxu0 %v3008
    %4105 = vmatprep.subr.bf16.mxu0 %v3013
    %4106 = vmatpush1.bf16.msra.mxu0 %v3012
    %4107 = vmatprep.subr.bf16.mxu0 %v3017
    %4108 = vmatpush1.bf16.msra.mxu0 %v3016
    %4109 = vmatprep.subr.bf16.mxu0 %v3021
    %4110 = vmatpush1.bf16.msra.mxu0 %v3020
    %4111 = vmatprep.subr.bf16.mxu0 %v3025
    %4112 = vmatpush1.bf16.msra.mxu0 %v3024
    %4113 = vmatprep.subr.bf16.mxu0 %v3029
    %4114 = vmatpush1.bf16.msra.mxu0 %v3028
    %4115 = vmatprep.subr.bf16.mxu0 %v3033
    %4116 = vmatpush1.bf16.msra.mxu0 %v3032
    %4117 = vmatprep.subr.bf16.mxu0 %v3037
    %4118 = vmatpush1.bf16.msra.mxu0 %v3036
    %4119 = vmatprep.mubr.bf16.mxu0 %v805
    %4120 = vmatmul.mubr.bf16.gmra.mrb[0].mxu0 %v804
    %v4121 = vpop.f32.mrb[0].mxu0
    %v4122 = vadd.f32 %v4079, %v4121
    %v4123 = vpop.f32.mrb[0].mxu0
    %v4124 = vadd.f32 %v4081, %v4123
    %v4125 = vpop.f32.mrb[0].mxu0
    %v4126 = vadd.f32 %v4083, %v4125
    %v4127 = vpop.f32.mrb[0].mxu0
    %v4128 = vadd.f32 %v4085, %v4127
    %4129 = vdwg.mxu0
    %4130 = vmatprep.subr.bf16.mxu0 %v3041
    %4131 = vmatpush1.bf16.msra.mxu0 %v3040
    %4132 = vmatprep.subr.bf16.mxu0 %v3045
    %4133 = vmatpush1.bf16.msra.mxu0 %v3044
    %4134 = vmatprep.subr.bf16.mxu0 %v3049
    %4135 = vmatpush1.bf16.msra.mxu0 %v3048
    %4136 = vmatprep.subr.bf16.mxu0 %v3053
    %4137 = vmatpush1.bf16.msra.mxu0 %v3052
    %4138 = vmatprep.subr.bf16.mxu0 %v3057
    %4139 = vmatpush1.bf16.msra.mxu0 %v3056
    %4140 = vmatprep.subr.bf16.mxu0 %v3061
    %4141 = vmatpush1.bf16.msra.mxu0 %v3060
    %4142 = vmatprep.subr.bf16.mxu0 %v3065
    %4143 = vmatpush1.bf16.msra.mxu0 %v3064
    %4144 = vmatprep.subr.bf16.mxu0 %v3069
    %4145 = vmatpush1.bf16.msra.mxu0 %v3068
    %4146 = vmatprep.subr.bf16.mxu0 %v3073
    %4147 = vmatpush1.bf16.msra.mxu0 %v3072
    %4148 = vmatprep.subr.bf16.mxu0 %v3077
    %4149 = vmatpush1.bf16.msra.mxu0 %v3076
    %4150 = vmatprep.subr.bf16.mxu0 %v3081
    %4151 = vmatpush1.bf16.msra.mxu0 %v3080
    %4152 = vmatprep.subr.bf16.mxu0 %v3085
    %4153 = vmatpush1.bf16.msra.mxu0 %v3084
    %4154 = vmatprep.subr.bf16.mxu0 %v3089
    %4155 = vmatpush1.bf16.msra.mxu0 %v3088
    %4156 = vmatprep.subr.bf16.mxu0 %v3093
    %4157 = vmatpush1.bf16.msra.mxu0 %v3092
    %4158 = vmatprep.subr.bf16.mxu0 %v3097
    %4159 = vmatpush1.bf16.msra.mxu0 %v3096
    %4160 = vmatprep.subr.bf16.mxu0 %v3101
    %4161 = vmatpush1.bf16.msra.mxu0 %v3100
    %4162 = vmatprep.mubr.bf16.mxu0 %v807
    %4163 = vmatmul.mubr.bf16.gmra.mrb[0].mxu0 %v806
    %v4164 = vpop.f32.mrb[0].mxu0
    %v4165 = vadd.f32 %v4122, %v4164
    %v4166 = vpop.f32.mrb[0].mxu0
    %v4167 = vadd.f32 %v4124, %v4166
    %v4168 = vpop.f32.mrb[0].mxu0
    %v4169 = vadd.f32 %v4126, %v4168
    %v4170 = vpop.f32.mrb[0].mxu0
    %v4171 = vadd.f32 %v4128, %v4170
    %4172 = vdwg.mxu0
    %4173 = vmatprep.subr.bf16.mxu0 %v3105
    %4174 = vmatpush1.bf16.msra.mxu0 %v3104
    %4175 = vmatprep.subr.bf16.mxu0 %v3109
    %4176 = vmatpush1.bf16.msra.mxu0 %v3108
    %4177 = vmatprep.subr.bf16.mxu0 %v3113
    %4178 = vmatpush1.bf16.msra.mxu0 %v3112
    %4179 = vmatprep.subr.bf16.mxu0 %v3117
    %4180 = vmatpush1.bf16.msra.mxu0 %v3116
    %4181 = vmatprep.subr.bf16.mxu0 %v3121
    %4182 = vmatpush1.bf16.msra.mxu0 %v3120
    %4183 = vmatprep.subr.bf16.mxu0 %v3125
    %4184 = vmatpush1.bf16.msra.mxu0 %v3124
    %4185 = vmatprep.subr.bf16.mxu0 %v3129
    %4186 = vmatpush1.bf16.msra.mxu0 %v3128
    %4187 = vmatprep.subr.bf16.mxu0 %v3133
    %4188 = vmatpush1.bf16.msra.mxu0 %v3132
    %4189 = vmatprep.subr.bf16.mxu0 %v3137
    %4190 = vmatpush1.bf16.msra.mxu0 %v3136
    %4191 = vmatprep.subr.bf16.mxu0 %v3141
    %4192 = vmatpush1.bf16.msra.mxu0 %v3140
    %4193 = vmatprep.subr.bf16.mxu0 %v3145
    %4194 = vmatpush1.bf16.msra.mxu0 %v3144
    %4195 = vmatprep.subr.bf16.mxu0 %v3149
    %4196 = vmatpush1.bf16.msra.mxu0 %v3148
    %4197 = vmatprep.subr.bf16.mxu0 %v3153
    %4198 = vmatpush1.bf16.msra.mxu0 %v3152
    %4199 = vmatprep.subr.bf16.mxu0 %v3157
    %4200 = vmatpush1.bf16.msra.mxu0 %v3156
    %4201 = vmatprep.subr.bf16.mxu0 %v3161
    %4202 = vmatpush1.bf16.msra.mxu0 %v3160
    %4203 = vmatprep.subr.bf16.mxu0 %v3165
    %4204 = vmatpush1.bf16.msra.mxu0 %v3164
    %4205 = vmatprep.mubr.bf16.mxu0 %v809
    %4206 = vmatmul.mubr.bf16.gmra.mrb[0].mxu0 %v808
    %v4207 = vpop.f32.mrb[0].mxu0
    %v4208 = vadd.f32 %v4165, %v4207
    %v4209 = vpop.f32.mrb[0].mxu0
    %v4210 = vadd.f32 %v4167, %v4209
    %v4211 = vpop.f32.mrb[0].mxu0
    %v4212 = vadd.f32 %v4169, %v4211
    %v4213 = vpop.f32.mrb[0].mxu0
    %v4214 = vadd.f32 %v4171, %v4213
    %4215 = vdwg.mxu0
    %4216 = vmatprep.subr.bf16.mxu0 %v3169
    %4217 = vmatpush1.bf16.msra.mxu0 %v3168
    %4218 = vmatprep.subr.bf16.mxu0 %v3173
    %4219 = vmatpush1.bf16.msra.mxu0 %v3172
    %4220 = vmatprep.subr.bf16.mxu0 %v3177
    %4221 = vmatpush1.bf16.msra.mxu0 %v3176
    %4222 = vmatprep.subr.bf16.mxu0 %v3181
    %4223 = vmatpush1.bf16.msra.mxu0 %v3180
    %4224 = vmatprep.subr.bf16.mxu0 %v3185
    %4225 = vmatpush1.bf16.msra.mxu0 %v3184
    %4226 = vmatprep.subr.bf16.mxu0 %v3189
    %4227 = vmatpush1.bf16.msra.mxu0 %v3188
    %4228 = vmatprep.subr.bf16.mxu0 %v3193
    %4229 = vmatpush1.bf16.msra.mxu0 %v3192
    %4230 = vmatprep.subr.bf16.mxu0 %v3197
    %4231 = vmatpush1.bf16.msra.mxu0 %v3196
    %4232 = vmatprep.subr.bf16.mxu0 %v3201
    %4233 = vmatpush1.bf16.msra.mxu0 %v3200
    %4234 = vmatprep.subr.bf16.mxu0 %v3205
    %4235 = vmatpush1.bf16.msra.mxu0 %v3204
    %4236 = vmatprep.subr.bf16.mxu0 %v3209
    %4237 = vmatpush1.bf16.msra.mxu0 %v3208
    %4238 = vmatprep.subr.bf16.mxu0 %v3213
    %4239 = vmatpush1.bf16.msra.mxu0 %v3212
    %4240 = vmatprep.subr.bf16.mxu0 %v3217
    %4241 = vmatpush1.bf16.msra.mxu0 %v3216
    %4242 = vmatprep.subr.bf16.mxu0 %v3221
    %4243 = vmatpush1.bf16.msra.mxu0 %v3220
    %4244 = vmatprep.subr.bf16.mxu0 %v3225
    %4245 = vmatpush1.bf16.msra.mxu0 %v3224
    %4246 = vmatprep.subr.bf16.mxu0 %v3229
    %4247 = vmatpush1.bf16.msra.mxu0 %v3228
    %4248 = vmatprep.mubr.bf16.mxu0 %v811
    %4249 = vmatmul.mubr.bf16.gmra.mrb[0].mxu0 %v810
    %v4250 = vpop.f32.mrb[0].mxu0
    %v4251 = vadd.f32 %v4208, %v4250
    %v4252 = vpop.f32.mrb[0].mxu0
    %v4253 = vadd.f32 %v4210, %v4252
    %v4254 = vpop.f32.mrb[0].mxu0
    %v4255 = vadd.f32 %v4212, %v4254
    %v4256 = vpop.f32.mrb[0].mxu0
    %v4257 = vadd.f32 %v4214, %v4256
    %4258 = vdwg.mxu0
    %4259 = vmatprep.subr.bf16.mxu0 %v3233
    %4260 = vmatpush1.bf16.msra.mxu0 %v3232
    %4261 = vmatprep.subr.bf16.mxu0 %v3237
    %4262 = vmatpush1.bf16.msra.mxu0 %v3236
    %4263 = vmatprep.subr.bf16.mxu0 %v3241
    %4264 = vmatpush1.bf16.msra.mxu0 %v3240
    %4265 = vmatprep.subr.bf16.mxu0 %v3245
    %4266 = vmatpush1.bf16.msra.mxu0 %v3244
    %4267 = vmatprep.subr.bf16.mxu0 %v3249
    %4268 = vmatpush1.bf16.msra.mxu0 %v3248
    %4269 = vmatprep.subr.bf16.mxu0 %v3253
    %4270 = vmatpush1.bf16.msra.mxu0 %v3252
    %4271 = vmatprep.subr.bf16.mxu0 %v3257
    %4272 = vmatpush1.bf16.msra.mxu0 %v3256
    %4273 = vmatprep.subr.bf16.mxu0 %v3261
    %4274 = vmatpush1.bf16.msra.mxu0 %v3260
    %4275 = vmatprep.subr.bf16.mxu0 0
    %4276 = vmatpush1.bf16.msra.mxu0 0
    %4277 = vmatprep.subr.bf16.mxu0 0
    %4278 = vmatpush1.bf16.msra.mxu0 0
    %4279 = vmatprep.subr.bf16.mxu0 0
    %4280 = vmatpush1.bf16.msra.mxu0 0
    %4281 = vmatprep.subr.bf16.mxu0 0
    %4282 = vmatpush1.bf16.msra.mxu0 0
    %4283 = vmatprep.subr.bf16.mxu0 0
    %4284 = vmatpush1.bf16.msra.mxu0 0
    %4285 = vmatprep.subr.bf16.mxu0 0
    %4286 = vmatpush1.bf16.msra.mxu0 0
    %4287 = vmatprep.subr.bf16.mxu0 0
    %4288 = vmatpush1.bf16.msra.mxu0 0
    %4289 = vmatprep.subr.bf16.mxu0 0
    %4290 = vmatpush1.bf16.msra.mxu0 0
    %4291 = vmatprep.mubr.bf16.mxu0 0
    %4292 = vmatmul.mubr.bf16.gmra.mrb[0].mxu0 %v812
    %v4293 = vpop.f32.mrb[0].mxu0
    %v4294 = vadd.f32 %v4251, %v4293
    %v4295 = vpop.f32.mrb[0].mxu0
    %v4296 = vadd.f32 %v4253, %v4295
    %v4297 = vpop.f32.mrb[0].mxu0
    %v4298 = vadd.f32 %v4255, %v4297
    %v4299 = vpop.f32.mrb[0].mxu0
    %v4300 = vadd.f32 %v4257, %v4299
    %4301 = vdwg.mxu0
    %4302 = vmatprep.subr.bf16.mxu0 %v2659
    %4303 = vmatpush1.bf16.msra.mxu0 %v2658
    %4304 = vmatprep.subr.bf16.mxu0 %v2663
    %4305 = vmatpush1.bf16.msra.mxu0 %v2662
    %4306 = vmatprep.subr.bf16.mxu0 %v2667
    %4307 = vmatpush1.bf16.msra.mxu0 %v2666
    %4308 = vmatprep.subr.bf16.mxu0 %v2671
    %4309 = vmatpush1.bf16.msra.mxu0 %v2670
    %4310 = vmatprep.subr.bf16.mxu0 %v2675
    %4311 = vmatpush1.bf16.msra.mxu0 %v2674
    %4312 = vmatprep.subr.bf16.mxu0 %v2679
    %4313 = vmatpush1.bf16.msra.mxu0 %v2678
    %4314 = vmatprep.subr.bf16.mxu0 %v2683
    %4315 = vmatpush1.bf16.msra.mxu0 %v2682
    %4316 = vmatprep.subr.bf16.mxu0 %v2687
    %4317 = vmatpush1.bf16.msra.mxu0 %v2686
    %4318 = vmatprep.subr.bf16.mxu0 %v2691
    %4319 = vmatpush1.bf16.msra.mxu0 %v2690
    %4320 = vmatprep.subr.bf16.mxu0 %v2695
    %4321 = vmatpush1.bf16.msra.mxu0 %v2694
    %4322 = vmatprep.subr.bf16.mxu0 %v2699
    %4323 = vmatpush1.bf16.msra.mxu0 %v2698
    %4324 = vmatprep.subr.bf16.mxu0 %v2703
    %4325 = vmatpush1.bf16.msra.mxu0 %v2702
    %4326 = vmatprep.subr.bf16.mxu0 %v2707
    %4327 = vmatpush1.bf16.msra.mxu0 %v2706
    %4328 = vmatprep.subr.bf16.mxu0 %v2711
    %4329 = vmatpush1.bf16.msra.mxu0 %v2710
    %4330 = vmatprep.subr.bf16.mxu0 %v2715
    %4331 = vmatpush1.bf16.msra.mxu0 %v2714
    %4332 = vmatprep.subr.bf16.mxu0 %v2719
    %4333 = vmatpush1.bf16.msra.mxu0 %v2718
    %4334 = vmatprep.mubr.bf16.mxu0 %v795
    %4335 = vmatmul.mubr.bf16.gmra.mrb[0].mxu0 %v794
    %v4336 = vpop.f32.mrb[0].mxu0
    %v4337 = vadd.f32 %v727, %v4336
    %v4338 = vpop.f32.mrb[0].mxu0
    %v4339 = vadd.f32 %v731, %v4338
    %v4340 = vpop.f32.mrb[0].mxu0
    %v4341 = vadd.f32 %v727, %v4340
    %v4342 = vpop.f32.mrb[0].mxu0
    %v4343 = vadd.f32 %v731, %v4342
    %4344 = vdwg.mxu0
    %4345 = vmatprep.subr.bf16.mxu0 %v2723
    %4346 = vmatpush1.bf16.msra.mxu0 %v2722
    %4347 = vmatprep.subr.bf16.mxu0 %v2727
    %4348 = vmatpush1.bf16.msra.mxu0 %v2726
    %4349 = vmatprep.subr.bf16.mxu0 %v2731
    %4350 = vmatpush1.bf16.msra.mxu0 %v2730
    %4351 = vmatprep.subr.bf16.mxu0 %v2735
    %4352 = vmatpush1.bf16.msra.mxu0 %v2734
    %4353 = vmatprep.subr.bf16.mxu0 %v2739
    %4354 = vmatpush1.bf16.msra.mxu0 %v2738
    %4355 = vmatprep.subr.bf16.mxu0 %v2743
    %4356 = vmatpush1.bf16.msra.mxu0 %v2742
    %4357 = vmatprep.subr.bf16.mxu0 %v2747
    %4358 = vmatpush1.bf16.msra.mxu0 %v2746
    %4359 = vmatprep.subr.bf16.mxu0 %v2751
    %4360 = vmatpush1.bf16.msra.mxu0 %v2750
    %4361 = vmatprep.subr.bf16.mxu0 %v2755
    %4362 = vmatpush1.bf16.msra.mxu0 %v2754
    %4363 = vmatprep.subr.bf16.mxu0 %v2759
    %4364 = vmatpush1.bf16.msra.mxu0 %v2758
    %4365 = vmatprep.subr.bf16.mxu0 %v2763
    %4366 = vmatpush1.bf16.msra.mxu0 %v2762
    %4367 = vmatprep.subr.bf16.mxu0 %v2767
    %4368 = vmatpush1.bf16.msra.mxu0 %v2766
    %4369 = vmatprep.subr.bf16.mxu0 %v2771
    %4370 = vmatpush1.bf16.msra.mxu0 %v2770
    %4371 = vmatprep.subr.bf16.mxu0 %v2775
    %4372 = vmatpush1.bf16.msra.mxu0 %v2774
    %4373 = vmatprep.subr.bf16.mxu0 %v2779
    %4374 = vmatpush1.bf16.msra.mxu0 %v2778
    %4375 = vmatprep.subr.bf16.mxu0 %v2783
    %4376 = vmatpush1.bf16.msra.mxu0 %v2782
    %4377 = vmatprep.mubr.bf16.mxu0 %v797
    %4378 = vmatmul.mubr.bf16.gmra.mrb[0].mxu0 %v796
    %v4379 = vpop.f32.mrb[0].mxu0
    %v4380 = vadd.f32 %v4337, %v4379
    %v4381 = vpop.f32.mrb[0].mxu0
    %v4382 = vadd.f32 %v4339, %v4381
    %v4383 = vpop.f32.mrb[0].mxu0
    %v4384 = vadd.f32 %v4341, %v4383
    %v4385 = vpop.f32.mrb[0].mxu0
    %v4386 = vadd.f32 %v4343, %v4385
    %4387 = vdwg.mxu0
    %4388 = vmatprep.subr.bf16.mxu0 %v2787
    %4389 = vmatpush1.bf16.msra.mxu0 %v2786
    %4390 = vmatprep.subr.bf16.mxu0 %v2791
    %4391 = vmatpush1.bf16.msra.mxu0 %v2790
    %4392 = vmatprep.subr.bf16.mxu0 %v2795
    %4393 = vmatpush1.bf16.msra.mxu0 %v2794
    %4394 = vmatprep.subr.bf16.mxu0 %v2799
    %4395 = vmatpush1.bf16.msra.mxu0 %v2798
    %4396 = vmatprep.subr.bf16.mxu0 %v2803
    %4397 = vmatpush1.bf16.msra.mxu0 %v2802
    %4398 = vmatprep.subr.bf16.mxu0 %v2807
    %4399 = vmatpush1.bf16.msra.mxu0 %v2806
    %4400 = vmatprep.subr.bf16.mxu0 %v2811
    %4401 = vmatpush1.bf16.msra.mxu0 %v2810
    %4402 = vmatprep.subr.bf16.mxu0 %v2815
    %4403 = vmatpush1.bf16.msra.mxu0 %v2814
    %4404 = vmatprep.subr.bf16.mxu0 %v2819
    %4405 = vmatpush1.bf16.msra.mxu0 %v2818
    %4406 = vmatprep.subr.bf16.mxu0 %v2823
    %4407 = vmatpush1.bf16.msra.mxu0 %v2822
    %4408 = vmatprep.subr.bf16.mxu0 %v2827
    %4409 = vmatpush1.bf16.msra.mxu0 %v2826
    %4410 = vmatprep.subr.bf16.mxu0 %v2831
    %4411 = vmatpush1.bf16.msra.mxu0 %v2830
    %4412 = vmatprep.subr.bf16.mxu0 %v2835
    %4413 = vmatpush1.bf16.msra.mxu0 %v2834
    %4414 = vmatprep.subr.bf16.mxu0 %v2839
    %4415 = vmatpush1.bf16.msra.mxu0 %v2838
    %4416 = vmatprep.subr.bf16.mxu0 %v2843
    %4417 = vmatpush1.bf16.msra.mxu0 %v2842
    %4418 = vmatprep.subr.bf16.mxu0 %v2847
    %4419 = vmatpush1.bf16.msra.mxu0 %v2846
    %4420 = vmatprep.mubr.bf16.mxu0 %v799
    %4421 = vmatmul.mubr.bf16.gmra.mrb[0].mxu0 %v798
    %v4422 = vpop.f32.mrb[0].mxu0
    %v4423 = vadd.f32 %v4380, %v4422
    %v4424 = vpop.f32.mrb[0].mxu0
    %v4425 = vadd.f32 %v4382, %v4424
    %v4426 = vpop.f32.mrb[0].mxu0
    %v4427 = vadd.f32 %v4384, %v4426
    %v4428 = vpop.f32.mrb[0].mxu0
    %v4429 = vadd.f32 %v4386, %v4428
    %4430 = vdwg.mxu0
    %4431 = vmatprep.subr.bf16.mxu0 %v2851
    %4432 = vmatpush1.bf16.msra.mxu0 %v2850
    %4433 = vmatprep.subr.bf16.mxu0 %v2855
    %4434 = vmatpush1.bf16.msra.mxu0 %v2854
    %4435 = vmatprep.subr.bf16.mxu0 %v2859
    %4436 = vmatpush1.bf16.msra.mxu0 %v2858
    %4437 = vmatprep.subr.bf16.mxu0 %v2863
    %4438 = vmatpush1.bf16.msra.mxu0 %v2862
    %4439 = vmatprep.subr.bf16.mxu0 %v2867
    %4440 = vmatpush1.bf16.msra.mxu0 %v2866
    %4441 = vmatprep.subr.bf16.mxu0 %v2871
    %4442 = vmatpush1.bf16.msra.mxu0 %v2870
    %4443 = vmatprep.subr.bf16.mxu0 %v2875
    %4444 = vmatpush1.bf16.msra.mxu0 %v2874
    %4445 = vmatprep.subr.bf16.mxu0 %v2879
    %4446 = vmatpush1.bf16.msra.mxu0 %v2878
    %4447 = vmatprep.subr.bf16.mxu0 %v2883
    %4448 = vmatpush1.bf16.msra.mxu0 %v2882
    %4449 = vmatprep.subr.bf16.mxu0 %v2887
    %4450 = vmatpush1.bf16.msra.mxu0 %v2886
    %4451 = vmatprep.subr.bf16.mxu0 %v2891
    %4452 = vmatpush1.bf16.msra.mxu0 %v2890
    %4453 = vmatprep.subr.bf16.mxu0 %v2895
    %4454 = vmatpush1.bf16.msra.mxu0 %v2894
    %4455 = vmatprep.subr.bf16.mxu0 %v2899
    %4456 = vmatpush1.bf16.msra.mxu0 %v2898
    %4457 = vmatprep.subr.bf16.mxu0 %v2903
    %4458 = vmatpush1.bf16.msra.mxu0 %v2902
    %4459 = vmatprep.subr.bf16.mxu0 %v2907
    %4460 = vmatpush1.bf16.msra.mxu0 %v2906
    %4461 = vmatprep.subr.bf16.mxu0 %v2911
    %4462 = vmatpush1.bf16.msra.mxu0 %v2910
    %4463 = vmatprep.mubr.bf16.mxu0 %v801
    %4464 = vmatmul.mubr.bf16.gmra.mrb[0].mxu0 %v800
    %v4465 = vpop.f32.mrb[0].mxu0
    %v4466 = vadd.f32 %v4423, %v4465
    %v4467 = vpop.f32.mrb[0].mxu0
    %v4468 = vadd.f32 %v4425, %v4467
    %v4469 = vpop.f32.mrb[0].mxu0
    %v4470 = vadd.f32 %v4427, %v4469
    %v4471 = vpop.f32.mrb[0].mxu0
    %v4472 = vadd.f32 %v4429, %v4471
    %4473 = vdwg.mxu0
    %4474 = vmatprep.subr.bf16.mxu0 %v2915
    %4475 = vmatpush1.bf16.msra.mxu0 %v2914
    %4476 = vmatprep.subr.bf16.mxu0 %v2919
    %4477 = vmatpush1.bf16.msra.mxu0 %v2918
    %4478 = vmatprep.subr.bf16.mxu0 %v2923
    %4479 = vmatpush1.bf16.msra.mxu0 %v2922
    %4480 = vmatprep.subr.bf16.mxu0 %v2927
    %4481 = vmatpush1.bf16.msra.mxu0 %v2926
    %4482 = vmatprep.subr.bf16.mxu0 %v2931
    %4483 = vmatpush1.bf16.msra.mxu0 %v2930
    %4484 = vmatprep.subr.bf16.mxu0 %v2935
    %4485 = vmatpush1.bf16.msra.mxu0 %v2934
    %4486 = vmatprep.subr.bf16.mxu0 %v2939
    %4487 = vmatpush1.bf16.msra.mxu0 %v2938
    %4488 = vmatprep.subr.bf16.mxu0 %v2943
    %4489 = vmatpush1.bf16.msra.mxu0 %v2942
    %4490 = vmatprep.subr.bf16.mxu0 %v2947
    %4491 = vmatpush1.bf16.msra.mxu0 %v2946
    %4492 = vmatprep.subr.bf16.mxu0 %v2951
    %4493 = vmatpush1.bf16.msra.mxu0 %v2950
    %4494 = vmatprep.subr.bf16.mxu0 %v2955
    %4495 = vmatpush1.bf16.msra.mxu0 %v2954
    %4496 = vmatprep.subr.bf16.mxu0 %v2959
    %4497 = vmatpush1.bf16.msra.mxu0 %v2958
    %4498 = vmatprep.subr.bf16.mxu0 %v2963
    %4499 = vmatpush1.bf16.msra.mxu0 %v2962
    %4500 = vmatprep.subr.bf16.mxu0 %v2967
    %4501 = vmatpush1.bf16.msra.mxu0 %v2966
    %4502 = vmatprep.subr.bf16.mxu0 %v2971
    %4503 = vmatpush1.bf16.msra.mxu0 %v2970
    %4504 = vmatprep.subr.bf16.mxu0 %v2975
    %4505 = vmatpush1.bf16.msra.mxu0 %v2974
    %4506 = vmatprep.mubr.bf16.mxu0 %v803
    %4507 = vmatmul.mubr.bf16.gmra.mrb[0].mxu0 %v802
    %v4508 = vpop.f32.mrb[0].mxu0
    %v4509 = vadd.f32 %v4466, %v4508
    %v4510 = vpop.f32.mrb[0].mxu0
    %v4511 = vadd.f32 %v4468, %v4510
    %v4512 = vpop.f32.mrb[0].mxu0
    %v4513 = vadd.f32 %v4470, %v4512
    %v4514 = vpop.f32.mrb[0].mxu0
    %v4515 = vadd.f32 %v4472, %v4514
    %4516 = vdwg.mxu0
    %4517 = vmatprep.subr.bf16.mxu0 %v2979
    %4518 = vmatpush1.bf16.msra.mxu0 %v2978
    %4519 = vmatprep.subr.bf16.mxu0 %v2983
    %4520 = vmatpush1.bf16.msra.mxu0 %v2982
    %4521 = vmatprep.subr.bf16.mxu0 %v2987
    %4522 = vmatpush1.bf16.msra.mxu0 %v2986
    %4523 = vmatprep.subr.bf16.mxu0 %v2991
    %4524 = vmatpush1.bf16.msra.mxu0 %v2990
    %4525 = vmatprep.subr.bf16.mxu0 %v2995
    %4526 = vmatpush1.bf16.msra.mxu0 %v2994
    %4527 = vmatprep.subr.bf16.mxu0 %v2999
    %4528 = vmatpush1.bf16.msra.mxu0 %v2998
    %4529 = vmatprep.subr.bf16.mxu0 %v3003
    %4530 = vmatpush1.bf16.msra.mxu0 %v3002
    %4531 = vmatprep.subr.bf16.mxu0 %v3007
    %4532 = vmatpush1.bf16.msra.mxu0 %v3006
    %4533 = vmatprep.subr.bf16.mxu0 %v3011
    %4534 = vmatpush1.bf16.msra.mxu0 %v3010
    %4535 = vmatprep.subr.bf16.mxu0 %v3015
    %4536 = vmatpush1.bf16.msra.mxu0 %v3014
    %4537 = vmatprep.subr.bf16.mxu0 %v3019
    %4538 = vmatpush1.bf16.msra.mxu0 %v3018
    %4539 = vmatprep.subr.bf16.mxu0 %v3023
    %4540 = vmatpush1.bf16.msra.mxu0 %v3022
    %4541 = vmatprep.subr.bf16.mxu0 %v3027
    %4542 = vmatpush1.bf16.msra.mxu0 %v3026
    %4543 = vmatprep.subr.bf16.mxu0 %v3031
    %4544 = vmatpush1.bf16.msra.mxu0 %v3030
    %4545 = vmatprep.subr.bf16.mxu0 %v3035
    %4546 = vmatpush1.bf16.msra.mxu0 %v3034
    %4547 = vmatprep.subr.bf16.mxu0 %v3039
    %4548 = vmatpush1.bf16.msra.mxu0 %v3038
    %4549 = vmatprep.mubr.bf16.mxu0 %v805
    %4550 = vmatmul.mubr.bf16.gmra.mrb[0].mxu0 %v804
    %v4551 = vpop.f32.mrb[0].mxu0
    %v4552 = vadd.f32 %v4509, %v4551
    %v4553 = vpop.f32.mrb[0].mxu0
    %v4554 = vadd.f32 %v4511, %v4553
    %v4555 = vpop.f32.mrb[0].mxu0
    %v4556 = vadd.f32 %v4513, %v4555
    %v4557 = vpop.f32.mrb[0].mxu0
    %v4558 = vadd.f32 %v4515, %v4557
    %4559 = vdwg.mxu0
    %4560 = vmatprep.subr.bf16.mxu0 %v3043
    %4561 = vmatpush1.bf16.msra.mxu0 %v3042
    %4562 = vmatprep.subr.bf16.mxu0 %v3047
    %4563 = vmatpush1.bf16.msra.mxu0 %v3046
    %4564 = vmatprep.subr.bf16.mxu0 %v3051
    %4565 = vmatpush1.bf16.msra.mxu0 %v3050
    %4566 = vmatprep.subr.bf16.mxu0 %v3055
    %4567 = vmatpush1.bf16.msra.mxu0 %v3054
    %4568 = vmatprep.subr.bf16.mxu0 %v3059
    %4569 = vmatpush1.bf16.msra.mxu0 %v3058
    %4570 = vmatprep.subr.bf16.mxu0 %v3063
    %4571 = vmatpush1.bf16.msra.mxu0 %v3062
    %4572 = vmatprep.subr.bf16.mxu0 %v3067
    %4573 = vmatpush1.bf16.msra.mxu0 %v3066
    %4574 = vmatprep.subr.bf16.mxu0 %v3071
    %4575 = vmatpush1.bf16.msra.mxu0 %v3070
    %4576 = vmatprep.subr.bf16.mxu0 %v3075
    %4577 = vmatpush1.bf16.msra.mxu0 %v3074
    %4578 = vmatprep.subr.bf16.mxu0 %v3079
    %4579 = vmatpush1.bf16.msra.mxu0 %v3078
    %4580 = vmatprep.subr.bf16.mxu0 %v3083
    %4581 = vmatpush1.bf16.msra.mxu0 %v3082
    %4582 = vmatprep.subr.bf16.mxu0 %v3087
    %4583 = vmatpush1.bf16.msra.mxu0 %v3086
    %4584 = vmatprep.subr.bf16.mxu0 %v3091
    %4585 = vmatpush1.bf16.msra.mxu0 %v3090
    %4586 = vmatprep.subr.bf16.mxu0 %v3095
    %4587 = vmatpush1.bf16.msra.mxu0 %v3094
    %4588 = vmatprep.subr.bf16.mxu0 %v3099
    %4589 = vmatpush1.bf16.msra.mxu0 %v3098
    %4590 = vmatprep.subr.bf16.mxu0 %v3103
    %4591 = vmatpush1.bf16.msra.mxu0 %v3102
    %4592 = vmatprep.mubr.bf16.mxu0 %v807
    %4593 = vmatmul.mubr.bf16.gmra.mrb[0].mxu0 %v806
    %v4594 = vpop.f32.mrb[0].mxu0
    %v4595 = vadd.f32 %v4552, %v4594
    %v4596 = vpop.f32.mrb[0].mxu0
    %v4597 = vadd.f32 %v4554, %v4596
    %v4598 = vpop.f32.mrb[0].mxu0
    %v4599 = vadd.f32 %v4556, %v4598
    %v4600 = vpop.f32.mrb[0].mxu0
    %v4601 = vadd.f32 %v4558, %v4600
    %4602 = vdwg.mxu0
    %4603 = vmatprep.subr.bf16.mxu0 %v3107
    %4604 = vmatpush1.bf16.msra.mxu0 %v3106
    %4605 = vmatprep.subr.bf16.mxu0 %v3111
    %4606 = vmatpush1.bf16.msra.mxu0 %v3110
    %4607 = vmatprep.subr.bf16.mxu0 %v3115
    %4608 = vmatpush1.bf16.msra.mxu0 %v3114
    %4609 = vmatprep.subr.bf16.mxu0 %v3119
    %4610 = vmatpush1.bf16.msra.mxu0 %v3118
    %4611 = vmatprep.subr.bf16.mxu0 %v3123
    %4612 = vmatpush1.bf16.msra.mxu0 %v3122
    %4613 = vmatprep.subr.bf16.mxu0 %v3127
    %4614 = vmatpush1.bf16.msra.mxu0 %v3126
    %4615 = vmatprep.subr.bf16.mxu0 %v3131
    %4616 = vmatpush1.bf16.msra.mxu0 %v3130
    %4617 = vmatprep.subr.bf16.mxu0 %v3135
    %4618 = vmatpush1.bf16.msra.mxu0 %v3134
    %4619 = vmatprep.subr.bf16.mxu0 %v3139
    %4620 = vmatpush1.bf16.msra.mxu0 %v3138
    %4621 = vmatprep.subr.bf16.mxu0 %v3143
    %4622 = vmatpush1.bf16.msra.mxu0 %v3142
    %4623 = vmatprep.subr.bf16.mxu0 %v3147
    %4624 = vmatpush1.bf16.msra.mxu0 %v3146
    %4625 = vmatprep.subr.bf16.mxu0 %v3151
    %4626 = vmatpush1.bf16.msra.mxu0 %v3150
    %4627 = vmatprep.subr.bf16.mxu0 %v3155
    %4628 = vmatpush1.bf16.msra.mxu0 %v3154
    %4629 = vmatprep.subr.bf16.mxu0 %v3159
    %4630 = vmatpush1.bf16.msra.mxu0 %v3158
    %4631 = vmatprep.subr.bf16.mxu0 %v3163
    %4632 = vmatpush1.bf16.msra.mxu0 %v3162
    %4633 = vmatprep.subr.bf16.mxu0 %v3167
    %4634 = vmatpush1.bf16.msra.mxu0 %v3166
    %4635 = vmatprep.mubr.bf16.mxu0 %v809
    %4636 = vmatmul.mubr.bf16.gmra.mrb[0].mxu0 %v808
    %v4637 = vpop.f32.mrb[0].mxu0
    %v4638 = vadd.f32 %v4595, %v4637
    %v4639 = vpop.f32.mrb[0].mxu0
    %v4640 = vadd.f32 %v4597, %v4639
    %v4641 = vpop.f32.mrb[0].mxu0
    %v4642 = vadd.f32 %v4599, %v4641
    %v4643 = vpop.f32.mrb[0].mxu0
    %v4644 = vadd.f32 %v4601, %v4643
    %4645 = vdwg.mxu0
    %4646 = vmatprep.subr.bf16.mxu0 %v3171
    %4647 = vmatpush1.bf16.msra.mxu0 %v3170
    %4648 = vmatprep.subr.bf16.mxu0 %v3175
    %4649 = vmatpush1.bf16.msra.mxu0 %v3174
    %4650 = vmatprep.subr.bf16.mxu0 %v3179
    %4651 = vmatpush1.bf16.msra.mxu0 %v3178
    %4652 = vmatprep.subr.bf16.mxu0 %v3183
    %4653 = vmatpush1.bf16.msra.mxu0 %v3182
    %4654 = vmatprep.subr.bf16.mxu0 %v3187
    %4655 = vmatpush1.bf16.msra.mxu0 %v3186
    %4656 = vmatprep.subr.bf16.mxu0 %v3191
    %4657 = vmatpush1.bf16.msra.mxu0 %v3190
    %4658 = vmatprep.subr.bf16.mxu0 %v3195
    %4659 = vmatpush1.bf16.msra.mxu0 %v3194
    %4660 = vmatprep.subr.bf16.mxu0 %v3199
    %4661 = vmatpush1.bf16.msra.mxu0 %v3198
    %4662 = vmatprep.subr.bf16.mxu0 %v3203
    %4663 = vmatpush1.bf16.msra.mxu0 %v3202
    %4664 = vmatprep.subr.bf16.mxu0 %v3207
    %4665 = vmatpush1.bf16.msra.mxu0 %v3206
    %4666 = vmatprep.subr.bf16.mxu0 %v3211
    %4667 = vmatpush1.bf16.msra.mxu0 %v3210
    %4668 = vmatprep.subr.bf16.mxu0 %v3215
    %4669 = vmatpush1.bf16.msra.mxu0 %v3214
    %4670 = vmatprep.subr.bf16.mxu0 %v3219
    %4671 = vmatpush1.bf16.msra.mxu0 %v3218
    %4672 = vmatprep.subr.bf16.mxu0 %v3223
    %4673 = vmatpush1.bf16.msra.mxu0 %v3222
    %4674 = vmatprep.subr.bf16.mxu0 %v3227
    %4675 = vmatpush1.bf16.msra.mxu0 %v3226
    %4676 = vmatprep.subr.bf16.mxu0 %v3231
    %4677 = vmatpush1.bf16.msra.mxu0 %v3230
    %4678 = vmatprep.mubr.bf16.mxu0 %v811
    %4679 = vmatmul.mubr.bf16.gmra.mrb[0].mxu0 %v810
    %v4680 = vpop.f32.mrb[0].mxu0
    %v4681 = vadd.f32 %v4638, %v4680
    %v4682 = vpop.f32.mrb[0].mxu0
    %v4683 = vadd.f32 %v4640, %v4682
    %v4684 = vpop.f32.mrb[0].mxu0
    %v4685 = vadd.f32 %v4642, %v4684
    %v4686 = vpop.f32.mrb[0].mxu0
    %v4687 = vadd.f32 %v4644, %v4686
    %4688 = vdwg.mxu0
    %4689 = vmatprep.subr.bf16.mxu0 %v3235
    %4690 = vmatpush1.bf16.msra.mxu0 %v3234
    %4691 = vmatprep.subr.bf16.mxu0 %v3239
    %4692 = vmatpush1.bf16.msra.mxu0 %v3238
    %4693 = vmatprep.subr.bf16.mxu0 %v3243
    %4694 = vmatpush1.bf16.msra.mxu0 %v3242
    %4695 = vmatprep.subr.bf16.mxu0 %v3247
    %4696 = vmatpush1.bf16.msra.mxu0 %v3246
    %4697 = vmatprep.subr.bf16.mxu0 %v3251
    %4698 = vmatpush1.bf16.msra.mxu0 %v3250
    %4699 = vmatprep.subr.bf16.mxu0 %v3255
    %4700 = vmatpush1.bf16.msra.mxu0 %v3254
    %4701 = vmatprep.subr.bf16.mxu0 %v3259
    %4702 = vmatpush1.bf16.msra.mxu0 %v3258
    %4703 = vmatprep.subr.bf16.mxu0 %v3263
    %4704 = vmatpush1.bf16.msra.mxu0 %v3262
    %4705 = vmatprep.subr.bf16.mxu0 0
    %4706 = vmatpush1.bf16.msra.mxu0 0
    %4707 = vmatprep.subr.bf16.mxu0 0
    %4708 = vmatpush1.bf16.msra.mxu0 0
    %4709 = vmatprep.subr.bf16.mxu0 0
    %4710 = vmatpush1.bf16.msra.mxu0 0
    %4711 = vmatprep.subr.bf16.mxu0 0
    %4712 = vmatpush1.bf16.msra.mxu0 0
    %4713 = vmatprep.subr.bf16.mxu0 0
    %4714 = vmatpush1.bf16.msra.mxu0 0
    %4715 = vmatprep.subr.bf16.mxu0 0
    %4716 = vmatpush1.bf16.msra.mxu0 0
    %4717 = vmatprep.subr.bf16.mxu0 0
    %4718 = vmatpush1.bf16.msra.mxu0 0
    %4719 = vmatprep.subr.bf16.mxu0 0
    %4720 = vmatpush1.bf16.msra.mxu0 0
    %4721 = vmatprep.mubr.bf16.mxu0 0
    %4722 = vmatmul.mubr.bf16.gmra.mrb[0].mxu0 %v812
    %v4723 = vpop.f32.mrb[0].mxu0
    %v4724 = vadd.f32 %v4681, %v4723
    %v4725 = vpop.f32.mrb[0].mxu0
    %v4726 = vadd.f32 %v4683, %v4725
    %v4727 = vpop.f32.mrb[0].mxu0
    %v4728 = vadd.f32 %v4685, %v4727
    %v4729 = vpop.f32.mrb[0].mxu0
    %v4730 = vadd.f32 %v4687, %v4729
    %4731 = vdwg.mxu0
    %v4732 = vmax.f32 %v4294, 0.0
    %v4733 = vmax.f32 %v4296, 0.0
    %v4734 = vmax.f32 %v4724, 0.0
    %v4735 = vmax.f32 %v4726, 0.0
    %v4736 = vmax.f32 %v4298, 0.0
    %v4737 = vmax.f32 %v4300, 0.0
    %v4738 = vmax.f32 %v4728, 0.0
    %v4739 = vmax.f32 %v4730, 0.0
    %v4740 = vpack.c.bf16 %v4736, %v4732
    %v4741 = vpack.c.bf16 %v4737, %v4733
    %v4742 = vpack.c.bf16 %v4738, %v4734
    %v4743 = vpack.c.bf16 %v4739, %v4735
    %v4744 = vld [vmem:[#allocation8] sm:$0xf]
    %v4745 = vld [vmem:[#allocation8 + $0x4] sm:$0xf]
    %v4746 = vld [vmem:[#allocation8 + $0x8] sm:$0xf]
    %v4747 = vld [vmem:[#allocation8 + $0xc] sm:$0xf]
    %v4748 = vld [vmem:[#allocation8 + $0x10] sm:$0xf]
    %v4749 = vld [vmem:[#allocation8 + $0x14] sm:$0xf]
    %v4750 = vld [vmem:[#allocation8 + $0x18] sm:$0xf]
    %v4751 = vld [vmem:[#allocation8 + $0x1c] sm:$0xf]
    %v4752 = vld [vmem:[#allocation8 + $0x20] sm:$0xf]
    %v4753 = vld [vmem:[#allocation8 + $0x24] sm:$0xf]
    %v4754 = vld [vmem:[#allocation8 + $0x28] sm:$0xf]
    %v4755 = vld [vmem:[#allocation8 + $0x2c] sm:$0xf]
    %v4756 = vld [vmem:[#allocation8 + $0x30] sm:$0xf]
    %v4757 = vld [vmem:[#allocation8 + $0x34] sm:$0xf]
    %v4758 = vld [vmem:[#allocation8 + $0x38] sm:$0xf]
    %v4759 = vld [vmem:[#allocation8 + $0x3c] sm:$0xf]
    %v4760 = vld [vmem:[#allocation8 + $0x40] sm:$0xf]
    %v4761 = vld [vmem:[#allocation8 + $0x44] sm:$0xf]
    %v4762 = vld [vmem:[#allocation8 + $0x48] sm:$0xf]
    %v4763 = vld [vmem:[#allocation8 + $0x4c] sm:$0xf]
    %v4764 = vld [vmem:[#allocation8 + $0x50] sm:$0xf]
    %v4765 = vld [vmem:[#allocation8 + $0x54] sm:$0xf]
    %v4766 = vld [vmem:[#allocation8 + $0x58] sm:$0xf]
    %v4767 = vld [vmem:[#allocation8 + $0x5c] sm:$0xf]
    %v4768 = vld [vmem:[#allocation8 + $0x60] sm:$0xf]
    %v4769 = vld [vmem:[#allocation8 + $0x64] sm:$0xf]
    %v4770 = vld [vmem:[#allocation8 + $0x68] sm:$0xf]
    %v4771 = vld [vmem:[#allocation8 + $0x6c] sm:$0xf]
    %v4772 = vld [vmem:[#allocation8 + $0x70] sm:$0xf]
    %v4773 = vld [vmem:[#allocation8 + $0x74] sm:$0xf]
    %v4774 = vld [vmem:[#allocation8 + $0x78] sm:$0xf]
    %v4775 = vld [vmem:[#allocation8 + $0x7c] sm:$0xf]
    %v4776 = vld [vmem:[#allocation8 + $0x80] sm:$0xf]
    %v4777 = vld [vmem:[#allocation8 + $0x84] sm:$0xf]
    %v4778 = vld [vmem:[#allocation8 + $0x88] sm:$0xf]
    %v4779 = vld [vmem:[#allocation8 + $0x8c] sm:$0xf]
    %v4780 = vld [vmem:[#allocation8 + $0x90] sm:$0xf]
    %v4781 = vld [vmem:[#allocation8 + $0x94] sm:$0xf]
    %v4782 = vld [vmem:[#allocation8 + $0x98] sm:$0xf]
    %v4783 = vld [vmem:[#allocation8 + $0x9c] sm:$0xf]
    %v4784 = vld [vmem:[#allocation8 + $0xa0] sm:$0xf]
    %v4785 = vld [vmem:[#allocation8 + $0xa4] sm:$0xf]
    %v4786 = vld [vmem:[#allocation8 + $0xa8] sm:$0xf]
    %v4787 = vld [vmem:[#allocation8 + $0xac] sm:$0xf]
    %v4788 = vld [vmem:[#allocation8 + $0xb0] sm:$0xf]
    %v4789 = vld [vmem:[#allocation8 + $0xb4] sm:$0xf]
    %v4790 = vld [vmem:[#allocation8 + $0xb8] sm:$0xf]
    %v4791 = vld [vmem:[#allocation8 + $0xbc] sm:$0xf]
    %v4792 = vld [vmem:[#allocation8 + $0xc0] sm:$0xf]
    %v4793 = vld [vmem:[#allocation8 + $0xc4] sm:$0xf]
    %v4794 = vld [vmem:[#allocation8 + $0xc8] sm:$0xf]
    %v4795 = vld [vmem:[#allocation8 + $0xcc] sm:$0xf]
    %v4796 = vld [vmem:[#allocation8 + $0xd0] sm:$0xf]
    %v4797 = vld [vmem:[#allocation8 + $0xd4] sm:$0xf]
    %v4798 = vld [vmem:[#allocation8 + $0xd8] sm:$0xf]
    %v4799 = vld [vmem:[#allocation8 + $0xdc] sm:$0xf]
    %v4800 = vld [vmem:[#allocation8 + $0xe0] sm:$0xf]
    %v4801 = vld [vmem:[#allocation8 + $0xe4] sm:$0xf]
    %v4802 = vld [vmem:[#allocation8 + $0xe8] sm:$0xf]
    %v4803 = vld [vmem:[#allocation8 + $0xec] sm:$0xf]
    %v4804 = vld [vmem:[#allocation8 + $0xf0] sm:$0xf]
    %v4805 = vld [vmem:[#allocation8 + $0xf4] sm:$0xf]
    %v4806 = vld [vmem:[#allocation8 + $0xf8] sm:$0xf]
    %v4807 = vld [vmem:[#allocation8 + $0xfc] sm:$0xf]
    %v4808 = vld [vmem:[#allocation10] sm:$0x1]
    %v4810 = vlaneseq
    %v4811 = vshrl.u32 %v4810, 7
    %v4812 = vsub.s32 0, %v4811
    %v4813 = vrot.slane %v4808, %v4812
    %v4879 = vunpack.c.l.b16 %v4744
    %v4880 = vunpack.c.l.b16 %v4745
    %v4881 = vunpack.c.l.b16 %v4746
    %v4882 = vunpack.c.l.b16 %v4747
    %v4883 = vunpack.c.l.b16 %v4748
    %v4884 = vunpack.c.l.b16 %v4749
    %v4885 = vunpack.c.l.b16 %v4750
    %v4886 = vunpack.c.l.b16 %v4751
    %v4887 = vunpack.c.l.b16 %v4752
    %v4888 = vunpack.c.l.b16 %v4753
    %v4889 = vunpack.c.l.b16 %v4754
    %v4890 = vunpack.c.l.b16 %v4755
    %v4891 = vunpack.c.l.b16 %v4756
    %v4892 = vunpack.c.l.b16 %v4757
    %v4893 = vunpack.c.l.b16 %v4758
    %v4894 = vunpack.c.l.b16 %v4759
    %v4895 = vunpack.c.l.b16 %v4760
    %v4896 = vunpack.c.l.b16 %v4761
    %v4897 = vunpack.c.l.b16 %v4762
    %v4898 = vunpack.c.l.b16 %v4763
    %v4899 = vunpack.c.l.b16 %v4764
    %v4900 = vunpack.c.l.b16 %v4765
    %v4901 = vunpack.c.l.b16 %v4766
    %v4902 = vunpack.c.l.b16 %v4767
    %v4903 = vunpack.c.l.b16 %v4768
    %v4904 = vunpack.c.l.b16 %v4769
    %v4905 = vunpack.c.l.b16 %v4770
    %v4906 = vunpack.c.l.b16 %v4771
    %v4907 = vunpack.c.l.b16 %v4772
    %v4908 = vunpack.c.l.b16 %v4773
    %v4909 = vunpack.c.l.b16 %v4774
    %v4910 = vunpack.c.l.b16 %v4775
    %v4911 = vunpack.c.l.b16 %v4776
    %v4912 = vunpack.c.l.b16 %v4777
    %v4913 = vunpack.c.l.b16 %v4778
    %v4914 = vunpack.c.l.b16 %v4779
    %v4915 = vunpack.c.l.b16 %v4780
    %v4916 = vunpack.c.l.b16 %v4781
    %v4917 = vunpack.c.l.b16 %v4782
    %v4918 = vunpack.c.l.b16 %v4783
    %v4919 = vunpack.c.l.b16 %v4784
    %v4920 = vunpack.c.l.b16 %v4785
    %v4921 = vunpack.c.l.b16 %v4786
    %v4922 = vunpack.c.l.b16 %v4787
    %v4923 = vunpack.c.l.b16 %v4788
    %v4924 = vunpack.c.l.b16 %v4789
    %v4925 = vunpack.c.l.b16 %v4790
    %v4926 = vunpack.c.l.b16 %v4791
    %v4927 = vunpack.c.l.b16 %v4792
    %v4928 = vunpack.c.l.b16 %v4793
    %v4929 = vunpack.c.l.b16 %v4794
    %v4930 = vunpack.c.l.b16 %v4795
    %v4931 = vunpack.c.l.b16 %v4796
    %v4932 = vunpack.c.l.b16 %v4797
    %v4933 = vunpack.c.l.b16 %v4798
    %v4934 = vunpack.c.l.b16 %v4799
    %v4935 = vunpack.c.l.b16 %v4800
    %v4936 = vunpack.c.l.b16 %v4801
    %v4937 = vunpack.c.l.b16 %v4802
    %v4938 = vunpack.c.l.b16 %v4803
    %v4939 = vunpack.c.l.b16 %v4804
    %v4940 = vunpack.c.l.b16 %v4805
    %v4941 = vunpack.c.l.b16 %v4806
    %v4942 = vunpack.c.l.b16 %v4807
    %v4943 = vpack.c.b16 %v4880, %v4879
    %v4944 = vpack.c.b16 %v4882, %v4881
    %v4945 = vpack.c.b16 %v4884, %v4883
    %v4946 = vpack.c.b16 %v4886, %v4885
    %v4947 = vpack.c.b16 %v4888, %v4887
    %v4948 = vpack.c.b16 %v4890, %v4889
    %v4949 = vpack.c.b16 %v4892, %v4891
    %v4950 = vpack.c.b16 %v4894, %v4893
    %v4951 = vpack.c.b16 %v4896, %v4895
    %v4952 = vpack.c.b16 %v4898, %v4897
    %v4953 = vpack.c.b16 %v4900, %v4899
    %v4954 = vpack.c.b16 %v4902, %v4901
    %v4955 = vpack.c.b16 %v4904, %v4903
    %v4956 = vpack.c.b16 %v4906, %v4905
    %v4957 = vpack.c.b16 %v4908, %v4907
    %v4958 = vpack.c.b16 %v4910, %v4909
    %v4959 = vpack.c.b16 %v4912, %v4911
    %v4960 = vpack.c.b16 %v4914, %v4913
    %v4961 = vpack.c.b16 %v4916, %v4915
    %v4962 = vpack.c.b16 %v4918, %v4917
    %v4963 = vpack.c.b16 %v4920, %v4919
    %v4964 = vpack.c.b16 %v4922, %v4921
    %v4965 = vpack.c.b16 %v4924, %v4923
    %v4966 = vpack.c.b16 %v4926, %v4925
    %v4967 = vpack.c.b16 %v4928, %v4927
    %v4968 = vpack.c.b16 %v4930, %v4929
    %v4969 = vpack.c.b16 %v4932, %v4931
    %v4970 = vpack.c.b16 %v4934, %v4933
    %v4971 = vpack.c.b16 %v4936, %v4935
    %v4972 = vpack.c.b16 %v4938, %v4937
    %v4973 = vpack.c.b16 %v4940, %v4939
    %v4974 = vpack.c.b16 %v4942, %v4941
    %5007 = vmatprep.subr.bf16.mxu0 0
    %5008 = vmatpush1.bf16.msra.mxu0 %v4943
    %5009 = vmatprep.subr.bf16.mxu0 0
    %5010 = vmatpush1.bf16.msra.mxu0 %v4944
    %5011 = vmatprep.subr.bf16.mxu0 0
    %5012 = vmatpush1.bf16.msra.mxu0 %v4945
    %5013 = vmatprep.subr.bf16.mxu0 0
    %5014 = vmatpush1.bf16.msra.mxu0 %v4946
    %5015 = vmatprep.subr.bf16.mxu0 0
    %5016 = vmatpush1.bf16.msra.mxu0 %v4947
    %5017 = vmatprep.subr.bf16.mxu0 0
    %5018 = vmatpush1.bf16.msra.mxu0 %v4948
    %5019 = vmatprep.subr.bf16.mxu0 0
    %5020 = vmatpush1.bf16.msra.mxu0 %v4949
    %5021 = vmatprep.subr.bf16.mxu0 0
    %5022 = vmatpush1.bf16.msra.mxu0 %v4950
    %5023 = vmatprep.subr.bf16.mxu0 0
    %5024 = vmatpush1.bf16.msra.mxu0 %v4951
    %5025 = vmatprep.subr.bf16.mxu0 0
    %5026 = vmatpush1.bf16.msra.mxu0 %v4952
    %5027 = vmatprep.subr.bf16.mxu0 0
    %5028 = vmatpush1.bf16.msra.mxu0 %v4953
    %5029 = vmatprep.subr.bf16.mxu0 0
    %5030 = vmatpush1.bf16.msra.mxu0 %v4954
    %5031 = vmatprep.subr.bf16.mxu0 0
    %5032 = vmatpush1.bf16.msra.mxu0 %v4955
    %5033 = vmatprep.subr.bf16.mxu0 0
    %5034 = vmatpush1.bf16.msra.mxu0 %v4956
    %5035 = vmatprep.subr.bf16.mxu0 0
    %5036 = vmatpush1.bf16.msra.mxu0 %v4957
    %5037 = vmatprep.subr.bf16.mxu0 0
    %5038 = vmatpush1.bf16.msra.mxu0 %v4958
    %5039 = vmatprep.mubr.bf16.mxu0 %v4741
    %5040 = vmatmul.mubr.bf16.gmra.mrb[0].mxu0 %v4740
    %v5041 = vpop.f32.mrb[0].mxu0
    %v5042 = vadd.f32 %v4813, %v5041
    %v5043 = vpop.f32.mrb[0].mxu0
    %v5044 = vpop.f32.mrb[0].mxu0
    %v5045 = vadd.f32 %v4813, %v5044
    %v5046 = vpop.f32.mrb[0].mxu0
    %5047 = vdwg.mxu0
    %5048 = vmatprep.subr.bf16.mxu0 0
    %5049 = vmatpush1.bf16.msra.mxu0 %v4959
    %5050 = vmatprep.subr.bf16.mxu0 0
    %5051 = vmatpush1.bf16.msra.mxu0 %v4960
    %5052 = vmatprep.subr.bf16.mxu0 0
    %5053 = vmatpush1.bf16.msra.mxu0 %v4961
    %5054 = vmatprep.subr.bf16.mxu0 0
    %5055 = vmatpush1.bf16.msra.mxu0 %v4962
    %5056 = vmatprep.subr.bf16.mxu0 0
    %5057 = vmatpush1.bf16.msra.mxu0 %v4963
    %5058 = vmatprep.subr.bf16.mxu0 0
    %5059 = vmatpush1.bf16.msra.mxu0 %v4964
    %5060 = vmatprep.subr.bf16.mxu0 0
    %5061 = vmatpush1.bf16.msra.mxu0 %v4965
    %5062 = vmatprep.subr.bf16.mxu0 0
    %5063 = vmatpush1.bf16.msra.mxu0 %v4966
    %5064 = vmatprep.subr.bf16.mxu0 0
    %5065 = vmatpush1.bf16.msra.mxu0 %v4967
    %5066 = vmatprep.subr.bf16.mxu0 0
    %5067 = vmatpush1.bf16.msra.mxu0 %v4968
    %5068 = vmatprep.subr.bf16.mxu0 0
    %5069 = vmatpush1.bf16.msra.mxu0 %v4969
    %5070 = vmatprep.subr.bf16.mxu0 0
    %5071 = vmatpush1.bf16.msra.mxu0 %v4970
    %5072 = vmatprep.subr.bf16.mxu0 0
    %5073 = vmatpush1.bf16.msra.mxu0 %v4971
    %5074 = vmatprep.subr.bf16.mxu0 0
    %5075 = vmatpush1.bf16.msra.mxu0 %v4972
    %5076 = vmatprep.subr.bf16.mxu0 0
    %5077 = vmatpush1.bf16.msra.mxu0 %v4973
    %5078 = vmatprep.subr.bf16.mxu0 0
    %5079 = vmatpush1.bf16.msra.mxu0 %v4974
    %5080 = vmatprep.mubr.bf16.mxu0 %v4743
    %5081 = vmatmul.mubr.bf16.gmra.mrb[0].mxu0 %v4742
    %v5082 = vpop.f32.mrb[0].mxu0
    %v5083 = vadd.f32 %v5042, %v5082
    %v5084 = vpop.f32.mrb[0].mxu0
    %v5085 = vpop.f32.mrb[0].mxu0
    %v5086 = vadd.f32 %v5045, %v5085
    %v5087 = vpop.f32.mrb[0].mxu0
    %5088 = vdwg.mxu0
    %v5089 = vlaneseq
    %v5090 = vand.u32 %v5089, 127
    %vm5091 = vcmp.ge.s32.totalorder %v5090, 20
    %vm5092 = vcmp.lt.s32.totalorder %v5090, 40
    %vm5093 = vmand %vm5091, %vm5092
    %v5094 = vsel %vm5093, %v5083, -inf
    %v5095 = vsel %vm5093, %v5086, -inf
    %5096 = vmax.xlane.f32.xlu0 %v5094
    %v5097 = vpop.xlane.xlu0 %5096
    %5098 = vmax.xlane.f32.xlu0 %v5095
    %v5099 = vpop.xlane.xlu0 %5098
    %v5100 = vsub.f32 %v5094, %v5097
    %v5101 = vsub.f32 %v5095, %v5099
    %v5102 = vmul.f32 %v5100, 1.442695
    %v5103 = vpow.pop %v5102
    %v5104 = vmul.f32 %v5101, 1.442695
    %v5105 = vpow.pop %v5104
    %5106 = vadd.xlane.f32.xlu0 %v5103
    %v5107 = vpop.xlane.xlu0 %5106
    %5108 = vadd.xlane.f32.xlu0 %v5105
    %v5109 = vpop.xlane.xlu0 %5108
    %v5110 = vrcp.pop %v5107
    %v5111 = vrcp.pop %v5109
    %v5112 = vmul.f32 %v5103, %v5110
    %v5113 = vmul.f32 %v5105, %v5111
    %v5114 = vmul.f32 %v5112, 20.0
    %v5115 = vmul.f32 %v5113, 20.0
    %v5116 = vadd.f32 %v5114, 1e-06
    %v5117 = vadd.f32 %v5115, 1e-06
    %vm5118 = vcmp.lt.s32.totalorder %v5090, 20
    %v5119 = vsel %vm5118, %v5083, %v5116
    %v5120 = vsel %vm5118, %v5086, %v5117
    %5121 = vst [vmem:[#allocation11] sm:$0xff] %v5119
    %5122 = vst [vmem:[#allocation11 + $0x8] sm:$0xff] %v5120
    // Predicated region
    $region42: #{tpu_custom_call.1} parent=1 // pred_check
      _
    $region43: #{tpu_custom_call.1} parent=1 // pred_check_branch
      %5124 = sbr.rel (0) target = $region45
    $region44: #{tpu_custom_call.1} parent=1 // pred_region
      %s5126 = ssub.s32 256, 256
      %5127 = vsyncadd [#allocation4], %s5126
      %s5128 = sshll.u32 [#allocation11], 4
      %s5129 = int_to_ptr.vmem [resolvable:$true] %s5128
      %5134 = dma.vmem_to_hbm [thread:$0]  %s5129, 256, %s5, [#allocation4], 128, 128, 8
    $region45: #{tpu_custom_call.1} parent=1 // pred_fallthru
      _
    // Predicated region
    $region46: #{tpu_custom_call.1} parent=1 // pred_check
      _
    $region47: #{tpu_custom_call.1} parent=1 // pred_check_branch
      %5136 = sbr.rel (0) target = $region49
    $region48: #{tpu_custom_call.1} parent=1 // pred_region
      %5137 = dma.done [#allocation4], 256
    $region49: #{tpu_custom_call.1} parent=1 // pred_fallthru
      _
    %5138 = vsyncpa [#allocation3], 1
    %5139 = vsyncpa [#allocation6], 1
    %5140 = vsyncpa [#allocation9], 1
    %5141 = vsyncpa [#allocation4], 1

</llo_original>
